<compile_context>
chip_gen: v5e
topology: v5e:2x2
jax: 0.10.0
libtpu: 0.0.40
codegen_flags: <defaults>
</compile_context>

<pallas_src>
import functools

import jax
import jax.numpy as jnp
from jax.experimental import pallas as pl
from jax.experimental.pallas import tpu as pltpu


# ----------------------------------------------------------------------------
# Fused Pallas kernel: full GATNet forward (all layers, all heads)
# ----------------------------------------------------------------------------
def gatnet_fused_kernel(h_ref, adjt_ref, snorm_ref, *wrefs_and_out,
                        head_counts, dout_pads, graph_norm, negative_slope):
    out_ref = wrefs_and_out[-1]
    wrefs = wrefs_and_out[:-1]
    n_layers = len(head_counts)

    # Hoisted once for the whole network: adjacency mask and graph-norm factor.
    adj = adjt_ref[...]                      # [dst, src]
    mask = adj > 0.0                         # bool mask (reused every head)
    maskf = mask.astype(jnp.float32)         # 0/1 multiply form
    snorm = snorm_ref[...]                   # [N, 1]
    neg_big = jnp.float32(-1e30)

    h = h_ref[...].astype(jnp.float32)       # [N, Din0]

    for li in range(n_layers):
        H = head_counts[li]
        Dp = dout_pads[li]
        wext = wrefs[2 * li][...]            # [Din, H*Dp + H]  (z cols | s_dst cols)
        wsrcT = wrefs[2 * li + 1][...]       # [H, Din]

        # Single lane-dense matmul gives z for every head plus the folded
        # a_dst attention columns.
        zd = jnp.dot(h, wext, preferred_element_type=jnp.float32)   # [N, H*Dp+H]
        z_all = zd[:, :H * Dp]                                       # [N, H*Dp]
        s_dst_all = zd[:, H * Dp:]                                   # [N, H]

        # s_src for all heads at once, already in row layout [head, src].
        s_src_rows = jax.lax.dot_general(
            wsrcT, h,
            dimension_numbers=(((1,), (1,)), ((), ())),
            preferred_element_type=jnp.float32)                      # [H, N]

        col_ids = jax.lax.broadcasted_iota(jnp.int32, (1, H * Dp), 1)
        hout = jnp.zeros_like(z_all)
        for hh in range(H):
            # e[dst, src] = leaky_relu(a_src . z_src + a_dst . z_dst)
            e = s_dst_all[:, hh:hh + 1] + s_src_rows[hh:hh + 1, :]   # [N, N]
            e = jnp.where(e > 0, e, negative_slope * e)              # LeakyReLU(0.2)
            e = jnp.where(mask, e, neg_big)

            # softmax over incoming edges (lane axis = src)
            m = jnp.max(e, axis=-1, keepdims=True)
            p = jnp.exp(e - m) * maskf
            denom = jnp.sum(p, axis=-1, keepdims=True)
            denom = jnp.maximum(denom, jnp.float32(1e-30))           # no-edge guard
            alpha = p * pl.reciprocal(denom, approx=True)
            # attn dropout: inference mode -> identity

            # aggregate: h_dst = sum_src alpha * z_src. Done at full layer width
            # and masked to this head's column block (avoids lane concatenation).
            agg = jnp.dot(alpha, z_all, preferred_element_type=jnp.float32)
            if H > 1:
                colmask = ((col_ids >= hh * Dp) &
                           (col_ids < (hh + 1) * Dp)).astype(jnp.float32)
                hout = hout + agg * colmask
            else:
                hout = agg

        if graph_norm:
            hout = hout * snorm
        # TODO(synk): batch_norm / residual paths not exercised
        # (net_params['batch_norm']=False, residual=False).
        if li < n_layers - 1:
            # ELU(alpha=1); clamp so exp only sees the negative range.
            hout = jnp.where(hout > 0, hout,
                             jnp.exp(jnp.minimum(hout, 0.0)) - 1.0)
        # feat dropout: inference mode -> identity
        h = hout

    out_ref[...] = h.astype(out_ref.dtype)


# ----------------------------------------------------------------------------
# Wrapper: weight folding + single pallas_call
# ----------------------------------------------------------------------------
def _build_fused_layer_weights(heads_params, dout_pad):
    """Fold a_src/a_dst into the fc weight and stack heads along lanes."""
    w_cols, wdst_cols, wsrc_rows = [], [], []
    for (w, a_src, a_dst) in heads_params:
        din, dout = w.shape
        w_pad = w if dout == dout_pad else jnp.pad(w, ((0, 0), (0, dout_pad - dout)))
        w_cols.append(w_pad)                 # [Din, Dp]
        wdst_cols.append(w @ a_dst)          # [Din, 1]   (s_dst column)
        wsrc_rows.append((w @ a_src.T).T)    # [1, Din]   (s_src row)
    wext = jnp.concatenate(w_cols + wdst_cols, axis=1)   # [Din, H*Dp + H]
    wsrcT = jnp.concatenate(wsrc_rows, axis=0)           # [H, Din]
    return wext, wsrcT


def gatnet_forward(params, h, adj_t, snorm_n, *, graph_norm=True, class_pad=128):
    n = h.shape[0]
    n_layers = len(params)
    n_classes = params[-1][0][0].shape[1]

    head_counts = tuple(len(hp) for hp in params)
    dout_pads = []
    fused_args = []
    for li, heads_p in enumerate(params):
        dout = heads_p[0][0].shape[1]
        dp = class_pad if li == n_layers - 1 else dout   # lane-dense final output
        dout_pads.append(dp)
        wext, wsrcT = _build_fused_layer_weights(heads_p, dp)
        fused_args.extend([wext, wsrcT])
    dout_pads = tuple(dout_pads)

    kernel = functools.partial(
        gatnet_fused_kernel,
        head_counts=head_counts,
        dout_pads=dout_pads,
        graph_norm=graph_norm,
        negative_slope=0.2,
    )

    all_inputs = [h, adj_t, snorm_n] + fused_args
    in_specs = [pl.BlockSpec(x.shape, lambda i: (0, 0)) for x in all_inputs]

    out_pad = pl.pallas_call(
        kernel,
        out_shape=jax.ShapeDtypeStruct((n, class_pad), jnp.float32),
        grid=(1,),
        in_specs=in_specs,
        out_specs=pl.BlockSpec((n, class_pad), lambda i: (0, 0)),
        compiler_params=pltpu.CompilerParams(
            dimension_semantics=("arbitrary",)),
    )(*all_inputs)
    return out_pad[:, :n_classes]


# ----------------------------------------------------------------------------
# Parameter init matching GATNet layer shapes
# ----------------------------------------------------------------------------
def init_gatnet_params(key, in_dim, hidden_dim, out_dim, n_classes, n_heads,
                       n_layers):
    del out_dim  # GATNet only uses in_dim/hidden_dim/n_classes for layer dims
    layer_dims = [(in_dim, hidden_dim, n_heads)]
    for _ in range(1, n_layers):
        layer_dims.append((hidden_dim * n_heads, hidden_dim, n_heads))
    layer_dims.append((hidden_dim * n_heads, n_classes, 1))

    params = []
    for (din, dout, heads) in layer_dims:
        heads_p = []
        for _ in range(heads):
            key, k1, k2, k3 = jax.random.split(key, 4)
            w = jax.random.normal(k1, (din, dout), jnp.float32) / jnp.sqrt(
                jnp.float32(din))
            a_src = jax.random.normal(k2, (1, dout), jnp.float32) / jnp.sqrt(
                jnp.float32(2 * dout))
            a_dst = jax.random.normal(k3, (dout, 1), jnp.float32) / jnp.sqrt(
                jnp.float32(2 * dout))
            heads_p.append((w, a_src, a_dst))
        params.append(heads_p)
    return params


if __name__ == "__main__":
    # N nodes = 128, in_dim = 64, hidden_dim = 16, n_heads = 4 (hidden*heads=64),
    # n_classes = 8, L = 2  -> layers: 64->16x4, 64->16x4, 64->8x1
    N, IN_DIM, HIDDEN, HEADS, N_CLASSES, L = 128, 64, 16, 4, 8, 2

    key = jax.random.PRNGKey(0)
    key, kf, ka = jax.random.split(key, 3)

    h0 = jax.random.normal(kf, (N, IN_DIM), jnp.float32)

    # random sparse directed graph + self-loops; adj[i, j] = edge i -> j
    adj = jax.random.bernoulli(ka, 0.05, (N, N)).astype(jnp.float32)
    adj = jnp.maximum(adj, jnp.eye(N, dtype=jnp.float32))  # self-loops
    adj_t = adj.T  # [dst, src] layout for the kernel

    # snorm_n as built in the benchmarking-gnns pipeline: 1/sqrt(num_nodes)
    snorm_n = jnp.full((N, 1), 1.0 / jnp.sqrt(jnp.float32(N)), jnp.float32)

    params = init_gatnet_params(key, IN_DIM, HIDDEN, HIDDEN, N_CLASSES, HEADS, L)

    fwd = jax.jit(functools.partial(gatnet_forward, graph_norm=True))
    out = jax.block_until_ready(fwd(params, h0, adj_t, snorm_n))

    assert out.shape == (N, N_CLASSES), out.shape
    assert bool(jnp.all(jnp.isfinite(out)))
    print("KERNEL_OK")
</pallas_src>

<mosaic_0001>
module attributes {stable_mosaic.version = 11 : i64} {
  func.func @gatnet_fused_kernel(%arg0: i32, %arg1: memref<128x64xf32, #tpu.memory_space<vmem>>, %arg2: memref<128x128xf32, #tpu.memory_space<vmem>>, %arg3: memref<128x1xf32, #tpu.memory_space<vmem>>, %arg4: memref<64x68xf32, #tpu.memory_space<vmem>>, %arg5: memref<4x64xf32, #tpu.memory_space<vmem>>, %arg6: memref<64x68xf32, #tpu.memory_space<vmem>>, %arg7: memref<4x64xf32, #tpu.memory_space<vmem>>, %arg8: memref<64x129xf32, #tpu.memory_space<vmem>>, %arg9: memref<1x64xf32, #tpu.memory_space<vmem>>, %arg10: memref<128x128xf32, #tpu.memory_space<vmem>>) attributes {dimension_semantics = [#tpu.dimension_semantics<arbitrary>], iteration_bounds = array<i64: 1>, scalar_prefetch = 0 : i64, scratch_operands = 0 : i64, tpu.core_type = #tpu.core_type<tc>, window_params = [{pipeline_mode = #tpu.pipeline_mode<synchronous>, transform_indices = @transform_0, window_bounds = array<i64: 128, 64>}, {pipeline_mode = #tpu.pipeline_mode<synchronous>, transform_indices = @transform_1, window_bounds = array<i64: 128, 128>}, {pipeline_mode = #tpu.pipeline_mode<synchronous>, transform_indices = @transform_2, window_bounds = array<i64: 128, 1>}, {pipeline_mode = #tpu.pipeline_mode<synchronous>, transform_indices = @transform_3, window_bounds = array<i64: 64, 68>}, {pipeline_mode = #tpu.pipeline_mode<synchronous>, transform_indices = @transform_4, window_bounds = array<i64: 4, 64>}, {pipeline_mode = #tpu.pipeline_mode<synchronous>, transform_indices = @transform_5, window_bounds = array<i64: 64, 68>}, {pipeline_mode = #tpu.pipeline_mode<synchronous>, transform_indices = @transform_6, window_bounds = array<i64: 4, 64>}, {pipeline_mode = #tpu.pipeline_mode<synchronous>, transform_indices = @transform_7, window_bounds = array<i64: 64, 129>}, {pipeline_mode = #tpu.pipeline_mode<synchronous>, transform_indices = @transform_8, window_bounds = array<i64: 1, 64>}, {pipeline_mode = #tpu.pipeline_mode<synchronous>, transform_indices = @transform_9, window_bounds = array<i64: 128, 128>}]} {
    %c0 = arith.constant 0 : index
    %c0_0 = arith.constant 0 : index
    %0 = vector.load %arg2[%c0, %c0_0] : memref<128x128xf32, #tpu.memory_space<vmem>>, vector<128x128xf32>
    %cst = arith.constant 0.000000e+00 : f32
    %1 = vector.broadcast %cst : f32 to vector<128x128xf32>
    %2 = arith.cmpf ogt, %0, %1 : vector<128x128xf32>
    %3 = arith.extui %2 : vector<128x128xi1> to vector<128x128xi32>
    %4 = arith.sitofp %3 : vector<128x128xi32> to vector<128x128xf32>
    %c0_1 = arith.constant 0 : index
    %c0_2 = arith.constant 0 : index
    %5 = vector.load %arg3[%c0_1, %c0_2] : memref<128x1xf32, #tpu.memory_space<vmem>>, vector<128x1xf32>
    %c0_3 = arith.constant 0 : index
    %c0_4 = arith.constant 0 : index
    %6 = vector.load %arg1[%c0_3, %c0_4] : memref<128x64xf32, #tpu.memory_space<vmem>>, vector<128x64xf32>
    %c0_5 = arith.constant 0 : index
    %c0_6 = arith.constant 0 : index
    %7 = vector.load %arg4[%c0_5, %c0_6] : memref<64x68xf32, #tpu.memory_space<vmem>>, vector<64x68xf32>
    %c0_7 = arith.constant 0 : index
    %c0_8 = arith.constant 0 : index
    %8 = vector.load %arg5[%c0_7, %c0_8] : memref<4x64xf32, #tpu.memory_space<vmem>>, vector<4x64xf32>
    %cst_9 = arith.constant dense<0.000000e+00> : vector<128x68xf32>
    %9 = tpu.matmul %6, %7, %cst_9 {dimension_numbers = #tpu.dot_dimension_numbers<[1], [0], [0], [1], [0, 0, 1, 1], [], []>} : vector<128x64xf32>, vector<64x68xf32>, vector<128x68xf32> -> vector<128x68xf32>
    %10 = vector.extract_strided_slice %9 {offsets = [0, 0], sizes = [128, 64], strides = [1, 1]} : vector<128x68xf32> to vector<128x64xf32>
    %11 = vector.extract_strided_slice %9 {offsets = [0, 64], sizes = [128, 4], strides = [1, 1]} : vector<128x68xf32> to vector<128x4xf32>
    %cst_10 = arith.constant dense<0.000000e+00> : vector<4x128xf32>
    %12 = tpu.matmul %8, %6, %cst_10 {dimension_numbers = #tpu.dot_dimension_numbers<[1], [1], [0], [0], [0, 0, 1, 0], [], []>} : vector<4x64xf32>, vector<128x64xf32>, vector<4x128xf32> -> vector<4x128xf32>
    %13 = tpu.iota {dimensions = array<i32: 1>} : vector<1x64xi32>
    %cst_11 = arith.constant 0.000000e+00 : f32
    %14 = vector.broadcast %cst_11 : f32 to vector<128x64xf32>
    %15 = vector.extract_strided_slice %11 {offsets = [0, 0], sizes = [128, 1], strides = [1, 1]} : vector<128x4xf32> to vector<128x1xf32>
    %16 = vector.extract_strided_slice %12 {offsets = [0, 0], sizes = [1, 128], strides = [1, 1]} : vector<4x128xf32> to vector<1x128xf32>
    %17 = vector.broadcast %15 : vector<128x1xf32> to vector<128x128xf32>
    %18 = vector.broadcast %16 : vector<1x128xf32> to vector<128x128xf32>
    %19 = arith.addf %17, %18 : vector<128x128xf32>
    %cst_12 = arith.constant 0.000000e+00 : f32
    %20 = vector.broadcast %cst_12 : f32 to vector<128x128xf32>
    %21 = arith.cmpf ogt, %19, %20 : vector<128x128xf32>
    %cst_13 = arith.constant 2.000000e-01 : f32
    %22 = vector.broadcast %cst_13 : f32 to vector<128x128xf32>
    %23 = arith.mulf %22, %19 : vector<128x128xf32>
    %24 = arith.select %21, %19, %23 : vector<128x128xi1>, vector<128x128xf32>
    %cst_14 = arith.constant -1.000000e+30 : f32
    %25 = vector.broadcast %cst_14 : f32 to vector<128x128xf32>
    %26 = arith.select %2, %24, %25 : vector<128x128xi1>, vector<128x128xf32>
    %cst_15 = arith.constant dense<0xFF800000> : vector<128xf32>
    %27 = vector.multi_reduction <maximumf>, %26, %cst_15 [1] : vector<128x128xf32> to vector<128xf32>
    %28 = vector.shape_cast %27 : vector<128xf32> to vector<128x1xf32>
    %29 = vector.broadcast %28 : vector<128x1xf32> to vector<128x128xf32>
    %30 = arith.subf %26, %29 : vector<128x128xf32>
    %31 = math.exp %30 : vector<128x128xf32>
    %32 = arith.mulf %31, %4 : vector<128x128xf32>
    %cst_16 = arith.constant dense<0.000000e+00> : vector<128xf32>
    %33 = vector.multi_reduction <add>, %32, %cst_16 [1] : vector<128x128xf32> to vector<128xf32>
    %34 = vector.shape_cast %33 : vector<128xf32> to vector<128x1xf32>
    %cst_17 = arith.constant 1.000000e-30 : f32
    %35 = vector.broadcast %cst_17 : f32 to vector<128x1xf32>
    %36 = arith.maximumf %34, %35 : vector<128x1xf32>
    %37 = tpu.reciprocal %36 {approx = true} : vector<128x1xf32> -> vector<128x1xf32>
    %38 = vector.broadcast %37 : vector<128x1xf32> to vector<128x128xf32>
    %39 = arith.mulf %32, %38 : vector<128x128xf32>
    %cst_18 = arith.constant dense<0.000000e+00> : vector<128x64xf32>
    %40 = tpu.matmul %39, %10, %cst_18 {dimension_numbers = #tpu.dot_dimension_numbers<[1], [0], [0], [1], [0, 0, 1, 1], [], []>} : vector<128x128xf32>, vector<128x64xf32>, vector<128x64xf32> -> vector<128x64xf32>
    %c0_i32 = arith.constant 0 : i32
    %41 = vector.broadcast %c0_i32 : i32 to vector<1x64xi32>
    %42 = arith.cmpi sge, %13, %41 : vector<1x64xi32>
    %c16_i32 = arith.constant 16 : i32
    %43 = vector.broadcast %c16_i32 : i32 to vector<1x64xi32>
    %44 = arith.cmpi slt, %13, %43 : vector<1x64xi32>
    %45 = arith.andi %42, %44 : vector<1x64xi1>
    %46 = arith.extui %45 : vector<1x64xi1> to vector<1x64xi32>
    %47 = arith.sitofp %46 : vector<1x64xi32> to vector<1x64xf32>
    %48 = vector.broadcast %47 : vector<1x64xf32> to vector<128x64xf32>
    %49 = arith.mulf %40, %48 : vector<128x64xf32>
    %50 = arith.addf %14, %49 : vector<128x64xf32>
    %51 = vector.extract_strided_slice %11 {offsets = [0, 1], sizes = [128, 1], strides = [1, 1]} : vector<128x4xf32> to vector<128x1xf32>
    %52 = vector.extract_strided_slice %12 {offsets = [1, 0], sizes = [1, 128], strides = [1, 1]} : vector<4x128xf32> to vector<1x128xf32>
    %53 = vector.broadcast %51 : vector<128x1xf32> to vector<128x128xf32>
    %54 = vector.broadcast %52 : vector<1x128xf32> to vector<128x128xf32>
    %55 = arith.addf %53, %54 : vector<128x128xf32>
    %cst_19 = arith.constant 0.000000e+00 : f32
    %56 = vector.broadcast %cst_19 : f32 to vector<128x128xf32>
    %57 = arith.cmpf ogt, %55, %56 : vector<128x128xf32>
    %cst_20 = arith.constant 2.000000e-01 : f32
    %58 = vector.broadcast %cst_20 : f32 to vector<128x128xf32>
    %59 = arith.mulf %58, %55 : vector<128x128xf32>
    %60 = arith.select %57, %55, %59 : vector<128x128xi1>, vector<128x128xf32>
    %cst_21 = arith.constant -1.000000e+30 : f32
    %61 = vector.broadcast %cst_21 : f32 to vector<128x128xf32>
    %62 = arith.select %2, %60, %61 : vector<128x128xi1>, vector<128x128xf32>
    %cst_22 = arith.constant dense<0xFF800000> : vector<128xf32>
    %63 = vector.multi_reduction <maximumf>, %62, %cst_22 [1] : vector<128x128xf32> to vector<128xf32>
    %64 = vector.shape_cast %63 : vector<128xf32> to vector<128x1xf32>
    %65 = vector.broadcast %64 : vector<128x1xf32> to vector<128x128xf32>
    %66 = arith.subf %62, %65 : vector<128x128xf32>
    %67 = math.exp %66 : vector<128x128xf32>
    %68 = arith.mulf %67, %4 : vector<128x128xf32>
    %cst_23 = arith.constant dense<0.000000e+00> : vector<128xf32>
    %69 = vector.multi_reduction <add>, %68, %cst_23 [1] : vector<128x128xf32> to vector<128xf32>
    %70 = vector.shape_cast %69 : vector<128xf32> to vector<128x1xf32>
    %cst_24 = arith.constant 1.000000e-30 : f32
    %71 = vector.broadcast %cst_24 : f32 to vector<128x1xf32>
    %72 = arith.maximumf %70, %71 : vector<128x1xf32>
    %73 = tpu.reciprocal %72 {approx = true} : vector<128x1xf32> -> vector<128x1xf32>
    %74 = vector.broadcast %73 : vector<128x1xf32> to vector<128x128xf32>
    %75 = arith.mulf %68, %74 : vector<128x128xf32>
    %cst_25 = arith.constant dense<0.000000e+00> : vector<128x64xf32>
    %76 = tpu.matmul %75, %10, %cst_25 {dimension_numbers = #tpu.dot_dimension_numbers<[1], [0], [0], [1], [0, 0, 1, 1], [], []>} : vector<128x128xf32>, vector<128x64xf32>, vector<128x64xf32> -> vector<128x64xf32>
    %c16_i32_26 = arith.constant 16 : i32
    %77 = vector.broadcast %c16_i32_26 : i32 to vector<1x64xi32>
    %78 = arith.cmpi sge, %13, %77 : vector<1x64xi32>
    %c32_i32 = arith.constant 32 : i32
    %79 = vector.broadcast %c32_i32 : i32 to vector<1x64xi32>
    %80 = arith.cmpi slt, %13, %79 : vector<1x64xi32>
    %81 = arith.andi %78, %80 : vector<1x64xi1>
    %82 = arith.extui %81 : vector<1x64xi1> to vector<1x64xi32>
    %83 = arith.sitofp %82 : vector<1x64xi32> to vector<1x64xf32>
    %84 = vector.broadcast %83 : vector<1x64xf32> to vector<128x64xf32>
    %85 = arith.mulf %76, %84 : vector<128x64xf32>
    %86 = arith.addf %50, %85 : vector<128x64xf32>
    %87 = vector.extract_strided_slice %11 {offsets = [0, 2], sizes = [128, 1], strides = [1, 1]} : vector<128x4xf32> to vector<128x1xf32>
    %88 = vector.extract_strided_slice %12 {offsets = [2, 0], sizes = [1, 128], strides = [1, 1]} : vector<4x128xf32> to vector<1x128xf32>
    %89 = vector.broadcast %87 : vector<128x1xf32> to vector<128x128xf32>
    %90 = vector.broadcast %88 : vector<1x128xf32> to vector<128x128xf32>
    %91 = arith.addf %89, %90 : vector<128x128xf32>
    %cst_27 = arith.constant 0.000000e+00 : f32
    %92 = vector.broadcast %cst_27 : f32 to vector<128x128xf32>
    %93 = arith.cmpf ogt, %91, %92 : vector<128x128xf32>
    %cst_28 = arith.constant 2.000000e-01 : f32
    %94 = vector.broadcast %cst_28 : f32 to vector<128x128xf32>
    %95 = arith.mulf %94, %91 : vector<128x128xf32>
    %96 = arith.select %93, %91, %95 : vector<128x128xi1>, vector<128x128xf32>
    %cst_29 = arith.constant -1.000000e+30 : f32
    %97 = vector.broadcast %cst_29 : f32 to vector<128x128xf32>
    %98 = arith.select %2, %96, %97 : vector<128x128xi1>, vector<128x128xf32>
    %cst_30 = arith.constant dense<0xFF800000> : vector<128xf32>
    %99 = vector.multi_reduction <maximumf>, %98, %cst_30 [1] : vector<128x128xf32> to vector<128xf32>
    %100 = vector.shape_cast %99 : vector<128xf32> to vector<128x1xf32>
    %101 = vector.broadcast %100 : vector<128x1xf32> to vector<128x128xf32>
    %102 = arith.subf %98, %101 : vector<128x128xf32>
    %103 = math.exp %102 : vector<128x128xf32>
    %104 = arith.mulf %103, %4 : vector<128x128xf32>
    %cst_31 = arith.constant dense<0.000000e+00> : vector<128xf32>
    %105 = vector.multi_reduction <add>, %104, %cst_31 [1] : vector<128x128xf32> to vector<128xf32>
    %106 = vector.shape_cast %105 : vector<128xf32> to vector<128x1xf32>
    %cst_32 = arith.constant 1.000000e-30 : f32
    %107 = vector.broadcast %cst_32 : f32 to vector<128x1xf32>
    %108 = arith.maximumf %106, %107 : vector<128x1xf32>
    %109 = tpu.reciprocal %108 {approx = true} : vector<128x1xf32> -> vector<128x1xf32>
    %110 = vector.broadcast %109 : vector<128x1xf32> to vector<128x128xf32>
    %111 = arith.mulf %104, %110 : vector<128x128xf32>
    %cst_33 = arith.constant dense<0.000000e+00> : vector<128x64xf32>
    %112 = tpu.matmul %111, %10, %cst_33 {dimension_numbers = #tpu.dot_dimension_numbers<[1], [0], [0], [1], [0, 0, 1, 1], [], []>} : vector<128x128xf32>, vector<128x64xf32>, vector<128x64xf32> -> vector<128x64xf32>
    %c32_i32_34 = arith.constant 32 : i32
    %113 = vector.broadcast %c32_i32_34 : i32 to vector<1x64xi32>
    %114 = arith.cmpi sge, %13, %113 : vector<1x64xi32>
    %c48_i32 = arith.constant 48 : i32
    %115 = vector.broadcast %c48_i32 : i32 to vector<1x64xi32>
    %116 = arith.cmpi slt, %13, %115 : vector<1x64xi32>
    %117 = arith.andi %114, %116 : vector<1x64xi1>
    %118 = arith.extui %117 : vector<1x64xi1> to vector<1x64xi32>
    %119 = arith.sitofp %118 : vector<1x64xi32> to vector<1x64xf32>
    %120 = vector.broadcast %119 : vector<1x64xf32> to vector<128x64xf32>
    %121 = arith.mulf %112, %120 : vector<128x64xf32>
    %122 = arith.addf %86, %121 : vector<128x64xf32>
    %123 = vector.extract_strided_slice %11 {offsets = [0, 3], sizes = [128, 1], strides = [1, 1]} : vector<128x4xf32> to vector<128x1xf32>
    %124 = vector.extract_strided_slice %12 {offsets = [3, 0], sizes = [1, 128], strides = [1, 1]} : vector<4x128xf32> to vector<1x128xf32>
    %125 = vector.broadcast %123 : vector<128x1xf32> to vector<128x128xf32>
    %126 = vector.broadcast %124 : vector<1x128xf32> to vector<128x128xf32>
    %127 = arith.addf %125, %126 : vector<128x128xf32>
    %cst_35 = arith.constant 0.000000e+00 : f32
    %128 = vector.broadcast %cst_35 : f32 to vector<128x128xf32>
    %129 = arith.cmpf ogt, %127, %128 : vector<128x128xf32>
    %cst_36 = arith.constant 2.000000e-01 : f32
    %130 = vector.broadcast %cst_36 : f32 to vector<128x128xf32>
    %131 = arith.mulf %130, %127 : vector<128x128xf32>
    %132 = arith.select %129, %127, %131 : vector<128x128xi1>, vector<128x128xf32>
    %cst_37 = arith.constant -1.000000e+30 : f32
    %133 = vector.broadcast %cst_37 : f32 to vector<128x128xf32>
    %134 = arith.select %2, %132, %133 : vector<128x128xi1>, vector<128x128xf32>
    %cst_38 = arith.constant dense<0xFF800000> : vector<128xf32>
    %135 = vector.multi_reduction <maximumf>, %134, %cst_38 [1] : vector<128x128xf32> to vector<128xf32>
    %136 = vector.shape_cast %135 : vector<128xf32> to vector<128x1xf32>
    %137 = vector.broadcast %136 : vector<128x1xf32> to vector<128x128xf32>
    %138 = arith.subf %134, %137 : vector<128x128xf32>
    %139 = math.exp %138 : vector<128x128xf32>
    %140 = arith.mulf %139, %4 : vector<128x128xf32>
    %cst_39 = arith.constant dense<0.000000e+00> : vector<128xf32>
    %141 = vector.multi_reduction <add>, %140, %cst_39 [1] : vector<128x128xf32> to vector<128xf32>
    %142 = vector.shape_cast %141 : vector<128xf32> to vector<128x1xf32>
    %cst_40 = arith.constant 1.000000e-30 : f32
    %143 = vector.broadcast %cst_40 : f32 to vector<128x1xf32>
    %144 = arith.maximumf %142, %143 : vector<128x1xf32>
    %145 = tpu.reciprocal %144 {approx = true} : vector<128x1xf32> -> vector<128x1xf32>
    %146 = vector.broadcast %145 : vector<128x1xf32> to vector<128x128xf32>
    %147 = arith.mulf %140, %146 : vector<128x128xf32>
    %cst_41 = arith.constant dense<0.000000e+00> : vector<128x64xf32>
    %148 = tpu.matmul %147, %10, %cst_41 {dimension_numbers = #tpu.dot_dimension_numbers<[1], [0], [0], [1], [0, 0, 1, 1], [], []>} : vector<128x128xf32>, vector<128x64xf32>, vector<128x64xf32> -> vector<128x64xf32>
    %c48_i32_42 = arith.constant 48 : i32
    %149 = vector.broadcast %c48_i32_42 : i32 to vector<1x64xi32>
    %150 = arith.cmpi sge, %13, %149 : vector<1x64xi32>
    %c64_i32 = arith.constant 64 : i32
    %151 = vector.broadcast %c64_i32 : i32 to vector<1x64xi32>
    %152 = arith.cmpi slt, %13, %151 : vector<1x64xi32>
    %153 = arith.andi %150, %152 : vector<1x64xi1>
    %154 = arith.extui %153 : vector<1x64xi1> to vector<1x64xi32>
    %155 = arith.sitofp %154 : vector<1x64xi32> to vector<1x64xf32>
    %156 = vector.broadcast %155 : vector<1x64xf32> to vector<128x64xf32>
    %157 = arith.mulf %148, %156 : vector<128x64xf32>
    %158 = arith.addf %122, %157 : vector<128x64xf32>
    %159 = vector.broadcast %5 : vector<128x1xf32> to vector<128x64xf32>
    %160 = arith.mulf %158, %159 : vector<128x64xf32>
    %cst_43 = arith.constant 0.000000e+00 : f32
    %161 = vector.broadcast %cst_43 : f32 to vector<128x64xf32>
    %162 = arith.cmpf ogt, %160, %161 : vector<128x64xf32>
    %cst_44 = arith.constant 0.000000e+00 : f32
    %163 = vector.broadcast %cst_44 : f32 to vector<128x64xf32>
    %164 = arith.minimumf %160, %163 : vector<128x64xf32>
    %165 = math.exp %164 : vector<128x64xf32>
    %cst_45 = arith.constant 1.000000e+00 : f32
    %166 = vector.broadcast %cst_45 : f32 to vector<128x64xf32>
    %167 = arith.subf %165, %166 : vector<128x64xf32>
    %168 = arith.select %162, %160, %167 : vector<128x64xi1>, vector<128x64xf32>
    %c0_46 = arith.constant 0 : index
    %c0_47 = arith.constant 0 : index
    %169 = vector.load %arg6[%c0_46, %c0_47] : memref<64x68xf32, #tpu.memory_space<vmem>>, vector<64x68xf32>
    %c0_48 = arith.constant 0 : index
    %c0_49 = arith.constant 0 : index
    %170 = vector.load %arg7[%c0_48, %c0_49] : memref<4x64xf32, #tpu.memory_space<vmem>>, vector<4x64xf32>
    %cst_50 = arith.constant dense<0.000000e+00> : vector<128x68xf32>
    %171 = tpu.matmul %168, %169, %cst_50 {dimension_numbers = #tpu.dot_dimension_numbers<[1], [0], [0], [1], [0, 0, 1, 1], [], []>} : vector<128x64xf32>, vector<64x68xf32>, vector<128x68xf32> -> vector<128x68xf32>
    %172 = vector.extract_strided_slice %171 {offsets = [0, 0], sizes = [128, 64], strides = [1, 1]} : vector<128x68xf32> to vector<128x64xf32>
    %173 = vector.extract_strided_slice %171 {offsets = [0, 64], sizes = [128, 4], strides = [1, 1]} : vector<128x68xf32> to vector<128x4xf32>
    %cst_51 = arith.constant dense<0.000000e+00> : vector<4x128xf32>
    %174 = tpu.matmul %170, %168, %cst_51 {dimension_numbers = #tpu.dot_dimension_numbers<[1], [1], [0], [0], [0, 0, 1, 0], [], []>} : vector<4x64xf32>, vector<128x64xf32>, vector<4x128xf32> -> vector<4x128xf32>
    %175 = tpu.iota {dimensions = array<i32: 1>} : vector<1x64xi32>
    %cst_52 = arith.constant 0.000000e+00 : f32
    %176 = vector.broadcast %cst_52 : f32 to vector<128x64xf32>
    %177 = vector.extract_strided_slice %173 {offsets = [0, 0], sizes = [128, 1], strides = [1, 1]} : vector<128x4xf32> to vector<128x1xf32>
    %178 = vector.extract_strided_slice %174 {offsets = [0, 0], sizes = [1, 128], strides = [1, 1]} : vector<4x128xf32> to vector<1x128xf32>
    %179 = vector.broadcast %177 : vector<128x1xf32> to vector<128x128xf32>
    %180 = vector.broadcast %178 : vector<1x128xf32> to vector<128x128xf32>
    %181 = arith.addf %179, %180 : vector<128x128xf32>
    %cst_53 = arith.constant 0.000000e+00 : f32
    %182 = vector.broadcast %cst_53 : f32 to vector<128x128xf32>
    %183 = arith.cmpf ogt, %181, %182 : vector<128x128xf32>
    %cst_54 = arith.constant 2.000000e-01 : f32
    %184 = vector.broadcast %cst_54 : f32 to vector<128x128xf32>
    %185 = arith.mulf %184, %181 : vector<128x128xf32>
    %186 = arith.select %183, %181, %185 : vector<128x128xi1>, vector<128x128xf32>
    %cst_55 = arith.constant -1.000000e+30 : f32
    %187 = vector.broadcast %cst_55 : f32 to vector<128x128xf32>
    %188 = arith.select %2, %186, %187 : vector<128x128xi1>, vector<128x128xf32>
    %cst_56 = arith.constant dense<0xFF800000> : vector<128xf32>
    %189 = vector.multi_reduction <maximumf>, %188, %cst_56 [1] : vector<128x128xf32> to vector<128xf32>
    %190 = vector.shape_cast %189 : vector<128xf32> to vector<128x1xf32>
    %191 = vector.broadcast %190 : vector<128x1xf32> to vector<128x128xf32>
    %192 = arith.subf %188, %191 : vector<128x128xf32>
    %193 = math.exp %192 : vector<128x128xf32>
    %194 = arith.mulf %193, %4 : vector<128x128xf32>
    %cst_57 = arith.constant dense<0.000000e+00> : vector<128xf32>
    %195 = vector.multi_reduction <add>, %194, %cst_57 [1] : vector<128x128xf32> to vector<128xf32>
    %196 = vector.shape_cast %195 : vector<128xf32> to vector<128x1xf32>
    %cst_58 = arith.constant 1.000000e-30 : f32
    %197 = vector.broadcast %cst_58 : f32 to vector<128x1xf32>
    %198 = arith.maximumf %196, %197 : vector<128x1xf32>
    %199 = tpu.reciprocal %198 {approx = true} : vector<128x1xf32> -> vector<128x1xf32>
    %200 = vector.broadcast %199 : vector<128x1xf32> to vector<128x128xf32>
    %201 = arith.mulf %194, %200 : vector<128x128xf32>
    %cst_59 = arith.constant dense<0.000000e+00> : vector<128x64xf32>
    %202 = tpu.matmul %201, %172, %cst_59 {dimension_numbers = #tpu.dot_dimension_numbers<[1], [0], [0], [1], [0, 0, 1, 1], [], []>} : vector<128x128xf32>, vector<128x64xf32>, vector<128x64xf32> -> vector<128x64xf32>
    %c0_i32_60 = arith.constant 0 : i32
    %203 = vector.broadcast %c0_i32_60 : i32 to vector<1x64xi32>
    %204 = arith.cmpi sge, %175, %203 : vector<1x64xi32>
    %c16_i32_61 = arith.constant 16 : i32
    %205 = vector.broadcast %c16_i32_61 : i32 to vector<1x64xi32>
    %206 = arith.cmpi slt, %175, %205 : vector<1x64xi32>
    %207 = arith.andi %204, %206 : vector<1x64xi1>
    %208 = arith.extui %207 : vector<1x64xi1> to vector<1x64xi32>
    %209 = arith.sitofp %208 : vector<1x64xi32> to vector<1x64xf32>
    %210 = vector.broadcast %209 : vector<1x64xf32> to vector<128x64xf32>
    %211 = arith.mulf %202, %210 : vector<128x64xf32>
    %212 = arith.addf %176, %211 : vector<128x64xf32>
    %213 = vector.extract_strided_slice %173 {offsets = [0, 1], sizes = [128, 1], strides = [1, 1]} : vector<128x4xf32> to vector<128x1xf32>
    %214 = vector.extract_strided_slice %174 {offsets = [1, 0], sizes = [1, 128], strides = [1, 1]} : vector<4x128xf32> to vector<1x128xf32>
    %215 = vector.broadcast %213 : vector<128x1xf32> to vector<128x128xf32>
    %216 = vector.broadcast %214 : vector<1x128xf32> to vector<128x128xf32>
    %217 = arith.addf %215, %216 : vector<128x128xf32>
    %cst_62 = arith.constant 0.000000e+00 : f32
    %218 = vector.broadcast %cst_62 : f32 to vector<128x128xf32>
    %219 = arith.cmpf ogt, %217, %218 : vector<128x128xf32>
    %cst_63 = arith.constant 2.000000e-01 : f32
    %220 = vector.broadcast %cst_63 : f32 to vector<128x128xf32>
    %221 = arith.mulf %220, %217 : vector<128x128xf32>
    %222 = arith.select %219, %217, %221 : vector<128x128xi1>, vector<128x128xf32>
    %cst_64 = arith.constant -1.000000e+30 : f32
    %223 = vector.broadcast %cst_64 : f32 to vector<128x128xf32>
    %224 = arith.select %2, %222, %223 : vector<128x128xi1>, vector<128x128xf32>
    %cst_65 = arith.constant dense<0xFF800000> : vector<128xf32>
    %225 = vector.multi_reduction <maximumf>, %224, %cst_65 [1] : vector<128x128xf32> to vector<128xf32>
    %226 = vector.shape_cast %225 : vector<128xf32> to vector<128x1xf32>
    %227 = vector.broadcast %226 : vector<128x1xf32> to vector<128x128xf32>
    %228 = arith.subf %224, %227 : vector<128x128xf32>
    %229 = math.exp %228 : vector<128x128xf32>
    %230 = arith.mulf %229, %4 : vector<128x128xf32>
    %cst_66 = arith.constant dense<0.000000e+00> : vector<128xf32>
    %231 = vector.multi_reduction <add>, %230, %cst_66 [1] : vector<128x128xf32> to vector<128xf32>
    %232 = vector.shape_cast %231 : vector<128xf32> to vector<128x1xf32>
    %cst_67 = arith.constant 1.000000e-30 : f32
    %233 = vector.broadcast %cst_67 : f32 to vector<128x1xf32>
    %234 = arith.maximumf %232, %233 : vector<128x1xf32>
    %235 = tpu.reciprocal %234 {approx = true} : vector<128x1xf32> -> vector<128x1xf32>
    %236 = vector.broadcast %235 : vector<128x1xf32> to vector<128x128xf32>
    %237 = arith.mulf %230, %236 : vector<128x128xf32>
    %cst_68 = arith.constant dense<0.000000e+00> : vector<128x64xf32>
    %238 = tpu.matmul %237, %172, %cst_68 {dimension_numbers = #tpu.dot_dimension_numbers<[1], [0], [0], [1], [0, 0, 1, 1], [], []>} : vector<128x128xf32>, vector<128x64xf32>, vector<128x64xf32> -> vector<128x64xf32>
    %c16_i32_69 = arith.constant 16 : i32
    %239 = vector.broadcast %c16_i32_69 : i32 to vector<1x64xi32>
    %240 = arith.cmpi sge, %175, %239 : vector<1x64xi32>
    %c32_i32_70 = arith.constant 32 : i32
    %241 = vector.broadcast %c32_i32_70 : i32 to vector<1x64xi32>
    %242 = arith.cmpi slt, %175, %241 : vector<1x64xi32>
    %243 = arith.andi %240, %242 : vector<1x64xi1>
    %244 = arith.extui %243 : vector<1x64xi1> to vector<1x64xi32>
    %245 = arith.sitofp %244 : vector<1x64xi32> to vector<1x64xf32>
    %246 = vector.broadcast %245 : vector<1x64xf32> to vector<128x64xf32>
    %247 = arith.mulf %238, %246 : vector<128x64xf32>
    %248 = arith.addf %212, %247 : vector<128x64xf32>
    %249 = vector.extract_strided_slice %173 {offsets = [0, 2], sizes = [128, 1], strides = [1, 1]} : vector<128x4xf32> to vector<128x1xf32>
    %250 = vector.extract_strided_slice %174 {offsets = [2, 0], sizes = [1, 128], strides = [1, 1]} : vector<4x128xf32> to vector<1x128xf32>
    %251 = vector.broadcast %249 : vector<128x1xf32> to vector<128x128xf32>
    %252 = vector.broadcast %250 : vector<1x128xf32> to vector<128x128xf32>
    %253 = arith.addf %251, %252 : vector<128x128xf32>
    %cst_71 = arith.constant 0.000000e+00 : f32
    %254 = vector.broadcast %cst_71 : f32 to vector<128x128xf32>
    %255 = arith.cmpf ogt, %253, %254 : vector<128x128xf32>
    %cst_72 = arith.constant 2.000000e-01 : f32
    %256 = vector.broadcast %cst_72 : f32 to vector<128x128xf32>
    %257 = arith.mulf %256, %253 : vector<128x128xf32>
    %258 = arith.select %255, %253, %257 : vector<128x128xi1>, vector<128x128xf32>
    %cst_73 = arith.constant -1.000000e+30 : f32
    %259 = vector.broadcast %cst_73 : f32 to vector<128x128xf32>
    %260 = arith.select %2, %258, %259 : vector<128x128xi1>, vector<128x128xf32>
    %cst_74 = arith.constant dense<0xFF800000> : vector<128xf32>
    %261 = vector.multi_reduction <maximumf>, %260, %cst_74 [1] : vector<128x128xf32> to vector<128xf32>
    %262 = vector.shape_cast %261 : vector<128xf32> to vector<128x1xf32>
    %263 = vector.broadcast %262 : vector<128x1xf32> to vector<128x128xf32>
    %264 = arith.subf %260, %263 : vector<128x128xf32>
    %265 = math.exp %264 : vector<128x128xf32>
    %266 = arith.mulf %265, %4 : vector<128x128xf32>
    %cst_75 = arith.constant dense<0.000000e+00> : vector<128xf32>
    %267 = vector.multi_reduction <add>, %266, %cst_75 [1] : vector<128x128xf32> to vector<128xf32>
    %268 = vector.shape_cast %267 : vector<128xf32> to vector<128x1xf32>
    %cst_76 = arith.constant 1.000000e-30 : f32
    %269 = vector.broadcast %cst_76 : f32 to vector<128x1xf32>
    %270 = arith.maximumf %268, %269 : vector<128x1xf32>
    %271 = tpu.reciprocal %270 {approx = true} : vector<128x1xf32> -> vector<128x1xf32>
    %272 = vector.broadcast %271 : vector<128x1xf32> to vector<128x128xf32>
    %273 = arith.mulf %266, %272 : vector<128x128xf32>
    %cst_77 = arith.constant dense<0.000000e+00> : vector<128x64xf32>
    %274 = tpu.matmul %273, %172, %cst_77 {dimension_numbers = #tpu.dot_dimension_numbers<[1], [0], [0], [1], [0, 0, 1, 1], [], []>} : vector<128x128xf32>, vector<128x64xf32>, vector<128x64xf32> -> vector<128x64xf32>
    %c32_i32_78 = arith.constant 32 : i32
    %275 = vector.broadcast %c32_i32_78 : i32 to vector<1x64xi32>
    %276 = arith.cmpi sge, %175, %275 : vector<1x64xi32>
    %c48_i32_79 = arith.constant 48 : i32
    %277 = vector.broadcast %c48_i32_79 : i32 to vector<1x64xi32>
    %278 = arith.cmpi slt, %175, %277 : vector<1x64xi32>
    %279 = arith.andi %276, %278 : vector<1x64xi1>
    %280 = arith.extui %279 : vector<1x64xi1> to vector<1x64xi32>
    %281 = arith.sitofp %280 : vector<1x64xi32> to vector<1x64xf32>
    %282 = vector.broadcast %281 : vector<1x64xf32> to vector<128x64xf32>
    %283 = arith.mulf %274, %282 : vector<128x64xf32>
    %284 = arith.addf %248, %283 : vector<128x64xf32>
    %285 = vector.extract_strided_slice %173 {offsets = [0, 3], sizes = [128, 1], strides = [1, 1]} : vector<128x4xf32> to vector<128x1xf32>
    %286 = vector.extract_strided_slice %174 {offsets = [3, 0], sizes = [1, 128], strides = [1, 1]} : vector<4x128xf32> to vector<1x128xf32>
    %287 = vector.broadcast %285 : vector<128x1xf32> to vector<128x128xf32>
    %288 = vector.broadcast %286 : vector<1x128xf32> to vector<128x128xf32>
    %289 = arith.addf %287, %288 : vector<128x128xf32>
    %cst_80 = arith.constant 0.000000e+00 : f32
    %290 = vector.broadcast %cst_80 : f32 to vector<128x128xf32>
    %291 = arith.cmpf ogt, %289, %290 : vector<128x128xf32>
    %cst_81 = arith.constant 2.000000e-01 : f32
    %292 = vector.broadcast %cst_81 : f32 to vector<128x128xf32>
    %293 = arith.mulf %292, %289 : vector<128x128xf32>
    %294 = arith.select %291, %289, %293 : vector<128x128xi1>, vector<128x128xf32>
    %cst_82 = arith.constant -1.000000e+30 : f32
    %295 = vector.broadcast %cst_82 : f32 to vector<128x128xf32>
    %296 = arith.select %2, %294, %295 : vector<128x128xi1>, vector<128x128xf32>
    %cst_83 = arith.constant dense<0xFF800000> : vector<128xf32>
    %297 = vector.multi_reduction <maximumf>, %296, %cst_83 [1] : vector<128x128xf32> to vector<128xf32>
    %298 = vector.shape_cast %297 : vector<128xf32> to vector<128x1xf32>
    %299 = vector.broadcast %298 : vector<128x1xf32> to vector<128x128xf32>
    %300 = arith.subf %296, %299 : vector<128x128xf32>
    %301 = math.exp %300 : vector<128x128xf32>
    %302 = arith.mulf %301, %4 : vector<128x128xf32>
    %cst_84 = arith.constant dense<0.000000e+00> : vector<128xf32>
    %303 = vector.multi_reduction <add>, %302, %cst_84 [1] : vector<128x128xf32> to vector<128xf32>
    %304 = vector.shape_cast %303 : vector<128xf32> to vector<128x1xf32>
    %cst_85 = arith.constant 1.000000e-30 : f32
    %305 = vector.broadcast %cst_85 : f32 to vector<128x1xf32>
    %306 = arith.maximumf %304, %305 : vector<128x1xf32>
    %307 = tpu.reciprocal %306 {approx = true} : vector<128x1xf32> -> vector<128x1xf32>
    %308 = vector.broadcast %307 : vector<128x1xf32> to vector<128x128xf32>
    %309 = arith.mulf %302, %308 : vector<128x128xf32>
    %cst_86 = arith.constant dense<0.000000e+00> : vector<128x64xf32>
    %310 = tpu.matmul %309, %172, %cst_86 {dimension_numbers = #tpu.dot_dimension_numbers<[1], [0], [0], [1], [0, 0, 1, 1], [], []>} : vector<128x128xf32>, vector<128x64xf32>, vector<128x64xf32> -> vector<128x64xf32>
    %c48_i32_87 = arith.constant 48 : i32
    %311 = vector.broadcast %c48_i32_87 : i32 to vector<1x64xi32>
    %312 = arith.cmpi sge, %175, %311 : vector<1x64xi32>
    %c64_i32_88 = arith.constant 64 : i32
    %313 = vector.broadcast %c64_i32_88 : i32 to vector<1x64xi32>
    %314 = arith.cmpi slt, %175, %313 : vector<1x64xi32>
    %315 = arith.andi %312, %314 : vector<1x64xi1>
    %316 = arith.extui %315 : vector<1x64xi1> to vector<1x64xi32>
    %317 = arith.sitofp %316 : vector<1x64xi32> to vector<1x64xf32>
    %318 = vector.broadcast %317 : vector<1x64xf32> to vector<128x64xf32>
    %319 = arith.mulf %310, %318 : vector<128x64xf32>
    %320 = arith.addf %284, %319 : vector<128x64xf32>
    %321 = vector.broadcast %5 : vector<128x1xf32> to vector<128x64xf32>
    %322 = arith.mulf %320, %321 : vector<128x64xf32>
    %cst_89 = arith.constant 0.000000e+00 : f32
    %323 = vector.broadcast %cst_89 : f32 to vector<128x64xf32>
    %324 = arith.cmpf ogt, %322, %323 : vector<128x64xf32>
    %cst_90 = arith.constant 0.000000e+00 : f32
    %325 = vector.broadcast %cst_90 : f32 to vector<128x64xf32>
    %326 = arith.minimumf %322, %325 : vector<128x64xf32>
    %327 = math.exp %326 : vector<128x64xf32>
    %cst_91 = arith.constant 1.000000e+00 : f32
    %328 = vector.broadcast %cst_91 : f32 to vector<128x64xf32>
    %329 = arith.subf %327, %328 : vector<128x64xf32>
    %330 = arith.select %324, %322, %329 : vector<128x64xi1>, vector<128x64xf32>
    %c0_92 = arith.constant 0 : index
    %c0_93 = arith.constant 0 : index
    %331 = vector.load %arg8[%c0_92, %c0_93] : memref<64x129xf32, #tpu.memory_space<vmem>>, vector<64x129xf32>
    %c0_94 = arith.constant 0 : index
    %c0_95 = arith.constant 0 : index
    %332 = vector.load %arg9[%c0_94, %c0_95] : memref<1x64xf32, #tpu.memory_space<vmem>>, vector<1x64xf32>
    %cst_96 = arith.constant dense<0.000000e+00> : vector<128x129xf32>
    %333 = tpu.matmul %330, %331, %cst_96 {dimension_numbers = #tpu.dot_dimension_numbers<[1], [0], [0], [1], [0, 0, 1, 1], [], []>} : vector<128x64xf32>, vector<64x129xf32>, vector<128x129xf32> -> vector<128x129xf32>
    %334 = vector.extract_strided_slice %333 {offsets = [0, 0], sizes = [128, 128], strides = [1, 1]} : vector<128x129xf32> to vector<128x128xf32>
    %335 = vector.extract_strided_slice %333 {offsets = [0, 128], sizes = [128, 1], strides = [1, 1]} : vector<128x129xf32> to vector<128x1xf32>
    %cst_97 = arith.constant dense<0.000000e+00> : vector<1x128xf32>
    %336 = tpu.matmul %332, %330, %cst_97 {dimension_numbers = #tpu.dot_dimension_numbers<[1], [1], [0], [0], [0, 0, 1, 0], [], []>} : vector<1x64xf32>, vector<128x64xf32>, vector<1x128xf32> -> vector<1x128xf32>
    %337 = vector.broadcast %335 : vector<128x1xf32> to vector<128x128xf32>
    %338 = vector.broadcast %336 : vector<1x128xf32> to vector<128x128xf32>
    %339 = arith.addf %337, %338 : vector<128x128xf32>
    %cst_98 = arith.constant 0.000000e+00 : f32
    %340 = vector.broadcast %cst_98 : f32 to vector<128x128xf32>
    %341 = arith.cmpf ogt, %339, %340 : vector<128x128xf32>
    %cst_99 = arith.constant 2.000000e-01 : f32
    %342 = vector.broadcast %cst_99 : f32 to vector<128x128xf32>
    %343 = arith.mulf %342, %339 : vector<128x128xf32>
    %344 = arith.select %341, %339, %343 : vector<128x128xi1>, vector<128x128xf32>
    %cst_100 = arith.constant -1.000000e+30 : f32
    %345 = vector.broadcast %cst_100 : f32 to vector<128x128xf32>
    %346 = arith.select %2, %344, %345 : vector<128x128xi1>, vector<128x128xf32>
    %cst_101 = arith.constant dense<0xFF800000> : vector<128xf32>
    %347 = vector.multi_reduction <maximumf>, %346, %cst_101 [1] : vector<128x128xf32> to vector<128xf32>
    %348 = vector.shape_cast %347 : vector<128xf32> to vector<128x1xf32>
    %349 = vector.broadcast %348 : vector<128x1xf32> to vector<128x128xf32>
    %350 = arith.subf %346, %349 : vector<128x128xf32>
    %351 = math.exp %350 : vector<128x128xf32>
    %352 = arith.mulf %351, %4 : vector<128x128xf32>
    %cst_102 = arith.constant dense<0.000000e+00> : vector<128xf32>
    %353 = vector.multi_reduction <add>, %352, %cst_102 [1] : vector<128x128xf32> to vector<128xf32>
    %354 = vector.shape_cast %353 : vector<128xf32> to vector<128x1xf32>
    %cst_103 = arith.constant 1.000000e-30 : f32
    %355 = vector.broadcast %cst_103 : f32 to vector<128x1xf32>
    %356 = arith.maximumf %354, %355 : vector<128x1xf32>
    %357 = tpu.reciprocal %356 {approx = true} : vector<128x1xf32> -> vector<128x1xf32>
    %358 = vector.broadcast %357 : vector<128x1xf32> to vector<128x128xf32>
    %359 = arith.mulf %352, %358 : vector<128x128xf32>
    %cst_104 = arith.constant dense<0.000000e+00> : vector<128x128xf32>
    %360 = tpu.matmul %359, %334, %cst_104 {dimension_numbers = #tpu.dot_dimension_numbers<[1], [0], [0], [1], [0, 0, 1, 1], [], []>} : vector<128x128xf32>, vector<128x128xf32>, vector<128x128xf32> -> vector<128x128xf32>
    %361 = vector.broadcast %5 : vector<128x1xf32> to vector<128x128xf32>
    %362 = arith.mulf %360, %361 : vector<128x128xf32>
    %c0_105 = arith.constant 0 : index
    %c0_106 = arith.constant 0 : index
    %363 = vector.load %arg10[%c0_105, %c0_106] : memref<128x128xf32, #tpu.memory_space<vmem>>, vector<128x128xf32>
    tpu.vector_store %arg10[%c0_105, %c0_106], %362 {strides = array<i32>} : memref<128x128xf32, #tpu.memory_space<vmem>>, vector<128x128xf32>,
    return
  }
  func.func @transform_0(%arg0: i32) -> (i32, i32) {
    %c0_i32 = arith.constant 0 : i32
    %c0_i32_0 = arith.constant 0 : i32
    %c0_i32_1 = arith.constant 0 : i32
    return %c0_i32, %c0_i32_0 : i32, i32
  }
  func.func @transform_1(%arg0: i32) -> (i32, i32) {
    %c0_i32 = arith.constant 0 : i32
    %c0_i32_0 = arith.constant 0 : i32
    %c0_i32_1 = arith.constant 0 : i32
    return %c0_i32, %c0_i32_0 : i32, i32
  }
  func.func @transform_2(%arg0: i32) -> (i32, i32) {
    %c0_i32 = arith.constant 0 : i32
    %c0_i32_0 = arith.constant 0 : i32
    %c0_i32_1 = arith.constant 0 : i32
    return %c0_i32, %c0_i32_0 : i32, i32
  }
  func.func @transform_3(%arg0: i32) -> (i32, i32) {
    %c0_i32 = arith.constant 0 : i32
    %c0_i32_0 = arith.constant 0 : i32
    %c0_i32_1 = arith.constant 0 : i32
    return %c0_i32, %c0_i32_0 : i32, i32
  }
  func.func @transform_4(%arg0: i32) -> (i32, i32) {
    %c0_i32 = arith.constant 0 : i32
    %c0_i32_0 = arith.constant 0 : i32
    %c0_i32_1 = arith.constant 0 : i32
    return %c0_i32, %c0_i32_0 : i32, i32
  }
  func.func @transform_5(%arg0: i32) -> (i32, i32) {
    %c0_i32 = arith.constant 0 : i32
    %c0_i32_0 = arith.constant 0 : i32
    %c0_i32_1 = arith.constant 0 : i32
    return %c0_i32, %c0_i32_0 : i32, i32
  }
  func.func @transform_6(%arg0: i32) -> (i32, i32) {
    %c0_i32 = arith.constant 0 : i32
    %c0_i32_0 = arith.constant 0 : i32
    %c0_i32_1 = arith.constant 0 : i32
    return %c0_i32, %c0_i32_0 : i32, i32
  }
  func.func @transform_7(%arg0: i32) -> (i32, i32) {
    %c0_i32 = arith.constant 0 : i32
    %c0_i32_0 = arith.constant 0 : i32
    %c0_i32_1 = arith.constant 0 : i32
    return %c0_i32, %c0_i32_0 : i32, i32
  }
  func.func @transform_8(%arg0: i32) -> (i32, i32) {
    %c0_i32 = arith.constant 0 : i32
    %c0_i32_0 = arith.constant 0 : i32
    %c0_i32_1 = arith.constant 0 : i32
    return %c0_i32, %c0_i32_0 : i32, i32
  }
  func.func @transform_9(%arg0: i32) -> (i32, i32) {
    %c0_i32 = arith.constant 0 : i32
    %c0_i32_0 = arith.constant 0 : i32
    %c0_i32_1 = arith.constant 0 : i32
    return %c0_i32, %c0_i32_0 : i32, i32
  }
}

</mosaic_0001>

<llo_original>
// kernel: gatnet_forward.1
$region0: #{gatnet_forward.1}
  #allocation0 [shape = 'u32[]', space=smem, size = 0x4, offset = 0x4, fixed_abs, tag = 'smem constant byte address 0x4 - core index']
  #allocation1 [shape = 'u32[72,128]{1,0:T(1,128)}', space=vmem, size = 0x9000, scoped, tag = 'internal scratch']
  %s0 = inlined_call_operand.vmem [shape: f32[128,64], index: 0, kind: input, shape index: {}]
  %s1 = inlined_call_operand.vmem [shape: f32[128,128], index: 1, kind: input, shape index: {}]
  %s2 = inlined_call_operand.vmem [shape: f32[128,1], index: 2, kind: input, shape index: {}]
  %s3 = inlined_call_operand.vmem [shape: f32[64,68], index: 3, kind: input, shape index: {}]
  %s4 = inlined_call_operand.vmem [shape: f32[4,64], index: 4, kind: input, shape index: {}]
  %s5 = inlined_call_operand.vmem [shape: f32[64,68], index: 5, kind: input, shape index: {}]
  %s6 = inlined_call_operand.vmem [shape: f32[4,64], index: 6, kind: input, shape index: {}]
  %s7 = inlined_call_operand.vmem [shape: f32[64,129], index: 7, kind: input, shape index: {}]
  %s8 = inlined_call_operand.vmem [shape: f32[1,64], index: 8, kind: input, shape index: {}]
  %s9 = inlined_call_operand.vmem [shape: f32[128,128], index: 9, kind: output, shape index: {}]
  %s10 = sld [smem:[#allocation0]]
  $region46: #{gatnet_forward.1} parent=0
    _
  %s12 = ssub.s32 1, %s10
  %s13 = scalar_select 0, %s12, %s10
  // Predicated region
  $region2: #{gatnet_forward.1} parent=0 // pred_check
    _
  $region3: #{gatnet_forward.1} parent=0 // pred_check_branch
    %15 = sbr.rel (0) target = $region5
  $region4: #{gatnet_forward.1} parent=0 // pred_region
    _
  $region5: #{gatnet_forward.1} parent=0 // pred_fallthru
    _
  // Predicated region
  $region6: #{gatnet_forward.1} parent=0 // pred_check
    _
  $region7: #{gatnet_forward.1} parent=0 // pred_check_branch
    %17 = sbr.rel (0) target = $region9
  $region8: #{gatnet_forward.1} parent=0 // pred_region
    _
  $region9: #{gatnet_forward.1} parent=0 // pred_fallthru
    _
  // Predicated region
  $region10: #{gatnet_forward.1} parent=0 // pred_check
    _
  $region11: #{gatnet_forward.1} parent=0 // pred_check_branch
    %19 = sbr.rel (0) target = $region13
  $region12: #{gatnet_forward.1} parent=0 // pred_region
    _
  $region13: #{gatnet_forward.1} parent=0 // pred_fallthru
    _
  // Predicated region
  $region14: #{gatnet_forward.1} parent=0 // pred_check
    _
  $region15: #{gatnet_forward.1} parent=0 // pred_check_branch
    %21 = sbr.rel (0) target = $region17
  $region16: #{gatnet_forward.1} parent=0 // pred_region
    _
  $region17: #{gatnet_forward.1} parent=0 // pred_fallthru
    _
  // Predicated region
  $region18: #{gatnet_forward.1} parent=0 // pred_check
    _
  $region19: #{gatnet_forward.1} parent=0 // pred_check_branch
    %23 = sbr.rel (0) target = $region21
  $region20: #{gatnet_forward.1} parent=0 // pred_region
    _
  $region21: #{gatnet_forward.1} parent=0 // pred_fallthru
    _
  // Predicated region
  $region22: #{gatnet_forward.1} parent=0 // pred_check
    _
  $region23: #{gatnet_forward.1} parent=0 // pred_check_branch
    %25 = sbr.rel (0) target = $region25
  $region24: #{gatnet_forward.1} parent=0 // pred_region
    _
  $region25: #{gatnet_forward.1} parent=0 // pred_fallthru
    _
  // Predicated region
  $region26: #{gatnet_forward.1} parent=0 // pred_check
    _
  $region27: #{gatnet_forward.1} parent=0 // pred_check_branch
    %27 = sbr.rel (0) target = $region29
  $region28: #{gatnet_forward.1} parent=0 // pred_region
    _
  $region29: #{gatnet_forward.1} parent=0 // pred_fallthru
    _
  // Predicated region
  $region30: #{gatnet_forward.1} parent=0 // pred_check
    _
  $region31: #{gatnet_forward.1} parent=0 // pred_check_branch
    %29 = sbr.rel (0) target = $region33
  $region32: #{gatnet_forward.1} parent=0 // pred_region
    _
  $region33: #{gatnet_forward.1} parent=0 // pred_fallthru
    _
  // Predicated region
  $region34: #{gatnet_forward.1} parent=0 // pred_check
    _
  $region35: #{gatnet_forward.1} parent=0 // pred_check_branch
    %31 = sbr.rel (0) target = $region37
  $region36: #{gatnet_forward.1} parent=0 // pred_region
    _
  $region37: #{gatnet_forward.1} parent=0 // pred_fallthru
    _
  %v32 = vld [vmem:[%s1] sm:$0xff]
  %v33 = vld [vmem:[%s1 + $0x8] sm:$0xff]
  %v34 = vld [vmem:[%s1 + $0x10] sm:$0xff]
  %v35 = vld [vmem:[%s1 + $0x18] sm:$0xff]
  %v36 = vld [vmem:[%s1 + $0x20] sm:$0xff]
  %v37 = vld [vmem:[%s1 + $0x28] sm:$0xff]
  %v38 = vld [vmem:[%s1 + $0x30] sm:$0xff]
  %v39 = vld [vmem:[%s1 + $0x38] sm:$0xff]
  %v40 = vld [vmem:[%s1 + $0x40] sm:$0xff]
  %v41 = vld [vmem:[%s1 + $0x48] sm:$0xff]
  %v42 = vld [vmem:[%s1 + $0x50] sm:$0xff]
  %v43 = vld [vmem:[%s1 + $0x58] sm:$0xff]
  %v44 = vld [vmem:[%s1 + $0x60] sm:$0xff]
  %v45 = vld [vmem:[%s1 + $0x68] sm:$0xff]
  %v46 = vld [vmem:[%s1 + $0x70] sm:$0xff]
  %v47 = vld [vmem:[%s1 + $0x78] sm:$0xff]
  %vm48 = vcmp.gt.f32.partialorder %v32, 0.0
  %vm49 = vcmp.gt.f32.partialorder %v33, 0.0
  %vm50 = vcmp.gt.f32.partialorder %v34, 0.0
  %vm51 = vcmp.gt.f32.partialorder %v35, 0.0
  %vm52 = vcmp.gt.f32.partialorder %v36, 0.0
  %vm53 = vcmp.gt.f32.partialorder %v37, 0.0
  %vm54 = vcmp.gt.f32.partialorder %v38, 0.0
  %vm55 = vcmp.gt.f32.partialorder %v39, 0.0
  %vm56 = vcmp.gt.f32.partialorder %v40, 0.0
  %vm57 = vcmp.gt.f32.partialorder %v41, 0.0
  %vm58 = vcmp.gt.f32.partialorder %v42, 0.0
  %vm59 = vcmp.gt.f32.partialorder %v43, 0.0
  %vm60 = vcmp.gt.f32.partialorder %v44, 0.0
  %vm61 = vcmp.gt.f32.partialorder %v45, 0.0
  %vm62 = vcmp.gt.f32.partialorder %v46, 0.0
  %vm63 = vcmp.gt.f32.partialorder %v47, 0.0
  %v64 = vsel %vm48, 1, 0
  %v65 = vsel %vm49, 1, 0
  %v66 = vsel %vm50, 1, 0
  %v67 = vsel %vm51, 1, 0
  %v68 = vsel %vm52, 1, 0
  %v69 = vsel %vm53, 1, 0
  %v70 = vsel %vm54, 1, 0
  %v71 = vsel %vm55, 1, 0
  %v72 = vsel %vm56, 1, 0
  %v73 = vsel %vm57, 1, 0
  %v74 = vsel %vm58, 1, 0
  %v75 = vsel %vm59, 1, 0
  %v76 = vsel %vm60, 1, 0
  %v77 = vsel %vm61, 1, 0
  %v78 = vsel %vm62, 1, 0
  %v79 = vsel %vm63, 1, 0
  %v80 = vcvt.s32.f32 %v64
  %v81 = vcvt.s32.f32 %v65
  %v82 = vcvt.s32.f32 %v66
  %v83 = vcvt.s32.f32 %v67
  %v84 = vcvt.s32.f32 %v68
  %v85 = vcvt.s32.f32 %v69
  %v86 = vcvt.s32.f32 %v70
  %v87 = vcvt.s32.f32 %v71
  %v88 = vcvt.s32.f32 %v72
  %v89 = vcvt.s32.f32 %v73
  %v90 = vcvt.s32.f32 %v74
  %v91 = vcvt.s32.f32 %v75
  %v92 = vcvt.s32.f32 %v76
  %v93 = vcvt.s32.f32 %v77
  %v94 = vcvt.s32.f32 %v78
  %v95 = vcvt.s32.f32 %v79
  %v96 = vld [vmem:[%s2] sm:$0xff]
  %v97 = vld [vmem:[%s2 + $0x8] sm:$0xff]
  %v98 = vld [vmem:[%s2 + $0x10] sm:$0xff]
  %v99 = vld [vmem:[%s2 + $0x18] sm:$0xff]
  %v100 = vld [vmem:[%s2 + $0x20] sm:$0xff]
  %v101 = vld [vmem:[%s2 + $0x28] sm:$0xff]
  %v102 = vld [vmem:[%s2 + $0x30] sm:$0xff]
  %v103 = vld [vmem:[%s2 + $0x38] sm:$0xff]
  %v104 = vld [vmem:[%s2 + $0x40] sm:$0xff]
  %v105 = vld [vmem:[%s2 + $0x48] sm:$0xff]
  %v106 = vld [vmem:[%s2 + $0x50] sm:$0xff]
  %v107 = vld [vmem:[%s2 + $0x58] sm:$0xff]
  %v108 = vld [vmem:[%s2 + $0x60] sm:$0xff]
  %v109 = vld [vmem:[%s2 + $0x68] sm:$0xff]
  %v110 = vld [vmem:[%s2 + $0x70] sm:$0xff]
  %v111 = vld [vmem:[%s2 + $0x78] sm:$0xff]
  %v112 = vld [vmem:[%s0] sm:$0xff]
  %v113 = vld [vmem:[%s0 + $0x8] sm:$0xff]
  %v114 = vld [vmem:[%s0 + $0x10] sm:$0xff]
  %v115 = vld [vmem:[%s0 + $0x18] sm:$0xff]
  %v116 = vld [vmem:[%s0 + $0x20] sm:$0xff]
  %v117 = vld [vmem:[%s0 + $0x28] sm:$0xff]
  %v118 = vld [vmem:[%s0 + $0x30] sm:$0xff]
  %v119 = vld [vmem:[%s0 + $0x38] sm:$0xff]
  %v120 = vld [vmem:[%s0 + $0x40] sm:$0xff]
  %v121 = vld [vmem:[%s0 + $0x48] sm:$0xff]
  %v122 = vld [vmem:[%s0 + $0x50] sm:$0xff]
  %v123 = vld [vmem:[%s0 + $0x58] sm:$0xff]
  %v124 = vld [vmem:[%s0 + $0x60] sm:$0xff]
  %v125 = vld [vmem:[%s0 + $0x68] sm:$0xff]
  %v126 = vld [vmem:[%s0 + $0x70] sm:$0xff]
  %v127 = vld [vmem:[%s0 + $0x78] sm:$0xff]
  %v128 = vld [vmem:[%s3] sm:$0xff]
  %v129 = vld [vmem:[%s3 + $0x8] sm:$0xff]
  %v130 = vld [vmem:[%s3 + $0x10] sm:$0xff]
  %v131 = vld [vmem:[%s3 + $0x18] sm:$0xff]
  %v132 = vld [vmem:[%s3 + $0x20] sm:$0xff]
  %v133 = vld [vmem:[%s3 + $0x28] sm:$0xff]
  %v134 = vld [vmem:[%s3 + $0x30] sm:$0xff]
  %v135 = vld [vmem:[%s3 + $0x38] sm:$0xff]
  %v136 = vld [vmem:[%s4] sm:$0xf]
  %vm137 = vcmask 523264
  %v139 = vsel %vm137, %v112, 0
  %v142 = vsel %vm137, %v113, 0
  %v145 = vsel %vm137, %v114, 0
  %v148 = vsel %vm137, %v115, 0
  %v151 = vsel %vm137, %v116, 0
  %v154 = vsel %vm137, %v117, 0
  %v157 = vsel %vm137, %v118, 0
  %v160 = vsel %vm137, %v119, 0
  %v163 = vsel %vm137, %v120, 0
  %v166 = vsel %vm137, %v121, 0
  %v169 = vsel %vm137, %v122, 0
  %v172 = vsel %vm137, %v123, 0
  %v175 = vsel %vm137, %v124, 0
  %v178 = vsel %vm137, %v125, 0
  %v181 = vsel %vm137, %v126, 0
  %v184 = vsel %vm137, %v127, 0
  %186 = vmatpush.msra.mxu0 0.0
  %187 = vmatpush.msra.mxu0 0.0
  %188 = vmatpush.msra.mxu0 0.0
  %189 = vmatpush.msra.mxu0 0.0
  %190 = vmatpush.msra.mxu0 0.0
  %191 = vmatpush.msra.mxu0 0.0
  %192 = vmatpush.msra.mxu0 0.0
  %193 = vmatpush.msra.mxu0 0.0
  %194 = vmatpush.msra.mxu0 %v135
  %195 = vmatpush.msra.mxu0 %v134
  %196 = vmatpush.msra.mxu0 %v133
  %197 = vmatpush.msra.mxu0 %v132
  %198 = vmatpush.msra.mxu0 %v131
  %199 = vmatpush.msra.mxu0 %v130
  %200 = vmatpush.msra.mxu0 %v129
  %201 = vmatpush.msra.mxu0 %v128
  %202 = vmatmul.f32.gmra.mxu0 %v139
  %v203 = vpop.f32.mrf.mxu0
  %v204 = vadd.f32 0.0, %v203
  %205 = vmatmul.f32.gmra.mxu0 %v142
  %v206 = vpop.f32.mrf.mxu0
  %v207 = vadd.f32 0.0, %v206
  %208 = vmatmul.f32.gmra.mxu0 %v145
  %v209 = vpop.f32.mrf.mxu0
  %v210 = vadd.f32 0.0, %v209
  %211 = vmatmul.f32.gmra.mxu0 %v148
  %v212 = vpop.f32.mrf.mxu0
  %v213 = vadd.f32 0.0, %v212
  %214 = vmatmul.f32.gmra.mxu0 %v151
  %v215 = vpop.f32.mrf.mxu0
  %v216 = vadd.f32 0.0, %v215
  %217 = vmatmul.f32.gmra.mxu0 %v154
  %v218 = vpop.f32.mrf.mxu0
  %v219 = vadd.f32 0.0, %v218
  %220 = vmatmul.f32.gmra.mxu0 %v157
  %v221 = vpop.f32.mrf.mxu0
  %v222 = vadd.f32 0.0, %v221
  %223 = vmatmul.f32.gmra.mxu0 %v160
  %v224 = vpop.f32.mrf.mxu0
  %v225 = vadd.f32 0.0, %v224
  %226 = vmatmul.f32.gmra.mxu0 %v163
  %v227 = vpop.f32.mrf.mxu0
  %v228 = vadd.f32 0.0, %v227
  %229 = vmatmul.f32.gmra.mxu0 %v166
  %v230 = vpop.f32.mrf.mxu0
  %v231 = vadd.f32 0.0, %v230
  %232 = vmatmul.f32.gmra.mxu0 %v169
  %v233 = vpop.f32.mrf.mxu0
  %v234 = vadd.f32 0.0, %v233
  %235 = vmatmul.f32.gmra.mxu0 %v172
  %v236 = vpop.f32.mrf.mxu0
  %v237 = vadd.f32 0.0, %v236
  %238 = vmatmul.f32.gmra.mxu0 %v175
  %v239 = vpop.f32.mrf.mxu0
  %v240 = vadd.f32 0.0, %v239
  %241 = vmatmul.f32.gmra.mxu0 %v178
  %v242 = vpop.f32.mrf.mxu0
  %v243 = vadd.f32 0.0, %v242
  %244 = vmatmul.f32.gmra.mxu0 %v181
  %v245 = vpop.f32.mrf.mxu0
  %v246 = vadd.f32 0.0, %v245
  %247 = vmatmul.f32.gmra.mxu0 %v184
  %v248 = vpop.f32.mrf.mxu0
  %v249 = vadd.f32 0.0, %v248
  %250 = vdwg.mxu0
  %v252 = vsel %vm137, %v136, 0
  %254 = vmatpush.xpose.msra.mxu0 %v184
  %255 = vmatpush.xpose.msra.mxu0 %v181
  %256 = vmatpush.xpose.msra.mxu0 %v178
  %257 = vmatpush.xpose.msra.mxu0 %v175
  %258 = vmatpush.xpose.msra.mxu0 %v172
  %259 = vmatpush.xpose.msra.mxu0 %v169
  %260 = vmatpush.xpose.msra.mxu0 %v166
  %261 = vmatpush.xpose.msra.mxu0 %v163
  %262 = vmatpush.xpose.msra.mxu0 %v160
  %263 = vmatpush.xpose.msra.mxu0 %v157
  %264 = vmatpush.xpose.msra.mxu0 %v154
  %265 = vmatpush.xpose.msra.mxu0 %v151
  %266 = vmatpush.xpose.msra.mxu0 %v148
  %267 = vmatpush.xpose.msra.mxu0 %v145
  %268 = vmatpush.xpose.msra.mxu0 %v142
  %269 = vmatpush.xpose.msra.mxu0 %v139
  %270 = vmatmul.f32.gmra.mxu0 %v252
  %v271 = vpop.f32.mrf.mxu0
  %v272 = vadd.f32 0.0, %v271
  %273 = vdwg.mxu0
  %v274 = vlaneseq
  %v275 = vand.u32 %v274, 127
  %277 = vset.pattern.permute.xlu0 64
  %278 = vperm.xlu0 %277, %v204
  %v279 = vpop.permute.xlu0 %278
  %282 = vset.pattern.permute.xlu0 64
  %283 = vperm.xlu0 %282, %v207
  %v284 = vpop.permute.xlu0 %283
  %287 = vset.pattern.permute.xlu0 64
  %288 = vperm.xlu0 %287, %v210
  %v289 = vpop.permute.xlu0 %288
  %292 = vset.pattern.permute.xlu0 64
  %293 = vperm.xlu0 %292, %v213
  %v294 = vpop.permute.xlu0 %293
  %297 = vset.pattern.permute.xlu0 64
  %298 = vperm.xlu0 %297, %v216
  %v299 = vpop.permute.xlu0 %298
  %302 = vset.pattern.permute.xlu0 64
  %303 = vperm.xlu0 %302, %v219
  %v304 = vpop.permute.xlu0 %303
  %307 = vset.pattern.permute.xlu0 64
  %308 = vperm.xlu0 %307, %v222
  %v309 = vpop.permute.xlu0 %308
  %312 = vset.pattern.permute.xlu0 64
  %313 = vperm.xlu0 %312, %v225
  %v314 = vpop.permute.xlu0 %313
  %317 = vset.pattern.permute.xlu0 64
  %318 = vperm.xlu0 %317, %v228
  %v319 = vpop.permute.xlu0 %318
  %322 = vset.pattern.permute.xlu0 64
  %323 = vperm.xlu0 %322, %v231
  %v324 = vpop.permute.xlu0 %323
  %327 = vset.pattern.permute.xlu0 64
  %328 = vperm.xlu0 %327, %v234
  %v329 = vpop.permute.xlu0 %328
  %332 = vset.pattern.permute.xlu0 64
  %333 = vperm.xlu0 %332, %v237
  %v334 = vpop.permute.xlu0 %333
  %337 = vset.pattern.permute.xlu0 64
  %338 = vperm.xlu0 %337, %v240
  %v339 = vpop.permute.xlu0 %338
  %342 = vset.pattern.permute.xlu0 64
  %343 = vperm.xlu0 %342, %v243
  %v344 = vpop.permute.xlu0 %343
  %347 = vset.pattern.permute.xlu0 64
  %348 = vperm.xlu0 %347, %v246
  %v349 = vpop.permute.xlu0 %348
  %352 = vset.pattern.permute.xlu0 64
  %353 = vperm.xlu0 %352, %v249
  %v354 = vpop.permute.xlu0 %353
  %v356 = vperm.slane %v272, 0
  %v357 = vadd.f32 %v279, %v356
  %v358 = vadd.f32 %v284, %v356
  %v359 = vadd.f32 %v289, %v356
  %v360 = vadd.f32 %v294, %v356
  %v361 = vadd.f32 %v299, %v356
  %v362 = vadd.f32 %v304, %v356
  %v363 = vadd.f32 %v309, %v356
  %v364 = vadd.f32 %v314, %v356
  %v365 = vadd.f32 %v319, %v356
  %v366 = vadd.f32 %v324, %v356
  %v367 = vadd.f32 %v329, %v356
  %v368 = vadd.f32 %v334, %v356
  %v369 = vadd.f32 %v339, %v356
  %v370 = vadd.f32 %v344, %v356
  %v371 = vadd.f32 %v349, %v356
  %v372 = vadd.f32 %v354, %v356
  %vm373 = vcmp.gt.f32.partialorder %v357, 0.0
  %vm374 = vcmp.gt.f32.partialorder %v358, 0.0
  %vm375 = vcmp.gt.f32.partialorder %v359, 0.0
  %vm376 = vcmp.gt.f32.partialorder %v360, 0.0
  %vm377 = vcmp.gt.f32.partialorder %v361, 0.0
  %vm378 = vcmp.gt.f32.partialorder %v362, 0.0
  %vm379 = vcmp.gt.f32.partialorder %v363, 0.0
  %vm380 = vcmp.gt.f32.partialorder %v364, 0.0
  %vm381 = vcmp.gt.f32.partialorder %v365, 0.0
  %vm382 = vcmp.gt.f32.partialorder %v366, 0.0
  %vm383 = vcmp.gt.f32.partialorder %v367, 0.0
  %vm384 = vcmp.gt.f32.partialorder %v368, 0.0
  %vm385 = vcmp.gt.f32.partialorder %v369, 0.0
  %vm386 = vcmp.gt.f32.partialorder %v370, 0.0
  %vm387 = vcmp.gt.f32.partialorder %v371, 0.0
  %vm388 = vcmp.gt.f32.partialorder %v372, 0.0
  %v389 = vmul.f32 %v357, 0.2
  %v390 = vmul.f32 %v358, 0.2
  %v391 = vmul.f32 %v359, 0.2
  %v392 = vmul.f32 %v360, 0.2
  %v393 = vmul.f32 %v361, 0.2
  %v394 = vmul.f32 %v362, 0.2
  %v395 = vmul.f32 %v363, 0.2
  %v396 = vmul.f32 %v364, 0.2
  %v397 = vmul.f32 %v365, 0.2
  %v398 = vmul.f32 %v366, 0.2
  %v399 = vmul.f32 %v367, 0.2
  %v400 = vmul.f32 %v368, 0.2
  %v401 = vmul.f32 %v369, 0.2
  %v402 = vmul.f32 %v370, 0.2
  %v403 = vmul.f32 %v371, 0.2
  %v404 = vmul.f32 %v372, 0.2
  %v405 = vsel %vm373, %v357, %v389
  %v406 = vsel %vm374, %v358, %v390
  %v407 = vsel %vm375, %v359, %v391
  %v408 = vsel %vm376, %v360, %v392
  %v409 = vsel %vm377, %v361, %v393
  %v410 = vsel %vm378, %v362, %v394
  %v411 = vsel %vm379, %v363, %v395
  %v412 = vsel %vm380, %v364, %v396
  %v413 = vsel %vm381, %v365, %v397
  %v414 = vsel %vm382, %v366, %v398
  %v415 = vsel %vm383, %v367, %v399
  %v416 = vsel %vm384, %v368, %v400
  %v417 = vsel %vm385, %v369, %v401
  %v418 = vsel %vm386, %v370, %v402
  %v419 = vsel %vm387, %v371, %v403
  %v420 = vsel %vm388, %v372, %v404
  %v421 = vsel %vm48, %v405, -1e+30
  %v422 = vsel %vm49, %v406, -1e+30
  %v423 = vsel %vm50, %v407, -1e+30
  %v424 = vsel %vm51, %v408, -1e+30
  %v425 = vsel %vm52, %v409, -1e+30
  %v426 = vsel %vm53, %v410, -1e+30
  %v427 = vsel %vm54, %v411, -1e+30
  %v428 = vsel %vm55, %v412, -1e+30
  %v429 = vsel %vm56, %v413, -1e+30
  %v430 = vsel %vm57, %v414, -1e+30
  %v431 = vsel %vm58, %v415, -1e+30
  %v432 = vsel %vm59, %v416, -1e+30
  %v433 = vsel %vm60, %v417, -1e+30
  %v434 = vsel %vm61, %v418, -1e+30
  %v435 = vsel %vm62, %v419, -1e+30
  %v436 = vsel %vm63, %v420, -1e+30
  %437 = vmax.xlane.f32.xlu0 %v421
  %v438 = vpop.xlane.xlu0 %437
  %439 = vmax.xlane.f32.xlu0 %v422
  %v440 = vpop.xlane.xlu0 %439
  %441 = vmax.xlane.f32.xlu0 %v423
  %v442 = vpop.xlane.xlu0 %441
  %443 = vmax.xlane.f32.xlu0 %v424
  %v444 = vpop.xlane.xlu0 %443
  %445 = vmax.xlane.f32.xlu0 %v425
  %v446 = vpop.xlane.xlu0 %445
  %447 = vmax.xlane.f32.xlu0 %v426
  %v448 = vpop.xlane.xlu0 %447
  %449 = vmax.xlane.f32.xlu0 %v427
  %v450 = vpop.xlane.xlu0 %449
  %451 = vmax.xlane.f32.xlu0 %v428
  %v452 = vpop.xlane.xlu0 %451
  %453 = vmax.xlane.f32.xlu0 %v429
  %v454 = vpop.xlane.xlu0 %453
  %455 = vmax.xlane.f32.xlu0 %v430
  %v456 = vpop.xlane.xlu0 %455
  %457 = vmax.xlane.f32.xlu0 %v431
  %v458 = vpop.xlane.xlu0 %457
  %459 = vmax.xlane.f32.xlu0 %v432
  %v460 = vpop.xlane.xlu0 %459
  %461 = vmax.xlane.f32.xlu0 %v433
  %v462 = vpop.xlane.xlu0 %461
  %463 = vmax.xlane.f32.xlu0 %v434
  %v464 = vpop.xlane.xlu0 %463
  %465 = vmax.xlane.f32.xlu0 %v435
  %v466 = vpop.xlane.xlu0 %465
  %467 = vmax.xlane.f32.xlu0 %v436
  %v468 = vpop.xlane.xlu0 %467
  %v469 = vsub.f32 %v421, %v438
  %v470 = vsub.f32 %v422, %v440
  %v471 = vsub.f32 %v423, %v442
  %v472 = vsub.f32 %v424, %v444
  %v473 = vsub.f32 %v425, %v446
  %v474 = vsub.f32 %v426, %v448
  %v475 = vsub.f32 %v427, %v450
  %v476 = vsub.f32 %v428, %v452
  %v477 = vsub.f32 %v429, %v454
  %v478 = vsub.f32 %v430, %v456
  %v479 = vsub.f32 %v431, %v458
  %v480 = vsub.f32 %v432, %v460
  %v481 = vsub.f32 %v433, %v462
  %v482 = vsub.f32 %v434, %v464
  %v483 = vsub.f32 %v435, %v466
  %v484 = vsub.f32 %v436, %v468
  %v485 = vmul.f32 %v469, 1.442695
  %v486 = vpow.pop %v485
  %v487 = vmul.f32 %v470, 1.442695
  %v488 = vpow.pop %v487
  %v489 = vmul.f32 %v471, 1.442695
  %v490 = vpow.pop %v489
  %v491 = vmul.f32 %v472, 1.442695
  %v492 = vpow.pop %v491
  %v493 = vmul.f32 %v473, 1.442695
  %v494 = vpow.pop %v493
  %v495 = vmul.f32 %v474, 1.442695
  %v496 = vpow.pop %v495
  %v497 = vmul.f32 %v475, 1.442695
  %v498 = vpow.pop %v497
  %v499 = vmul.f32 %v476, 1.442695
  %v500 = vpow.pop %v499
  %v501 = vmul.f32 %v477, 1.442695
  %v502 = vpow.pop %v501
  %v503 = vmul.f32 %v478, 1.442695
  %v504 = vpow.pop %v503
  %v505 = vmul.f32 %v479, 1.442695
  %v506 = vpow.pop %v505
  %v507 = vmul.f32 %v480, 1.442695
  %v508 = vpow.pop %v507
  %v509 = vmul.f32 %v481, 1.442695
  %v510 = vpow.pop %v509
  %v511 = vmul.f32 %v482, 1.442695
  %v512 = vpow.pop %v511
  %v513 = vmul.f32 %v483, 1.442695
  %v514 = vpow.pop %v513
  %v515 = vmul.f32 %v484, 1.442695
  %v516 = vpow.pop %v515
  %v517 = vmul.f32 %v486, %v80
  %v518 = vmul.f32 %v488, %v81
  %v519 = vmul.f32 %v490, %v82
  %v520 = vmul.f32 %v492, %v83
  %v521 = vmul.f32 %v494, %v84
  %v522 = vmul.f32 %v496, %v85
  %v523 = vmul.f32 %v498, %v86
  %v524 = vmul.f32 %v500, %v87
  %v525 = vmul.f32 %v502, %v88
  %v526 = vmul.f32 %v504, %v89
  %v527 = vmul.f32 %v506, %v90
  %v528 = vmul.f32 %v508, %v91
  %v529 = vmul.f32 %v510, %v92
  %v530 = vmul.f32 %v512, %v93
  %v531 = vmul.f32 %v514, %v94
  %v532 = vmul.f32 %v516, %v95
  %533 = vadd.xlane.f32.xlu0 %v517
  %v534 = vpop.xlane.xlu0 %533
  %535 = vadd.xlane.f32.xlu0 %v518
  %v536 = vpop.xlane.xlu0 %535
  %537 = vadd.xlane.f32.xlu0 %v519
  %v538 = vpop.xlane.xlu0 %537
  %539 = vadd.xlane.f32.xlu0 %v520
  %v540 = vpop.xlane.xlu0 %539
  %541 = vadd.xlane.f32.xlu0 %v521
  %v542 = vpop.xlane.xlu0 %541
  %543 = vadd.xlane.f32.xlu0 %v522
  %v544 = vpop.xlane.xlu0 %543
  %545 = vadd.xlane.f32.xlu0 %v523
  %v546 = vpop.xlane.xlu0 %545
  %547 = vadd.xlane.f32.xlu0 %v524
  %v548 = vpop.xlane.xlu0 %547
  %549 = vadd.xlane.f32.xlu0 %v525
  %v550 = vpop.xlane.xlu0 %549
  %551 = vadd.xlane.f32.xlu0 %v526
  %v552 = vpop.xlane.xlu0 %551
  %553 = vadd.xlane.f32.xlu0 %v527
  %v554 = vpop.xlane.xlu0 %553
  %555 = vadd.xlane.f32.xlu0 %v528
  %v556 = vpop.xlane.xlu0 %555
  %557 = vadd.xlane.f32.xlu0 %v529
  %v558 = vpop.xlane.xlu0 %557
  %559 = vadd.xlane.f32.xlu0 %v530
  %v560 = vpop.xlane.xlu0 %559
  %561 = vadd.xlane.f32.xlu0 %v531
  %v562 = vpop.xlane.xlu0 %561
  %563 = vadd.xlane.f32.xlu0 %v532
  %v564 = vpop.xlane.xlu0 %563
  %v565 = vmax.f32 %v534, 1e-30
  %v566 = vmax.f32 %v536, 1e-30
  %v567 = vmax.f32 %v538, 1e-30
  %v568 = vmax.f32 %v540, 1e-30
  %v569 = vmax.f32 %v542, 1e-30
  %v570 = vmax.f32 %v544, 1e-30
  %v571 = vmax.f32 %v546, 1e-30
  %v572 = vmax.f32 %v548, 1e-30
  %v573 = vmax.f32 %v550, 1e-30
  %v574 = vmax.f32 %v552, 1e-30
  %v575 = vmax.f32 %v554, 1e-30
  %v576 = vmax.f32 %v556, 1e-30
  %v577 = vmax.f32 %v558, 1e-30
  %v578 = vmax.f32 %v560, 1e-30
  %v579 = vmax.f32 %v562, 1e-30
  %v580 = vmax.f32 %v564, 1e-30
  %v581 = vrcp.pop %v565
  %v582 = vrcp.pop %v566
  %v583 = vrcp.pop %v567
  %v584 = vrcp.pop %v568
  %v585 = vrcp.pop %v569
  %v586 = vrcp.pop %v570
  %v587 = vrcp.pop %v571
  %v588 = vrcp.pop %v572
  %v589 = vrcp.pop %v573
  %v590 = vrcp.pop %v574
  %v591 = vrcp.pop %v575
  %v592 = vrcp.pop %v576
  %v593 = vrcp.pop %v577
  %v594 = vrcp.pop %v578
  %v595 = vrcp.pop %v579
  %v596 = vrcp.pop %v580
  %v597 = vmul.f32 %v517, %v581
  %v598 = vmul.f32 %v518, %v582
  %v599 = vmul.f32 %v519, %v583
  %v600 = vmul.f32 %v520, %v584
  %v601 = vmul.f32 %v521, %v585
  %v602 = vmul.f32 %v522, %v586
  %v603 = vmul.f32 %v523, %v587
  %v604 = vmul.f32 %v524, %v588
  %v605 = vmul.f32 %v525, %v589
  %v606 = vmul.f32 %v526, %v590
  %v607 = vmul.f32 %v527, %v591
  %v608 = vmul.f32 %v528, %v592
  %v609 = vmul.f32 %v529, %v593
  %v610 = vmul.f32 %v530, %v594
  %v611 = vmul.f32 %v531, %v595
  %v612 = vmul.f32 %v532, %v596
  %613 = vmatpush.msra.mxu0 %v249
  %614 = vmatpush.msra.mxu0 %v246
  %615 = vmatpush.msra.mxu0 %v243
  %616 = vmatpush.msra.mxu0 %v240
  %617 = vmatpush.msra.mxu0 %v237
  %618 = vmatpush.msra.mxu0 %v234
  %619 = vmatpush.msra.mxu0 %v231
  %620 = vmatpush.msra.mxu0 %v228
  %621 = vmatpush.msra.mxu0 %v225
  %622 = vmatpush.msra.mxu0 %v222
  %623 = vmatpush.msra.mxu0 %v219
  %624 = vmatpush.msra.mxu0 %v216
  %625 = vmatpush.msra.mxu0 %v213
  %626 = vmatpush.msra.mxu0 %v210
  %627 = vmatpush.msra.mxu0 %v207
  %628 = vmatpush.msra.mxu0 %v204
  %629 = vmatmul.f32.gmra.mxu0 %v597
  %v630 = vpop.f32.mrf.mxu0
  %v631 = vadd.f32 0.0, %v630
  %632 = vmatmul.f32.gmra.mxu0 %v598
  %v633 = vpop.f32.mrf.mxu0
  %v634 = vadd.f32 0.0, %v633
  %635 = vmatmul.f32.gmra.mxu0 %v599
  %v636 = vpop.f32.mrf.mxu0
  %v637 = vadd.f32 0.0, %v636
  %638 = vmatmul.f32.gmra.mxu0 %v600
  %v639 = vpop.f32.mrf.mxu0
  %v640 = vadd.f32 0.0, %v639
  %641 = vmatmul.f32.gmra.mxu0 %v601
  %v642 = vpop.f32.mrf.mxu0
  %v643 = vadd.f32 0.0, %v642
  %644 = vmatmul.f32.gmra.mxu0 %v602
  %v645 = vpop.f32.mrf.mxu0
  %v646 = vadd.f32 0.0, %v645
  %647 = vmatmul.f32.gmra.mxu0 %v603
  %v648 = vpop.f32.mrf.mxu0
  %v649 = vadd.f32 0.0, %v648
  %650 = vmatmul.f32.gmra.mxu0 %v604
  %v651 = vpop.f32.mrf.mxu0
  %v652 = vadd.f32 0.0, %v651
  %653 = vmatmul.f32.gmra.mxu0 %v605
  %v654 = vpop.f32.mrf.mxu0
  %v655 = vadd.f32 0.0, %v654
  %656 = vmatmul.f32.gmra.mxu0 %v606
  %v657 = vpop.f32.mrf.mxu0
  %v658 = vadd.f32 0.0, %v657
  %659 = vmatmul.f32.gmra.mxu0 %v607
  %v660 = vpop.f32.mrf.mxu0
  %v661 = vadd.f32 0.0, %v660
  %662 = vmatmul.f32.gmra.mxu0 %v608
  %v663 = vpop.f32.mrf.mxu0
  %v664 = vadd.f32 0.0, %v663
  %665 = vmatmul.f32.gmra.mxu0 %v609
  %v666 = vpop.f32.mrf.mxu0
  %v667 = vadd.f32 0.0, %v666
  %668 = vmatmul.f32.gmra.mxu0 %v610
  %v669 = vpop.f32.mrf.mxu0
  %v670 = vadd.f32 0.0, %v669
  %671 = vmatmul.f32.gmra.mxu0 %v611
  %v672 = vpop.f32.mrf.mxu0
  %v673 = vadd.f32 0.0, %v672
  %674 = vmatmul.f32.gmra.mxu0 %v612
  %v675 = vpop.f32.mrf.mxu0
  %v676 = vadd.f32 0.0, %v675
  %677 = vdwg.mxu0
  %vm678 = vcmp.ge.s32.totalorder %v275, 0
  %vm679 = vcmp.lt.s32.totalorder %v275, 16
  %vm680 = vmand %vm678, %vm679
  %v681 = vsel %vm680, 1, 0
  %v682 = vcvt.s32.f32 %v681
  %v683 = vmul.f32 %v631, %v682
  %v684 = vmul.f32 %v634, %v682
  %v685 = vmul.f32 %v637, %v682
  %v686 = vmul.f32 %v640, %v682
  %v687 = vmul.f32 %v643, %v682
  %v688 = vmul.f32 %v646, %v682
  %v689 = vmul.f32 %v649, %v682
  %v690 = vmul.f32 %v652, %v682
  %v691 = vmul.f32 %v655, %v682
  %v692 = vmul.f32 %v658, %v682
  %v693 = vmul.f32 %v661, %v682
  %v694 = vmul.f32 %v664, %v682
  %v695 = vmul.f32 %v667, %v682
  %v696 = vmul.f32 %v670, %v682
  %v697 = vmul.f32 %v673, %v682
  %v698 = vmul.f32 %v676, %v682
  %v699 = vadd.f32 %v683, 0.0
  %v700 = vadd.f32 %v684, 0.0
  %v701 = vadd.f32 %v685, 0.0
  %v702 = vadd.f32 %v686, 0.0
  %v703 = vadd.f32 %v687, 0.0
  %v704 = vadd.f32 %v688, 0.0
  %v705 = vadd.f32 %v689, 0.0
  %v706 = vadd.f32 %v690, 0.0
  %v707 = vadd.f32 %v691, 0.0
  %v708 = vadd.f32 %v692, 0.0
  %v709 = vadd.f32 %v693, 0.0
  %v710 = vadd.f32 %v694, 0.0
  %v711 = vadd.f32 %v695, 0.0
  %v712 = vadd.f32 %v696, 0.0
  %v713 = vadd.f32 %v697, 0.0
  %v714 = vadd.f32 %v698, 0.0
  %715 = vset.pattern.permute.xlu0 65
  %716 = vperm.xlu0 %715, %v204
  %v717 = vpop.permute.xlu0 %716
  %719 = vset.pattern.permute.xlu0 65
  %720 = vperm.xlu0 %719, %v207
  %v721 = vpop.permute.xlu0 %720
  %723 = vset.pattern.permute.xlu0 65
  %724 = vperm.xlu0 %723, %v210
  %v725 = vpop.permute.xlu0 %724
  %727 = vset.pattern.permute.xlu0 65
  %728 = vperm.xlu0 %727, %v213
  %v729 = vpop.permute.xlu0 %728
  %731 = vset.pattern.permute.xlu0 65
  %732 = vperm.xlu0 %731, %v216
  %v733 = vpop.permute.xlu0 %732
  %735 = vset.pattern.permute.xlu0 65
  %736 = vperm.xlu0 %735, %v219
  %v737 = vpop.permute.xlu0 %736
  %739 = vset.pattern.permute.xlu0 65
  %740 = vperm.xlu0 %739, %v222
  %v741 = vpop.permute.xlu0 %740
  %743 = vset.pattern.permute.xlu0 65
  %744 = vperm.xlu0 %743, %v225
  %v745 = vpop.permute.xlu0 %744
  %747 = vset.pattern.permute.xlu0 65
  %748 = vperm.xlu0 %747, %v228
  %v749 = vpop.permute.xlu0 %748
  %751 = vset.pattern.permute.xlu0 65
  %752 = vperm.xlu0 %751, %v231
  %v753 = vpop.permute.xlu0 %752
  %755 = vset.pattern.permute.xlu0 65
  %756 = vperm.xlu0 %755, %v234
  %v757 = vpop.permute.xlu0 %756
  %759 = vset.pattern.permute.xlu0 65
  %760 = vperm.xlu0 %759, %v237
  %v761 = vpop.permute.xlu0 %760
  %763 = vset.pattern.permute.xlu0 65
  %764 = vperm.xlu0 %763, %v240
  %v765 = vpop.permute.xlu0 %764
  %767 = vset.pattern.permute.xlu0 65
  %768 = vperm.xlu0 %767, %v243
  %v769 = vpop.permute.xlu0 %768
  %771 = vset.pattern.permute.xlu0 65
  %772 = vperm.xlu0 %771, %v246
  %v773 = vpop.permute.xlu0 %772
  %775 = vset.pattern.permute.xlu0 65
  %776 = vperm.xlu0 %775, %v249
  %v777 = vpop.permute.xlu0 %776
  %v779 = vperm.slane %v272, 1
  %v780 = vadd.f32 %v717, %v779
  %v781 = vadd.f32 %v721, %v779
  %v782 = vadd.f32 %v725, %v779
  %v783 = vadd.f32 %v729, %v779
  %v784 = vadd.f32 %v733, %v779
  %v785 = vadd.f32 %v737, %v779
  %v786 = vadd.f32 %v741, %v779
  %v787 = vadd.f32 %v745, %v779
  %v788 = vadd.f32 %v749, %v779
  %v789 = vadd.f32 %v753, %v779
  %v790 = vadd.f32 %v757, %v779
  %v791 = vadd.f32 %v761, %v779
  %v792 = vadd.f32 %v765, %v779
  %v793 = vadd.f32 %v769, %v779
  %v794 = vadd.f32 %v773, %v779
  %v795 = vadd.f32 %v777, %v779
  %vm796 = vcmp.gt.f32.partialorder %v780, 0.0
  %vm797 = vcmp.gt.f32.partialorder %v781, 0.0
  %vm798 = vcmp.gt.f32.partialorder %v782, 0.0
  %vm799 = vcmp.gt.f32.partialorder %v783, 0.0
  %vm800 = vcmp.gt.f32.partialorder %v784, 0.0
  %vm801 = vcmp.gt.f32.partialorder %v785, 0.0
  %vm802 = vcmp.gt.f32.partialorder %v786, 0.0
  %vm803 = vcmp.gt.f32.partialorder %v787, 0.0
  %vm804 = vcmp.gt.f32.partialorder %v788, 0.0
  %vm805 = vcmp.gt.f32.partialorder %v789, 0.0
  %vm806 = vcmp.gt.f32.partialorder %v790, 0.0
  %vm807 = vcmp.gt.f32.partialorder %v791, 0.0
  %vm808 = vcmp.gt.f32.partialorder %v792, 0.0
  %vm809 = vcmp.gt.f32.partialorder %v793, 0.0
  %vm810 = vcmp.gt.f32.partialorder %v794, 0.0
  %vm811 = vcmp.gt.f32.partialorder %v795, 0.0
  %v812 = vmul.f32 %v780, 0.2
  %v813 = vmul.f32 %v781, 0.2
  %v814 = vmul.f32 %v782, 0.2
  %v815 = vmul.f32 %v783, 0.2
  %v816 = vmul.f32 %v784, 0.2
  %v817 = vmul.f32 %v785, 0.2
  %v818 = vmul.f32 %v786, 0.2
  %v819 = vmul.f32 %v787, 0.2
  %v820 = vmul.f32 %v788, 0.2
  %v821 = vmul.f32 %v789, 0.2
  %v822 = vmul.f32 %v790, 0.2
  %v823 = vmul.f32 %v791, 0.2
  %v824 = vmul.f32 %v792, 0.2
  %v825 = vmul.f32 %v793, 0.2
  %v826 = vmul.f32 %v794, 0.2
  %v827 = vmul.f32 %v795, 0.2
  %v828 = vsel %vm796, %v780, %v812
  %v829 = vsel %vm797, %v781, %v813
  %v830 = vsel %vm798, %v782, %v814
  %v831 = vsel %vm799, %v783, %v815
  %v832 = vsel %vm800, %v784, %v816
  %v833 = vsel %vm801, %v785, %v817
  %v834 = vsel %vm802, %v786, %v818
  %v835 = vsel %vm803, %v787, %v819
  %v836 = vsel %vm804, %v788, %v820
  %v837 = vsel %vm805, %v789, %v821
  %v838 = vsel %vm806, %v790, %v822
  %v839 = vsel %vm807, %v791, %v823
  %v840 = vsel %vm808, %v792, %v824
  %v841 = vsel %vm809, %v793, %v825
  %v842 = vsel %vm810, %v794, %v826
  %v843 = vsel %vm811, %v795, %v827
  %v844 = vsel %vm48, %v828, -1e+30
  %v845 = vsel %vm49, %v829, -1e+30
  %v846 = vsel %vm50, %v830, -1e+30
  %v847 = vsel %vm51, %v831, -1e+30
  %v848 = vsel %vm52, %v832, -1e+30
  %v849 = vsel %vm53, %v833, -1e+30
  %v850 = vsel %vm54, %v834, -1e+30
  %v851 = vsel %vm55, %v835, -1e+30
  %v852 = vsel %vm56, %v836, -1e+30
  %v853 = vsel %vm57, %v837, -1e+30
  %v854 = vsel %vm58, %v838, -1e+30
  %v855 = vsel %vm59, %v839, -1e+30
  %v856 = vsel %vm60, %v840, -1e+30
  %v857 = vsel %vm61, %v841, -1e+30
  %v858 = vsel %vm62, %v842, -1e+30
  %v859 = vsel %vm63, %v843, -1e+30
  %860 = vmax.xlane.f32.xlu0 %v844
  %v861 = vpop.xlane.xlu0 %860
  %862 = vmax.xlane.f32.xlu0 %v845
  %v863 = vpop.xlane.xlu0 %862
  %864 = vmax.xlane.f32.xlu0 %v846
  %v865 = vpop.xlane.xlu0 %864
  %866 = vmax.xlane.f32.xlu0 %v847
  %v867 = vpop.xlane.xlu0 %866
  %868 = vmax.xlane.f32.xlu0 %v848
  %v869 = vpop.xlane.xlu0 %868
  %870 = vmax.xlane.f32.xlu0 %v849
  %v871 = vpop.xlane.xlu0 %870
  %872 = vmax.xlane.f32.xlu0 %v850
  %v873 = vpop.xlane.xlu0 %872
  %874 = vmax.xlane.f32.xlu0 %v851
  %v875 = vpop.xlane.xlu0 %874
  %876 = vmax.xlane.f32.xlu0 %v852
  %v877 = vpop.xlane.xlu0 %876
  %878 = vmax.xlane.f32.xlu0 %v853
  %v879 = vpop.xlane.xlu0 %878
  %880 = vmax.xlane.f32.xlu0 %v854
  %v881 = vpop.xlane.xlu0 %880
  %882 = vmax.xlane.f32.xlu0 %v855
  %v883 = vpop.xlane.xlu0 %882
  %884 = vmax.xlane.f32.xlu0 %v856
  %v885 = vpop.xlane.xlu0 %884
  %886 = vmax.xlane.f32.xlu0 %v857
  %v887 = vpop.xlane.xlu0 %886
  %888 = vmax.xlane.f32.xlu0 %v858
  %v889 = vpop.xlane.xlu0 %888
  %890 = vmax.xlane.f32.xlu0 %v859
  %v891 = vpop.xlane.xlu0 %890
  %v892 = vsub.f32 %v844, %v861
  %v893 = vsub.f32 %v845, %v863
  %v894 = vsub.f32 %v846, %v865
  %v895 = vsub.f32 %v847, %v867
  %v896 = vsub.f32 %v848, %v869
  %v897 = vsub.f32 %v849, %v871
  %v898 = vsub.f32 %v850, %v873
  %v899 = vsub.f32 %v851, %v875
  %v900 = vsub.f32 %v852, %v877
  %v901 = vsub.f32 %v853, %v879
  %v902 = vsub.f32 %v854, %v881
  %v903 = vsub.f32 %v855, %v883
  %v904 = vsub.f32 %v856, %v885
  %v905 = vsub.f32 %v857, %v887
  %v906 = vsub.f32 %v858, %v889
  %v907 = vsub.f32 %v859, %v891
  %v908 = vmul.f32 %v892, 1.442695
  %v909 = vpow.pop %v908
  %v910 = vmul.f32 %v893, 1.442695
  %v911 = vpow.pop %v910
  %v912 = vmul.f32 %v894, 1.442695
  %v913 = vpow.pop %v912
  %v914 = vmul.f32 %v895, 1.442695
  %v915 = vpow.pop %v914
  %v916 = vmul.f32 %v896, 1.442695
  %v917 = vpow.pop %v916
  %v918 = vmul.f32 %v897, 1.442695
  %v919 = vpow.pop %v918
  %v920 = vmul.f32 %v898, 1.442695
  %v921 = vpow.pop %v920
  %v922 = vmul.f32 %v899, 1.442695
  %v923 = vpow.pop %v922
  %v924 = vmul.f32 %v900, 1.442695
  %v925 = vpow.pop %v924
  %v926 = vmul.f32 %v901, 1.442695
  %v927 = vpow.pop %v926
  %v928 = vmul.f32 %v902, 1.442695
  %v929 = vpow.pop %v928
  %v930 = vmul.f32 %v903, 1.442695
  %v931 = vpow.pop %v930
  %v932 = vmul.f32 %v904, 1.442695
  %v933 = vpow.pop %v932
  %v934 = vmul.f32 %v905, 1.442695
  %v935 = vpow.pop %v934
  %v936 = vmul.f32 %v906, 1.442695
  %v937 = vpow.pop %v936
  %v938 = vmul.f32 %v907, 1.442695
  %v939 = vpow.pop %v938
  %v940 = vmul.f32 %v909, %v80
  %v941 = vmul.f32 %v911, %v81
  %v942 = vmul.f32 %v913, %v82
  %v943 = vmul.f32 %v915, %v83
  %v944 = vmul.f32 %v917, %v84
  %v945 = vmul.f32 %v919, %v85
  %v946 = vmul.f32 %v921, %v86
  %v947 = vmul.f32 %v923, %v87
  %v948 = vmul.f32 %v925, %v88
  %v949 = vmul.f32 %v927, %v89
  %v950 = vmul.f32 %v929, %v90
  %v951 = vmul.f32 %v931, %v91
  %v952 = vmul.f32 %v933, %v92
  %v953 = vmul.f32 %v935, %v93
  %v954 = vmul.f32 %v937, %v94
  %v955 = vmul.f32 %v939, %v95
  %956 = vadd.xlane.f32.xlu0 %v940
  %v957 = vpop.xlane.xlu0 %956
  %958 = vadd.xlane.f32.xlu0 %v941
  %v959 = vpop.xlane.xlu0 %958
  %960 = vadd.xlane.f32.xlu0 %v942
  %v961 = vpop.xlane.xlu0 %960
  %962 = vadd.xlane.f32.xlu0 %v943
  %v963 = vpop.xlane.xlu0 %962
  %964 = vadd.xlane.f32.xlu0 %v944
  %v965 = vpop.xlane.xlu0 %964
  %966 = vadd.xlane.f32.xlu0 %v945
  %v967 = vpop.xlane.xlu0 %966
  %968 = vadd.xlane.f32.xlu0 %v946
  %v969 = vpop.xlane.xlu0 %968
  %970 = vadd.xlane.f32.xlu0 %v947
  %v971 = vpop.xlane.xlu0 %970
  %972 = vadd.xlane.f32.xlu0 %v948
  %v973 = vpop.xlane.xlu0 %972
  %974 = vadd.xlane.f32.xlu0 %v949
  %v975 = vpop.xlane.xlu0 %974
  %976 = vadd.xlane.f32.xlu0 %v950
  %v977 = vpop.xlane.xlu0 %976
  %978 = vadd.xlane.f32.xlu0 %v951
  %v979 = vpop.xlane.xlu0 %978
  %980 = vadd.xlane.f32.xlu0 %v952
  %v981 = vpop.xlane.xlu0 %980
  %982 = vadd.xlane.f32.xlu0 %v953
  %v983 = vpop.xlane.xlu0 %982
  %984 = vadd.xlane.f32.xlu0 %v954
  %v985 = vpop.xlane.xlu0 %984
  %986 = vadd.xlane.f32.xlu0 %v955
  %v987 = vpop.xlane.xlu0 %986
  %v988 = vmax.f32 %v957, 1e-30
  %v989 = vmax.f32 %v959, 1e-30
  %v990 = vmax.f32 %v961, 1e-30
  %v991 = vmax.f32 %v963, 1e-30
  %v992 = vmax.f32 %v965, 1e-30
  %v993 = vmax.f32 %v967, 1e-30
  %v994 = vmax.f32 %v969, 1e-30
  %v995 = vmax.f32 %v971, 1e-30
  %v996 = vmax.f32 %v973, 1e-30
  %v997 = vmax.f32 %v975, 1e-30
  %v998 = vmax.f32 %v977, 1e-30
  %v999 = vmax.f32 %v979, 1e-30
  %v1000 = vmax.f32 %v981, 1e-30
  %v1001 = vmax.f32 %v983, 1e-30
  %v1002 = vmax.f32 %v985, 1e-30
  %v1003 = vmax.f32 %v987, 1e-30
  %v1004 = vrcp.pop %v988
  %v1005 = vrcp.pop %v989
  %v1006 = vrcp.pop %v990
  %v1007 = vrcp.pop %v991
  %v1008 = vrcp.pop %v992
  %v1009 = vrcp.pop %v993
  %v1010 = vrcp.pop %v994
  %v1011 = vrcp.pop %v995
  %v1012 = vrcp.pop %v996
  %v1013 = vrcp.pop %v997
  %v1014 = vrcp.pop %v998
  %v1015 = vrcp.pop %v999
  %v1016 = vrcp.pop %v1000
  %v1017 = vrcp.pop %v1001
  %v1018 = vrcp.pop %v1002
  %v1019 = vrcp.pop %v1003
  %v1020 = vmul.f32 %v940, %v1004
  %v1021 = vmul.f32 %v941, %v1005
  %v1022 = vmul.f32 %v942, %v1006
  %v1023 = vmul.f32 %v943, %v1007
  %v1024 = vmul.f32 %v944, %v1008
  %v1025 = vmul.f32 %v945, %v1009
  %v1026 = vmul.f32 %v946, %v1010
  %v1027 = vmul.f32 %v947, %v1011
  %v1028 = vmul.f32 %v948, %v1012
  %v1029 = vmul.f32 %v949, %v1013
  %v1030 = vmul.f32 %v950, %v1014
  %v1031 = vmul.f32 %v951, %v1015
  %v1032 = vmul.f32 %v952, %v1016
  %v1033 = vmul.f32 %v953, %v1017
  %v1034 = vmul.f32 %v954, %v1018
  %v1035 = vmul.f32 %v955, %v1019
  %1036 = vmatpush.msra.mxu0 %v249
  %1037 = vmatpush.msra.mxu0 %v246
  %1038 = vmatpush.msra.mxu0 %v243
  %1039 = vmatpush.msra.mxu0 %v240
  %1040 = vmatpush.msra.mxu0 %v237
  %1041 = vmatpush.msra.mxu0 %v234
  %1042 = vmatpush.msra.mxu0 %v231
  %1043 = vmatpush.msra.mxu0 %v228
  %1044 = vmatpush.msra.mxu0 %v225
  %1045 = vmatpush.msra.mxu0 %v222
  %1046 = vmatpush.msra.mxu0 %v219
  %1047 = vmatpush.msra.mxu0 %v216
  %1048 = vmatpush.msra.mxu0 %v213
  %1049 = vmatpush.msra.mxu0 %v210
  %1050 = vmatpush.msra.mxu0 %v207
  %1051 = vmatpush.msra.mxu0 %v204
  %1052 = vmatmul.f32.gmra.mxu0 %v1020
  %v1053 = vpop.f32.mrf.mxu0
  %v1054 = vadd.f32 0.0, %v1053
  %1055 = vmatmul.f32.gmra.mxu0 %v1021
  %v1056 = vpop.f32.mrf.mxu0
  %v1057 = vadd.f32 0.0, %v1056
  %1058 = vmatmul.f32.gmra.mxu0 %v1022
  %v1059 = vpop.f32.mrf.mxu0
  %v1060 = vadd.f32 0.0, %v1059
  %1061 = vmatmul.f32.gmra.mxu0 %v1023
  %v1062 = vpop.f32.mrf.mxu0
  %v1063 = vadd.f32 0.0, %v1062
  %1064 = vmatmul.f32.gmra.mxu0 %v1024
  %v1065 = vpop.f32.mrf.mxu0
  %v1066 = vadd.f32 0.0, %v1065
  %1067 = vmatmul.f32.gmra.mxu0 %v1025
  %v1068 = vpop.f32.mrf.mxu0
  %v1069 = vadd.f32 0.0, %v1068
  %1070 = vmatmul.f32.gmra.mxu0 %v1026
  %v1071 = vpop.f32.mrf.mxu0
  %v1072 = vadd.f32 0.0, %v1071
  %1073 = vmatmul.f32.gmra.mxu0 %v1027
  %v1074 = vpop.f32.mrf.mxu0
  %v1075 = vadd.f32 0.0, %v1074
  %1076 = vmatmul.f32.gmra.mxu0 %v1028
  %v1077 = vpop.f32.mrf.mxu0
  %v1078 = vadd.f32 0.0, %v1077
  %1079 = vmatmul.f32.gmra.mxu0 %v1029
  %v1080 = vpop.f32.mrf.mxu0
  %v1081 = vadd.f32 0.0, %v1080
  %1082 = vmatmul.f32.gmra.mxu0 %v1030
  %v1083 = vpop.f32.mrf.mxu0
  %v1084 = vadd.f32 0.0, %v1083
  %1085 = vmatmul.f32.gmra.mxu0 %v1031
  %v1086 = vpop.f32.mrf.mxu0
  %v1087 = vadd.f32 0.0, %v1086
  %1088 = vmatmul.f32.gmra.mxu0 %v1032
  %v1089 = vpop.f32.mrf.mxu0
  %v1090 = vadd.f32 0.0, %v1089
  %1091 = vmatmul.f32.gmra.mxu0 %v1033
  %v1092 = vpop.f32.mrf.mxu0
  %v1093 = vadd.f32 0.0, %v1092
  %1094 = vmatmul.f32.gmra.mxu0 %v1034
  %v1095 = vpop.f32.mrf.mxu0
  %v1096 = vadd.f32 0.0, %v1095
  %1097 = vmatmul.f32.gmra.mxu0 %v1035
  %v1098 = vpop.f32.mrf.mxu0
  %v1099 = vadd.f32 0.0, %v1098
  %1100 = vdwg.mxu0
  %vm1101 = vcmp.ge.s32.totalorder %v275, 16
  %vm1102 = vcmp.lt.s32.totalorder %v275, 32
  %vm1103 = vmand %vm1101, %vm1102
  %v1104 = vsel %vm1103, 1, 0
  %v1105 = vcvt.s32.f32 %v1104
  %v1106 = vmul.f32 %v1054, %v1105
  %v1107 = vmul.f32 %v1057, %v1105
  %v1108 = vmul.f32 %v1060, %v1105
  %v1109 = vmul.f32 %v1063, %v1105
  %v1110 = vmul.f32 %v1066, %v1105
  %v1111 = vmul.f32 %v1069, %v1105
  %v1112 = vmul.f32 %v1072, %v1105
  %v1113 = vmul.f32 %v1075, %v1105
  %v1114 = vmul.f32 %v1078, %v1105
  %v1115 = vmul.f32 %v1081, %v1105
  %v1116 = vmul.f32 %v1084, %v1105
  %v1117 = vmul.f32 %v1087, %v1105
  %v1118 = vmul.f32 %v1090, %v1105
  %v1119 = vmul.f32 %v1093, %v1105
  %v1120 = vmul.f32 %v1096, %v1105
  %v1121 = vmul.f32 %v1099, %v1105
  %v1122 = vadd.f32 %v699, %v1106
  %v1123 = vadd.f32 %v700, %v1107
  %v1124 = vadd.f32 %v701, %v1108
  %v1125 = vadd.f32 %v702, %v1109
  %v1126 = vadd.f32 %v703, %v1110
  %v1127 = vadd.f32 %v704, %v1111
  %v1128 = vadd.f32 %v705, %v1112
  %v1129 = vadd.f32 %v706, %v1113
  %v1130 = vadd.f32 %v707, %v1114
  %v1131 = vadd.f32 %v708, %v1115
  %v1132 = vadd.f32 %v709, %v1116
  %v1133 = vadd.f32 %v710, %v1117
  %v1134 = vadd.f32 %v711, %v1118
  %v1135 = vadd.f32 %v712, %v1119
  %v1136 = vadd.f32 %v713, %v1120
  %v1137 = vadd.f32 %v714, %v1121
  %1138 = vset.pattern.permute.xlu0 66
  %1139 = vperm.xlu0 %1138, %v204
  %v1140 = vpop.permute.xlu0 %1139
  %1142 = vset.pattern.permute.xlu0 66
  %1143 = vperm.xlu0 %1142, %v207
  %v1144 = vpop.permute.xlu0 %1143
  %1146 = vset.pattern.permute.xlu0 66
  %1147 = vperm.xlu0 %1146, %v210
  %v1148 = vpop.permute.xlu0 %1147
  %1150 = vset.pattern.permute.xlu0 66
  %1151 = vperm.xlu0 %1150, %v213
  %v1152 = vpop.permute.xlu0 %1151
  %1154 = vset.pattern.permute.xlu0 66
  %1155 = vperm.xlu0 %1154, %v216
  %v1156 = vpop.permute.xlu0 %1155
  %1158 = vset.pattern.permute.xlu0 66
  %1159 = vperm.xlu0 %1158, %v219
  %v1160 = vpop.permute.xlu0 %1159
  %1162 = vset.pattern.permute.xlu0 66
  %1163 = vperm.xlu0 %1162, %v222
  %v1164 = vpop.permute.xlu0 %1163
  %1166 = vset.pattern.permute.xlu0 66
  %1167 = vperm.xlu0 %1166, %v225
  %v1168 = vpop.permute.xlu0 %1167
  %1170 = vset.pattern.permute.xlu0 66
  %1171 = vperm.xlu0 %1170, %v228
  %v1172 = vpop.permute.xlu0 %1171
  %1174 = vset.pattern.permute.xlu0 66
  %1175 = vperm.xlu0 %1174, %v231
  %v1176 = vpop.permute.xlu0 %1175
  %1178 = vset.pattern.permute.xlu0 66
  %1179 = vperm.xlu0 %1178, %v234
  %v1180 = vpop.permute.xlu0 %1179
  %1182 = vset.pattern.permute.xlu0 66
  %1183 = vperm.xlu0 %1182, %v237
  %v1184 = vpop.permute.xlu0 %1183
  %1186 = vset.pattern.permute.xlu0 66
  %1187 = vperm.xlu0 %1186, %v240
  %v1188 = vpop.permute.xlu0 %1187
  %1190 = vset.pattern.permute.xlu0 66
  %1191 = vperm.xlu0 %1190, %v243
  %v1192 = vpop.permute.xlu0 %1191
  %1194 = vset.pattern.permute.xlu0 66
  %1195 = vperm.xlu0 %1194, %v246
  %v1196 = vpop.permute.xlu0 %1195
  %1198 = vset.pattern.permute.xlu0 66
  %1199 = vperm.xlu0 %1198, %v249
  %v1200 = vpop.permute.xlu0 %1199
  %v1202 = vperm.slane %v272, 2
  %v1203 = vadd.f32 %v1140, %v1202
  %v1204 = vadd.f32 %v1144, %v1202
  %v1205 = vadd.f32 %v1148, %v1202
  %v1206 = vadd.f32 %v1152, %v1202
  %v1207 = vadd.f32 %v1156, %v1202
  %v1208 = vadd.f32 %v1160, %v1202
  %v1209 = vadd.f32 %v1164, %v1202
  %v1210 = vadd.f32 %v1168, %v1202
  %v1211 = vadd.f32 %v1172, %v1202
  %v1212 = vadd.f32 %v1176, %v1202
  %v1213 = vadd.f32 %v1180, %v1202
  %v1214 = vadd.f32 %v1184, %v1202
  %v1215 = vadd.f32 %v1188, %v1202
  %v1216 = vadd.f32 %v1192, %v1202
  %v1217 = vadd.f32 %v1196, %v1202
  %v1218 = vadd.f32 %v1200, %v1202
  %vm1219 = vcmp.gt.f32.partialorder %v1203, 0.0
  %vm1220 = vcmp.gt.f32.partialorder %v1204, 0.0
  %vm1221 = vcmp.gt.f32.partialorder %v1205, 0.0
  %vm1222 = vcmp.gt.f32.partialorder %v1206, 0.0
  %vm1223 = vcmp.gt.f32.partialorder %v1207, 0.0
  %vm1224 = vcmp.gt.f32.partialorder %v1208, 0.0
  %vm1225 = vcmp.gt.f32.partialorder %v1209, 0.0
  %vm1226 = vcmp.gt.f32.partialorder %v1210, 0.0
  %vm1227 = vcmp.gt.f32.partialorder %v1211, 0.0
  %vm1228 = vcmp.gt.f32.partialorder %v1212, 0.0
  %vm1229 = vcmp.gt.f32.partialorder %v1213, 0.0
  %vm1230 = vcmp.gt.f32.partialorder %v1214, 0.0
  %vm1231 = vcmp.gt.f32.partialorder %v1215, 0.0
  %vm1232 = vcmp.gt.f32.partialorder %v1216, 0.0
  %vm1233 = vcmp.gt.f32.partialorder %v1217, 0.0
  %vm1234 = vcmp.gt.f32.partialorder %v1218, 0.0
  %v1235 = vmul.f32 %v1203, 0.2
  %v1236 = vmul.f32 %v1204, 0.2
  %v1237 = vmul.f32 %v1205, 0.2
  %v1238 = vmul.f32 %v1206, 0.2
  %v1239 = vmul.f32 %v1207, 0.2
  %v1240 = vmul.f32 %v1208, 0.2
  %v1241 = vmul.f32 %v1209, 0.2
  %v1242 = vmul.f32 %v1210, 0.2
  %v1243 = vmul.f32 %v1211, 0.2
  %v1244 = vmul.f32 %v1212, 0.2
  %v1245 = vmul.f32 %v1213, 0.2
  %v1246 = vmul.f32 %v1214, 0.2
  %v1247 = vmul.f32 %v1215, 0.2
  %v1248 = vmul.f32 %v1216, 0.2
  %v1249 = vmul.f32 %v1217, 0.2
  %v1250 = vmul.f32 %v1218, 0.2
  %v1251 = vsel %vm1219, %v1203, %v1235
  %v1252 = vsel %vm1220, %v1204, %v1236
  %v1253 = vsel %vm1221, %v1205, %v1237
  %v1254 = vsel %vm1222, %v1206, %v1238
  %v1255 = vsel %vm1223, %v1207, %v1239
  %v1256 = vsel %vm1224, %v1208, %v1240
  %v1257 = vsel %vm1225, %v1209, %v1241
  %v1258 = vsel %vm1226, %v1210, %v1242
  %v1259 = vsel %vm1227, %v1211, %v1243
  %v1260 = vsel %vm1228, %v1212, %v1244
  %v1261 = vsel %vm1229, %v1213, %v1245
  %v1262 = vsel %vm1230, %v1214, %v1246
  %v1263 = vsel %vm1231, %v1215, %v1247
  %v1264 = vsel %vm1232, %v1216, %v1248
  %v1265 = vsel %vm1233, %v1217, %v1249
  %v1266 = vsel %vm1234, %v1218, %v1250
  %v1267 = vsel %vm48, %v1251, -1e+30
  %v1268 = vsel %vm49, %v1252, -1e+30
  %v1269 = vsel %vm50, %v1253, -1e+30
  %v1270 = vsel %vm51, %v1254, -1e+30
  %v1271 = vsel %vm52, %v1255, -1e+30
  %v1272 = vsel %vm53, %v1256, -1e+30
  %v1273 = vsel %vm54, %v1257, -1e+30
  %v1274 = vsel %vm55, %v1258, -1e+30
  %v1275 = vsel %vm56, %v1259, -1e+30
  %v1276 = vsel %vm57, %v1260, -1e+30
  %v1277 = vsel %vm58, %v1261, -1e+30
  %v1278 = vsel %vm59, %v1262, -1e+30
  %v1279 = vsel %vm60, %v1263, -1e+30
  %v1280 = vsel %vm61, %v1264, -1e+30
  %v1281 = vsel %vm62, %v1265, -1e+30
  %v1282 = vsel %vm63, %v1266, -1e+30
  %1283 = vmax.xlane.f32.xlu0 %v1267
  %v1284 = vpop.xlane.xlu0 %1283
  %1285 = vmax.xlane.f32.xlu0 %v1268
  %v1286 = vpop.xlane.xlu0 %1285
  %1287 = vmax.xlane.f32.xlu0 %v1269
  %v1288 = vpop.xlane.xlu0 %1287
  %1289 = vmax.xlane.f32.xlu0 %v1270
  %v1290 = vpop.xlane.xlu0 %1289
  %1291 = vmax.xlane.f32.xlu0 %v1271
  %v1292 = vpop.xlane.xlu0 %1291
  %1293 = vmax.xlane.f32.xlu0 %v1272
  %v1294 = vpop.xlane.xlu0 %1293
  %1295 = vmax.xlane.f32.xlu0 %v1273
  %v1296 = vpop.xlane.xlu0 %1295
  %1297 = vmax.xlane.f32.xlu0 %v1274
  %v1298 = vpop.xlane.xlu0 %1297
  %1299 = vmax.xlane.f32.xlu0 %v1275
  %v1300 = vpop.xlane.xlu0 %1299
  %1301 = vmax.xlane.f32.xlu0 %v1276
  %v1302 = vpop.xlane.xlu0 %1301
  %1303 = vmax.xlane.f32.xlu0 %v1277
  %v1304 = vpop.xlane.xlu0 %1303
  %1305 = vmax.xlane.f32.xlu0 %v1278
  %v1306 = vpop.xlane.xlu0 %1305
  %1307 = vmax.xlane.f32.xlu0 %v1279
  %v1308 = vpop.xlane.xlu0 %1307
  %1309 = vmax.xlane.f32.xlu0 %v1280
  %v1310 = vpop.xlane.xlu0 %1309
  %1311 = vmax.xlane.f32.xlu0 %v1281
  %v1312 = vpop.xlane.xlu0 %1311
  %1313 = vmax.xlane.f32.xlu0 %v1282
  %v1314 = vpop.xlane.xlu0 %1313
  %v1315 = vsub.f32 %v1267, %v1284
  %v1316 = vsub.f32 %v1268, %v1286
  %v1317 = vsub.f32 %v1269, %v1288
  %v1318 = vsub.f32 %v1270, %v1290
  %v1319 = vsub.f32 %v1271, %v1292
  %v1320 = vsub.f32 %v1272, %v1294
  %v1321 = vsub.f32 %v1273, %v1296
  %v1322 = vsub.f32 %v1274, %v1298
  %v1323 = vsub.f32 %v1275, %v1300
  %v1324 = vsub.f32 %v1276, %v1302
  %v1325 = vsub.f32 %v1277, %v1304
  %v1326 = vsub.f32 %v1278, %v1306
  %v1327 = vsub.f32 %v1279, %v1308
  %v1328 = vsub.f32 %v1280, %v1310
  %v1329 = vsub.f32 %v1281, %v1312
  %v1330 = vsub.f32 %v1282, %v1314
  %v1331 = vmul.f32 %v1315, 1.442695
  %v1332 = vpow.pop %v1331
  %v1333 = vmul.f32 %v1316, 1.442695
  %v1334 = vpow.pop %v1333
  %v1335 = vmul.f32 %v1317, 1.442695
  %v1336 = vpow.pop %v1335
  %v1337 = vmul.f32 %v1318, 1.442695
  %v1338 = vpow.pop %v1337
  %v1339 = vmul.f32 %v1319, 1.442695
  %v1340 = vpow.pop %v1339
  %v1341 = vmul.f32 %v1320, 1.442695
  %v1342 = vpow.pop %v1341
  %v1343 = vmul.f32 %v1321, 1.442695
  %v1344 = vpow.pop %v1343
  %v1345 = vmul.f32 %v1322, 1.442695
  %v1346 = vpow.pop %v1345
  %v1347 = vmul.f32 %v1323, 1.442695
  %v1348 = vpow.pop %v1347
  %v1349 = vmul.f32 %v1324, 1.442695
  %v1350 = vpow.pop %v1349
  %v1351 = vmul.f32 %v1325, 1.442695
  %v1352 = vpow.pop %v1351
  %v1353 = vmul.f32 %v1326, 1.442695
  %v1354 = vpow.pop %v1353
  %v1355 = vmul.f32 %v1327, 1.442695
  %v1356 = vpow.pop %v1355
  %v1357 = vmul.f32 %v1328, 1.442695
  %v1358 = vpow.pop %v1357
  %v1359 = vmul.f32 %v1329, 1.442695
  %v1360 = vpow.pop %v1359
  %v1361 = vmul.f32 %v1330, 1.442695
  %v1362 = vpow.pop %v1361
  %v1363 = vmul.f32 %v1332, %v80
  %v1364 = vmul.f32 %v1334, %v81
  %v1365 = vmul.f32 %v1336, %v82
  %v1366 = vmul.f32 %v1338, %v83
  %v1367 = vmul.f32 %v1340, %v84
  %v1368 = vmul.f32 %v1342, %v85
  %v1369 = vmul.f32 %v1344, %v86
  %v1370 = vmul.f32 %v1346, %v87
  %v1371 = vmul.f32 %v1348, %v88
  %v1372 = vmul.f32 %v1350, %v89
  %v1373 = vmul.f32 %v1352, %v90
  %v1374 = vmul.f32 %v1354, %v91
  %v1375 = vmul.f32 %v1356, %v92
  %v1376 = vmul.f32 %v1358, %v93
  %v1377 = vmul.f32 %v1360, %v94
  %v1378 = vmul.f32 %v1362, %v95
  %1379 = vadd.xlane.f32.xlu0 %v1363
  %v1380 = vpop.xlane.xlu0 %1379
  %1381 = vadd.xlane.f32.xlu0 %v1364
  %v1382 = vpop.xlane.xlu0 %1381
  %1383 = vadd.xlane.f32.xlu0 %v1365
  %v1384 = vpop.xlane.xlu0 %1383
  %1385 = vadd.xlane.f32.xlu0 %v1366
  %v1386 = vpop.xlane.xlu0 %1385
  %1387 = vadd.xlane.f32.xlu0 %v1367
  %v1388 = vpop.xlane.xlu0 %1387
  %1389 = vadd.xlane.f32.xlu0 %v1368
  %v1390 = vpop.xlane.xlu0 %1389
  %1391 = vadd.xlane.f32.xlu0 %v1369
  %v1392 = vpop.xlane.xlu0 %1391
  %1393 = vadd.xlane.f32.xlu0 %v1370
  %v1394 = vpop.xlane.xlu0 %1393
  %1395 = vadd.xlane.f32.xlu0 %v1371
  %v1396 = vpop.xlane.xlu0 %1395
  %1397 = vadd.xlane.f32.xlu0 %v1372
  %v1398 = vpop.xlane.xlu0 %1397
  %1399 = vadd.xlane.f32.xlu0 %v1373
  %v1400 = vpop.xlane.xlu0 %1399
  %1401 = vadd.xlane.f32.xlu0 %v1374
  %v1402 = vpop.xlane.xlu0 %1401
  %1403 = vadd.xlane.f32.xlu0 %v1375
  %v1404 = vpop.xlane.xlu0 %1403
  %1405 = vadd.xlane.f32.xlu0 %v1376
  %v1406 = vpop.xlane.xlu0 %1405
  %1407 = vadd.xlane.f32.xlu0 %v1377
  %v1408 = vpop.xlane.xlu0 %1407
  %1409 = vadd.xlane.f32.xlu0 %v1378
  %v1410 = vpop.xlane.xlu0 %1409
  %v1411 = vmax.f32 %v1380, 1e-30
  %v1412 = vmax.f32 %v1382, 1e-30
  %v1413 = vmax.f32 %v1384, 1e-30
  %v1414 = vmax.f32 %v1386, 1e-30
  %v1415 = vmax.f32 %v1388, 1e-30
  %v1416 = vmax.f32 %v1390, 1e-30
  %v1417 = vmax.f32 %v1392, 1e-30
  %v1418 = vmax.f32 %v1394, 1e-30
  %v1419 = vmax.f32 %v1396, 1e-30
  %v1420 = vmax.f32 %v1398, 1e-30
  %v1421 = vmax.f32 %v1400, 1e-30
  %v1422 = vmax.f32 %v1402, 1e-30
  %v1423 = vmax.f32 %v1404, 1e-30
  %v1424 = vmax.f32 %v1406, 1e-30
  %v1425 = vmax.f32 %v1408, 1e-30
  %v1426 = vmax.f32 %v1410, 1e-30
  %v1427 = vrcp.pop %v1411
  %v1428 = vrcp.pop %v1412
  %v1429 = vrcp.pop %v1413
  %v1430 = vrcp.pop %v1414
  %v1431 = vrcp.pop %v1415
  %v1432 = vrcp.pop %v1416
  %v1433 = vrcp.pop %v1417
  %v1434 = vrcp.pop %v1418
  %v1435 = vrcp.pop %v1419
  %v1436 = vrcp.pop %v1420
  %v1437 = vrcp.pop %v1421
  %v1438 = vrcp.pop %v1422
  %v1439 = vrcp.pop %v1423
  %v1440 = vrcp.pop %v1424
  %v1441 = vrcp.pop %v1425
  %v1442 = vrcp.pop %v1426
  %v1443 = vmul.f32 %v1363, %v1427
  %v1444 = vmul.f32 %v1364, %v1428
  %v1445 = vmul.f32 %v1365, %v1429
  %v1446 = vmul.f32 %v1366, %v1430
  %v1447 = vmul.f32 %v1367, %v1431
  %v1448 = vmul.f32 %v1368, %v1432
  %v1449 = vmul.f32 %v1369, %v1433
  %v1450 = vmul.f32 %v1370, %v1434
  %v1451 = vmul.f32 %v1371, %v1435
  %v1452 = vmul.f32 %v1372, %v1436
  %v1453 = vmul.f32 %v1373, %v1437
  %v1454 = vmul.f32 %v1374, %v1438
  %v1455 = vmul.f32 %v1375, %v1439
  %v1456 = vmul.f32 %v1376, %v1440
  %v1457 = vmul.f32 %v1377, %v1441
  %v1458 = vmul.f32 %v1378, %v1442
  %1459 = vmatpush.msra.mxu0 %v249
  %1460 = vmatpush.msra.mxu0 %v246
  %1461 = vmatpush.msra.mxu0 %v243
  %1462 = vmatpush.msra.mxu0 %v240
  %1463 = vmatpush.msra.mxu0 %v237
  %1464 = vmatpush.msra.mxu0 %v234
  %1465 = vmatpush.msra.mxu0 %v231
  %1466 = vmatpush.msra.mxu0 %v228
  %1467 = vmatpush.msra.mxu0 %v225
  %1468 = vmatpush.msra.mxu0 %v222
  %1469 = vmatpush.msra.mxu0 %v219
  %1470 = vmatpush.msra.mxu0 %v216
  %1471 = vmatpush.msra.mxu0 %v213
  %1472 = vmatpush.msra.mxu0 %v210
  %1473 = vmatpush.msra.mxu0 %v207
  %1474 = vmatpush.msra.mxu0 %v204
  %1475 = vmatmul.f32.gmra.mxu0 %v1443
  %v1476 = vpop.f32.mrf.mxu0
  %v1477 = vadd.f32 0.0, %v1476
  %1478 = vmatmul.f32.gmra.mxu0 %v1444
  %v1479 = vpop.f32.mrf.mxu0
  %v1480 = vadd.f32 0.0, %v1479
  %1481 = vmatmul.f32.gmra.mxu0 %v1445
  %v1482 = vpop.f32.mrf.mxu0
  %v1483 = vadd.f32 0.0, %v1482
  %1484 = vmatmul.f32.gmra.mxu0 %v1446
  %v1485 = vpop.f32.mrf.mxu0
  %v1486 = vadd.f32 0.0, %v1485
  %1487 = vmatmul.f32.gmra.mxu0 %v1447
  %v1488 = vpop.f32.mrf.mxu0
  %v1489 = vadd.f32 0.0, %v1488
  %1490 = vmatmul.f32.gmra.mxu0 %v1448
  %v1491 = vpop.f32.mrf.mxu0
  %v1492 = vadd.f32 0.0, %v1491
  %1493 = vmatmul.f32.gmra.mxu0 %v1449
  %v1494 = vpop.f32.mrf.mxu0
  %v1495 = vadd.f32 0.0, %v1494
  %1496 = vmatmul.f32.gmra.mxu0 %v1450
  %v1497 = vpop.f32.mrf.mxu0
  %v1498 = vadd.f32 0.0, %v1497
  %1499 = vmatmul.f32.gmra.mxu0 %v1451
  %v1500 = vpop.f32.mrf.mxu0
  %v1501 = vadd.f32 0.0, %v1500
  %1502 = vmatmul.f32.gmra.mxu0 %v1452
  %v1503 = vpop.f32.mrf.mxu0
  %v1504 = vadd.f32 0.0, %v1503
  %1505 = vmatmul.f32.gmra.mxu0 %v1453
  %v1506 = vpop.f32.mrf.mxu0
  %v1507 = vadd.f32 0.0, %v1506
  %1508 = vmatmul.f32.gmra.mxu0 %v1454
  %v1509 = vpop.f32.mrf.mxu0
  %v1510 = vadd.f32 0.0, %v1509
  %1511 = vmatmul.f32.gmra.mxu0 %v1455
  %v1512 = vpop.f32.mrf.mxu0
  %v1513 = vadd.f32 0.0, %v1512
  %1514 = vmatmul.f32.gmra.mxu0 %v1456
  %v1515 = vpop.f32.mrf.mxu0
  %v1516 = vadd.f32 0.0, %v1515
  %1517 = vmatmul.f32.gmra.mxu0 %v1457
  %v1518 = vpop.f32.mrf.mxu0
  %v1519 = vadd.f32 0.0, %v1518
  %1520 = vmatmul.f32.gmra.mxu0 %v1458
  %v1521 = vpop.f32.mrf.mxu0
  %v1522 = vadd.f32 0.0, %v1521
  %1523 = vdwg.mxu0
  %vm1524 = vcmp.ge.s32.totalorder %v275, 32
  %vm1525 = vcmp.lt.s32.totalorder %v275, 48
  %vm1526 = vmand %vm1524, %vm1525
  %v1527 = vsel %vm1526, 1, 0
  %v1528 = vcvt.s32.f32 %v1527
  %v1529 = vmul.f32 %v1477, %v1528
  %v1530 = vmul.f32 %v1480, %v1528
  %v1531 = vmul.f32 %v1483, %v1528
  %v1532 = vmul.f32 %v1486, %v1528
  %v1533 = vmul.f32 %v1489, %v1528
  %v1534 = vmul.f32 %v1492, %v1528
  %v1535 = vmul.f32 %v1495, %v1528
  %v1536 = vmul.f32 %v1498, %v1528
  %v1537 = vmul.f32 %v1501, %v1528
  %v1538 = vmul.f32 %v1504, %v1528
  %v1539 = vmul.f32 %v1507, %v1528
  %v1540 = vmul.f32 %v1510, %v1528
  %v1541 = vmul.f32 %v1513, %v1528
  %v1542 = vmul.f32 %v1516, %v1528
  %v1543 = vmul.f32 %v1519, %v1528
  %v1544 = vmul.f32 %v1522, %v1528
  %v1545 = vadd.f32 %v1122, %v1529
  %v1546 = vadd.f32 %v1123, %v1530
  %v1547 = vadd.f32 %v1124, %v1531
  %v1548 = vadd.f32 %v1125, %v1532
  %v1549 = vadd.f32 %v1126, %v1533
  %v1550 = vadd.f32 %v1127, %v1534
  %v1551 = vadd.f32 %v1128, %v1535
  %v1552 = vadd.f32 %v1129, %v1536
  %v1553 = vadd.f32 %v1130, %v1537
  %v1554 = vadd.f32 %v1131, %v1538
  %v1555 = vadd.f32 %v1132, %v1539
  %v1556 = vadd.f32 %v1133, %v1540
  %v1557 = vadd.f32 %v1134, %v1541
  %v1558 = vadd.f32 %v1135, %v1542
  %v1559 = vadd.f32 %v1136, %v1543
  %v1560 = vadd.f32 %v1137, %v1544
  %1561 = vset.pattern.permute.xlu0 67
  %1562 = vperm.xlu0 %1561, %v204
  %v1563 = vpop.permute.xlu0 %1562
  %1565 = vset.pattern.permute.xlu0 67
  %1566 = vperm.xlu0 %1565, %v207
  %v1567 = vpop.permute.xlu0 %1566
  %1569 = vset.pattern.permute.xlu0 67
  %1570 = vperm.xlu0 %1569, %v210
  %v1571 = vpop.permute.xlu0 %1570
  %1573 = vset.pattern.permute.xlu0 67
  %1574 = vperm.xlu0 %1573, %v213
  %v1575 = vpop.permute.xlu0 %1574
  %1577 = vset.pattern.permute.xlu0 67
  %1578 = vperm.xlu0 %1577, %v216
  %v1579 = vpop.permute.xlu0 %1578
  %1581 = vset.pattern.permute.xlu0 67
  %1582 = vperm.xlu0 %1581, %v219
  %v1583 = vpop.permute.xlu0 %1582
  %1585 = vset.pattern.permute.xlu0 67
  %1586 = vperm.xlu0 %1585, %v222
  %v1587 = vpop.permute.xlu0 %1586
  %1589 = vset.pattern.permute.xlu0 67
  %1590 = vperm.xlu0 %1589, %v225
  %v1591 = vpop.permute.xlu0 %1590
  %1593 = vset.pattern.permute.xlu0 67
  %1594 = vperm.xlu0 %1593, %v228
  %v1595 = vpop.permute.xlu0 %1594
  %1597 = vset.pattern.permute.xlu0 67
  %1598 = vperm.xlu0 %1597, %v231
  %v1599 = vpop.permute.xlu0 %1598
  %1601 = vset.pattern.permute.xlu0 67
  %1602 = vperm.xlu0 %1601, %v234
  %v1603 = vpop.permute.xlu0 %1602
  %1605 = vset.pattern.permute.xlu0 67
  %1606 = vperm.xlu0 %1605, %v237
  %v1607 = vpop.permute.xlu0 %1606
  %1609 = vset.pattern.permute.xlu0 67
  %1610 = vperm.xlu0 %1609, %v240
  %v1611 = vpop.permute.xlu0 %1610
  %1613 = vset.pattern.permute.xlu0 67
  %1614 = vperm.xlu0 %1613, %v243
  %v1615 = vpop.permute.xlu0 %1614
  %1617 = vset.pattern.permute.xlu0 67
  %1618 = vperm.xlu0 %1617, %v246
  %v1619 = vpop.permute.xlu0 %1618
  %1621 = vset.pattern.permute.xlu0 67
  %1622 = vperm.xlu0 %1621, %v249
  %v1623 = vpop.permute.xlu0 %1622
  %v1625 = vperm.slane %v272, 3
  %v1626 = vadd.f32 %v1563, %v1625
  %v1627 = vadd.f32 %v1567, %v1625
  %v1628 = vadd.f32 %v1571, %v1625
  %v1629 = vadd.f32 %v1575, %v1625
  %v1630 = vadd.f32 %v1579, %v1625
  %v1631 = vadd.f32 %v1583, %v1625
  %v1632 = vadd.f32 %v1587, %v1625
  %v1633 = vadd.f32 %v1591, %v1625
  %v1634 = vadd.f32 %v1595, %v1625
  %v1635 = vadd.f32 %v1599, %v1625
  %v1636 = vadd.f32 %v1603, %v1625
  %v1637 = vadd.f32 %v1607, %v1625
  %v1638 = vadd.f32 %v1611, %v1625
  %v1639 = vadd.f32 %v1615, %v1625
  %v1640 = vadd.f32 %v1619, %v1625
  %v1641 = vadd.f32 %v1623, %v1625
  %vm1642 = vcmp.gt.f32.partialorder %v1626, 0.0
  %vm1643 = vcmp.gt.f32.partialorder %v1627, 0.0
  %vm1644 = vcmp.gt.f32.partialorder %v1628, 0.0
  %vm1645 = vcmp.gt.f32.partialorder %v1629, 0.0
  %vm1646 = vcmp.gt.f32.partialorder %v1630, 0.0
  %vm1647 = vcmp.gt.f32.partialorder %v1631, 0.0
  %vm1648 = vcmp.gt.f32.partialorder %v1632, 0.0
  %vm1649 = vcmp.gt.f32.partialorder %v1633, 0.0
  %vm1650 = vcmp.gt.f32.partialorder %v1634, 0.0
  %vm1651 = vcmp.gt.f32.partialorder %v1635, 0.0
  %vm1652 = vcmp.gt.f32.partialorder %v1636, 0.0
  %vm1653 = vcmp.gt.f32.partialorder %v1637, 0.0
  %vm1654 = vcmp.gt.f32.partialorder %v1638, 0.0
  %vm1655 = vcmp.gt.f32.partialorder %v1639, 0.0
  %vm1656 = vcmp.gt.f32.partialorder %v1640, 0.0
  %vm1657 = vcmp.gt.f32.partialorder %v1641, 0.0
  %v1658 = vmul.f32 %v1626, 0.2
  %v1659 = vmul.f32 %v1627, 0.2
  %v1660 = vmul.f32 %v1628, 0.2
  %v1661 = vmul.f32 %v1629, 0.2
  %v1662 = vmul.f32 %v1630, 0.2
  %v1663 = vmul.f32 %v1631, 0.2
  %v1664 = vmul.f32 %v1632, 0.2
  %v1665 = vmul.f32 %v1633, 0.2
  %v1666 = vmul.f32 %v1634, 0.2
  %v1667 = vmul.f32 %v1635, 0.2
  %v1668 = vmul.f32 %v1636, 0.2
  %v1669 = vmul.f32 %v1637, 0.2
  %v1670 = vmul.f32 %v1638, 0.2
  %v1671 = vmul.f32 %v1639, 0.2
  %v1672 = vmul.f32 %v1640, 0.2
  %v1673 = vmul.f32 %v1641, 0.2
  %v1674 = vsel %vm1642, %v1626, %v1658
  %v1675 = vsel %vm1643, %v1627, %v1659
  %v1676 = vsel %vm1644, %v1628, %v1660
  %v1677 = vsel %vm1645, %v1629, %v1661
  %v1678 = vsel %vm1646, %v1630, %v1662
  %v1679 = vsel %vm1647, %v1631, %v1663
  %v1680 = vsel %vm1648, %v1632, %v1664
  %v1681 = vsel %vm1649, %v1633, %v1665
  %v1682 = vsel %vm1650, %v1634, %v1666
  %v1683 = vsel %vm1651, %v1635, %v1667
  %v1684 = vsel %vm1652, %v1636, %v1668
  %v1685 = vsel %vm1653, %v1637, %v1669
  %v1686 = vsel %vm1654, %v1638, %v1670
  %v1687 = vsel %vm1655, %v1639, %v1671
  %v1688 = vsel %vm1656, %v1640, %v1672
  %v1689 = vsel %vm1657, %v1641, %v1673
  %v1690 = vsel %vm48, %v1674, -1e+30
  %v1691 = vsel %vm49, %v1675, -1e+30
  %v1692 = vsel %vm50, %v1676, -1e+30
  %v1693 = vsel %vm51, %v1677, -1e+30
  %v1694 = vsel %vm52, %v1678, -1e+30
  %v1695 = vsel %vm53, %v1679, -1e+30
  %v1696 = vsel %vm54, %v1680, -1e+30
  %v1697 = vsel %vm55, %v1681, -1e+30
  %v1698 = vsel %vm56, %v1682, -1e+30
  %v1699 = vsel %vm57, %v1683, -1e+30
  %v1700 = vsel %vm58, %v1684, -1e+30
  %v1701 = vsel %vm59, %v1685, -1e+30
  %v1702 = vsel %vm60, %v1686, -1e+30
  %v1703 = vsel %vm61, %v1687, -1e+30
  %v1704 = vsel %vm62, %v1688, -1e+30
  %v1705 = vsel %vm63, %v1689, -1e+30
  %1706 = vmax.xlane.f32.xlu0 %v1690
  %v1707 = vpop.xlane.xlu0 %1706
  %1708 = vmax.xlane.f32.xlu0 %v1691
  %v1709 = vpop.xlane.xlu0 %1708
  %1710 = vmax.xlane.f32.xlu0 %v1692
  %v1711 = vpop.xlane.xlu0 %1710
  %1712 = vmax.xlane.f32.xlu0 %v1693
  %v1713 = vpop.xlane.xlu0 %1712
  %1714 = vmax.xlane.f32.xlu0 %v1694
  %v1715 = vpop.xlane.xlu0 %1714
  %1716 = vmax.xlane.f32.xlu0 %v1695
  %v1717 = vpop.xlane.xlu0 %1716
  %1718 = vmax.xlane.f32.xlu0 %v1696
  %v1719 = vpop.xlane.xlu0 %1718
  %1720 = vmax.xlane.f32.xlu0 %v1697
  %v1721 = vpop.xlane.xlu0 %1720
  %1722 = vmax.xlane.f32.xlu0 %v1698
  %v1723 = vpop.xlane.xlu0 %1722
  %1724 = vmax.xlane.f32.xlu0 %v1699
  %v1725 = vpop.xlane.xlu0 %1724
  %1726 = vmax.xlane.f32.xlu0 %v1700
  %v1727 = vpop.xlane.xlu0 %1726
  %1728 = vmax.xlane.f32.xlu0 %v1701
  %v1729 = vpop.xlane.xlu0 %1728
  %1730 = vmax.xlane.f32.xlu0 %v1702
  %v1731 = vpop.xlane.xlu0 %1730
  %1732 = vmax.xlane.f32.xlu0 %v1703
  %v1733 = vpop.xlane.xlu0 %1732
  %1734 = vmax.xlane.f32.xlu0 %v1704
  %v1735 = vpop.xlane.xlu0 %1734
  %1736 = vmax.xlane.f32.xlu0 %v1705
  %v1737 = vpop.xlane.xlu0 %1736
  %v1738 = vsub.f32 %v1690, %v1707
  %v1739 = vsub.f32 %v1691, %v1709
  %v1740 = vsub.f32 %v1692, %v1711
  %v1741 = vsub.f32 %v1693, %v1713
  %v1742 = vsub.f32 %v1694, %v1715
  %v1743 = vsub.f32 %v1695, %v1717
  %v1744 = vsub.f32 %v1696, %v1719
  %v1745 = vsub.f32 %v1697, %v1721
  %v1746 = vsub.f32 %v1698, %v1723
  %v1747 = vsub.f32 %v1699, %v1725
  %v1748 = vsub.f32 %v1700, %v1727
  %v1749 = vsub.f32 %v1701, %v1729
  %v1750 = vsub.f32 %v1702, %v1731
  %v1751 = vsub.f32 %v1703, %v1733
  %v1752 = vsub.f32 %v1704, %v1735
  %v1753 = vsub.f32 %v1705, %v1737
  %v1754 = vmul.f32 %v1738, 1.442695
  %v1755 = vpow.pop %v1754
  %v1756 = vmul.f32 %v1739, 1.442695
  %v1757 = vpow.pop %v1756
  %v1758 = vmul.f32 %v1740, 1.442695
  %v1759 = vpow.pop %v1758
  %v1760 = vmul.f32 %v1741, 1.442695
  %v1761 = vpow.pop %v1760
  %v1762 = vmul.f32 %v1742, 1.442695
  %v1763 = vpow.pop %v1762
  %v1764 = vmul.f32 %v1743, 1.442695
  %v1765 = vpow.pop %v1764
  %v1766 = vmul.f32 %v1744, 1.442695
  %v1767 = vpow.pop %v1766
  %v1768 = vmul.f32 %v1745, 1.442695
  %v1769 = vpow.pop %v1768
  %v1770 = vmul.f32 %v1746, 1.442695
  %v1771 = vpow.pop %v1770
  %v1772 = vmul.f32 %v1747, 1.442695
  %v1773 = vpow.pop %v1772
  %v1774 = vmul.f32 %v1748, 1.442695
  %v1775 = vpow.pop %v1774
  %v1776 = vmul.f32 %v1749, 1.442695
  %v1777 = vpow.pop %v1776
  %v1778 = vmul.f32 %v1750, 1.442695
  %v1779 = vpow.pop %v1778
  %v1780 = vmul.f32 %v1751, 1.442695
  %v1781 = vpow.pop %v1780
  %v1782 = vmul.f32 %v1752, 1.442695
  %v1783 = vpow.pop %v1782
  %v1784 = vmul.f32 %v1753, 1.442695
  %v1785 = vpow.pop %v1784
  %v1786 = vmul.f32 %v1755, %v80
  %v1787 = vmul.f32 %v1757, %v81
  %v1788 = vmul.f32 %v1759, %v82
  %v1789 = vmul.f32 %v1761, %v83
  %v1790 = vmul.f32 %v1763, %v84
  %v1791 = vmul.f32 %v1765, %v85
  %v1792 = vmul.f32 %v1767, %v86
  %v1793 = vmul.f32 %v1769, %v87
  %v1794 = vmul.f32 %v1771, %v88
  %v1795 = vmul.f32 %v1773, %v89
  %v1796 = vmul.f32 %v1775, %v90
  %v1797 = vmul.f32 %v1777, %v91
  %v1798 = vmul.f32 %v1779, %v92
  %v1799 = vmul.f32 %v1781, %v93
  %v1800 = vmul.f32 %v1783, %v94
  %v1801 = vmul.f32 %v1785, %v95
  %1802 = vadd.xlane.f32.xlu0 %v1786
  %v1803 = vpop.xlane.xlu0 %1802
  %1804 = vadd.xlane.f32.xlu0 %v1787
  %v1805 = vpop.xlane.xlu0 %1804
  %1806 = vadd.xlane.f32.xlu0 %v1788
  %v1807 = vpop.xlane.xlu0 %1806
  %1808 = vadd.xlane.f32.xlu0 %v1789
  %v1809 = vpop.xlane.xlu0 %1808
  %1810 = vadd.xlane.f32.xlu0 %v1790
  %v1811 = vpop.xlane.xlu0 %1810
  %1812 = vadd.xlane.f32.xlu0 %v1791
  %v1813 = vpop.xlane.xlu0 %1812
  %1814 = vadd.xlane.f32.xlu0 %v1792
  %v1815 = vpop.xlane.xlu0 %1814
  %1816 = vadd.xlane.f32.xlu0 %v1793
  %v1817 = vpop.xlane.xlu0 %1816
  %1818 = vadd.xlane.f32.xlu0 %v1794
  %v1819 = vpop.xlane.xlu0 %1818
  %1820 = vadd.xlane.f32.xlu0 %v1795
  %v1821 = vpop.xlane.xlu0 %1820
  %1822 = vadd.xlane.f32.xlu0 %v1796
  %v1823 = vpop.xlane.xlu0 %1822
  %1824 = vadd.xlane.f32.xlu0 %v1797
  %v1825 = vpop.xlane.xlu0 %1824
  %1826 = vadd.xlane.f32.xlu0 %v1798
  %v1827 = vpop.xlane.xlu0 %1826
  %1828 = vadd.xlane.f32.xlu0 %v1799
  %v1829 = vpop.xlane.xlu0 %1828
  %1830 = vadd.xlane.f32.xlu0 %v1800
  %v1831 = vpop.xlane.xlu0 %1830
  %1832 = vadd.xlane.f32.xlu0 %v1801
  %v1833 = vpop.xlane.xlu0 %1832
  %v1834 = vmax.f32 %v1803, 1e-30
  %v1835 = vmax.f32 %v1805, 1e-30
  %v1836 = vmax.f32 %v1807, 1e-30
  %v1837 = vmax.f32 %v1809, 1e-30
  %v1838 = vmax.f32 %v1811, 1e-30
  %v1839 = vmax.f32 %v1813, 1e-30
  %v1840 = vmax.f32 %v1815, 1e-30
  %v1841 = vmax.f32 %v1817, 1e-30
  %v1842 = vmax.f32 %v1819, 1e-30
  %v1843 = vmax.f32 %v1821, 1e-30
  %v1844 = vmax.f32 %v1823, 1e-30
  %v1845 = vmax.f32 %v1825, 1e-30
  %v1846 = vmax.f32 %v1827, 1e-30
  %v1847 = vmax.f32 %v1829, 1e-30
  %v1848 = vmax.f32 %v1831, 1e-30
  %v1849 = vmax.f32 %v1833, 1e-30
  %v1850 = vrcp.pop %v1834
  %v1851 = vrcp.pop %v1835
  %v1852 = vrcp.pop %v1836
  %v1853 = vrcp.pop %v1837
  %v1854 = vrcp.pop %v1838
  %v1855 = vrcp.pop %v1839
  %v1856 = vrcp.pop %v1840
  %v1857 = vrcp.pop %v1841
  %v1858 = vrcp.pop %v1842
  %v1859 = vrcp.pop %v1843
  %v1860 = vrcp.pop %v1844
  %v1861 = vrcp.pop %v1845
  %v1862 = vrcp.pop %v1846
  %v1863 = vrcp.pop %v1847
  %v1864 = vrcp.pop %v1848
  %v1865 = vrcp.pop %v1849
  %v1866 = vmul.f32 %v1786, %v1850
  %v1867 = vmul.f32 %v1787, %v1851
  %v1868 = vmul.f32 %v1788, %v1852
  %v1869 = vmul.f32 %v1789, %v1853
  %v1870 = vmul.f32 %v1790, %v1854
  %v1871 = vmul.f32 %v1791, %v1855
  %v1872 = vmul.f32 %v1792, %v1856
  %v1873 = vmul.f32 %v1793, %v1857
  %v1874 = vmul.f32 %v1794, %v1858
  %v1875 = vmul.f32 %v1795, %v1859
  %v1876 = vmul.f32 %v1796, %v1860
  %v1877 = vmul.f32 %v1797, %v1861
  %v1878 = vmul.f32 %v1798, %v1862
  %v1879 = vmul.f32 %v1799, %v1863
  %v1880 = vmul.f32 %v1800, %v1864
  %v1881 = vmul.f32 %v1801, %v1865
  %1882 = vmatpush.msra.mxu0 %v249
  %1883 = vmatpush.msra.mxu0 %v246
  %1884 = vmatpush.msra.mxu0 %v243
  %1885 = vmatpush.msra.mxu0 %v240
  %1886 = vmatpush.msra.mxu0 %v237
  %1887 = vmatpush.msra.mxu0 %v234
  %1888 = vmatpush.msra.mxu0 %v231
  %1889 = vmatpush.msra.mxu0 %v228
  %1890 = vmatpush.msra.mxu0 %v225
  %1891 = vmatpush.msra.mxu0 %v222
  %1892 = vmatpush.msra.mxu0 %v219
  %1893 = vmatpush.msra.mxu0 %v216
  %1894 = vmatpush.msra.mxu0 %v213
  %1895 = vmatpush.msra.mxu0 %v210
  %1896 = vmatpush.msra.mxu0 %v207
  %1897 = vmatpush.msra.mxu0 %v204
  %1898 = vmatmul.f32.gmra.mxu0 %v1866
  %v1899 = vpop.f32.mrf.mxu0
  %v1900 = vadd.f32 0.0, %v1899
  %1901 = vmatmul.f32.gmra.mxu0 %v1867
  %v1902 = vpop.f32.mrf.mxu0
  %v1903 = vadd.f32 0.0, %v1902
  %1904 = vmatmul.f32.gmra.mxu0 %v1868
  %v1905 = vpop.f32.mrf.mxu0
  %v1906 = vadd.f32 0.0, %v1905
  %1907 = vmatmul.f32.gmra.mxu0 %v1869
  %v1908 = vpop.f32.mrf.mxu0
  %v1909 = vadd.f32 0.0, %v1908
  %1910 = vmatmul.f32.gmra.mxu0 %v1870
  %v1911 = vpop.f32.mrf.mxu0
  %v1912 = vadd.f32 0.0, %v1911
  %1913 = vmatmul.f32.gmra.mxu0 %v1871
  %v1914 = vpop.f32.mrf.mxu0
  %v1915 = vadd.f32 0.0, %v1914
  %1916 = vmatmul.f32.gmra.mxu0 %v1872
  %v1917 = vpop.f32.mrf.mxu0
  %v1918 = vadd.f32 0.0, %v1917
  %1919 = vmatmul.f32.gmra.mxu0 %v1873
  %v1920 = vpop.f32.mrf.mxu0
  %v1921 = vadd.f32 0.0, %v1920
  %1922 = vmatmul.f32.gmra.mxu0 %v1874
  %v1923 = vpop.f32.mrf.mxu0
  %v1924 = vadd.f32 0.0, %v1923
  %1925 = vmatmul.f32.gmra.mxu0 %v1875
  %v1926 = vpop.f32.mrf.mxu0
  %v1927 = vadd.f32 0.0, %v1926
  %1928 = vmatmul.f32.gmra.mxu0 %v1876
  %v1929 = vpop.f32.mrf.mxu0
  %v1930 = vadd.f32 0.0, %v1929
  %1931 = vmatmul.f32.gmra.mxu0 %v1877
  %v1932 = vpop.f32.mrf.mxu0
  %v1933 = vadd.f32 0.0, %v1932
  %1934 = vmatmul.f32.gmra.mxu0 %v1878
  %v1935 = vpop.f32.mrf.mxu0
  %v1936 = vadd.f32 0.0, %v1935
  %1937 = vmatmul.f32.gmra.mxu0 %v1879
  %v1938 = vpop.f32.mrf.mxu0
  %v1939 = vadd.f32 0.0, %v1938
  %1940 = vmatmul.f32.gmra.mxu0 %v1880
  %v1941 = vpop.f32.mrf.mxu0
  %v1942 = vadd.f32 0.0, %v1941
  %1943 = vmatmul.f32.gmra.mxu0 %v1881
  %v1944 = vpop.f32.mrf.mxu0
  %v1945 = vadd.f32 0.0, %v1944
  %1946 = vdwg.mxu0
  %vm1947 = vcmp.ge.s32.totalorder %v275, 48
  %vm1948 = vcmp.lt.s32.totalorder %v275, 64
  %vm1949 = vmand %vm1947, %vm1948
  %v1950 = vsel %vm1949, 1, 0
  %v1951 = vcvt.s32.f32 %v1950
  %v1952 = vmul.f32 %v1900, %v1951
  %v1953 = vmul.f32 %v1903, %v1951
  %v1954 = vmul.f32 %v1906, %v1951
  %v1955 = vmul.f32 %v1909, %v1951
  %v1956 = vmul.f32 %v1912, %v1951
  %v1957 = vmul.f32 %v1915, %v1951
  %v1958 = vmul.f32 %v1918, %v1951
  %v1959 = vmul.f32 %v1921, %v1951
  %v1960 = vmul.f32 %v1924, %v1951
  %v1961 = vmul.f32 %v1927, %v1951
  %v1962 = vmul.f32 %v1930, %v1951
  %v1963 = vmul.f32 %v1933, %v1951
  %v1964 = vmul.f32 %v1936, %v1951
  %v1965 = vmul.f32 %v1939, %v1951
  %v1966 = vmul.f32 %v1942, %v1951
  %v1967 = vmul.f32 %v1945, %v1951
  %v1968 = vadd.f32 %v1545, %v1952
  %v1969 = vadd.f32 %v1546, %v1953
  %v1970 = vadd.f32 %v1547, %v1954
  %v1971 = vadd.f32 %v1548, %v1955
  %v1972 = vadd.f32 %v1549, %v1956
  %v1973 = vadd.f32 %v1550, %v1957
  %v1974 = vadd.f32 %v1551, %v1958
  %v1975 = vadd.f32 %v1552, %v1959
  %v1976 = vadd.f32 %v1553, %v1960
  %v1977 = vadd.f32 %v1554, %v1961
  %v1978 = vadd.f32 %v1555, %v1962
  %v1979 = vadd.f32 %v1556, %v1963
  %v1980 = vadd.f32 %v1557, %v1964
  %v1981 = vadd.f32 %v1558, %v1965
  %v1982 = vadd.f32 %v1559, %v1966
  %v1983 = vadd.f32 %v1560, %v1967
  %1985 = vset.pattern.permute.xlu0 0
  %1986 = vperm.xlu0 %1985, %v96
  %v1987 = vpop.permute.xlu0 %1986
  %1990 = vset.pattern.permute.xlu0 0
  %1991 = vperm.xlu0 %1990, %v97
  %v1992 = vpop.permute.xlu0 %1991
  %1995 = vset.pattern.permute.xlu0 0
  %1996 = vperm.xlu0 %1995, %v98
  %v1997 = vpop.permute.xlu0 %1996
  %2000 = vset.pattern.permute.xlu0 0
  %2001 = vperm.xlu0 %2000, %v99
  %v2002 = vpop.permute.xlu0 %2001
  %2005 = vset.pattern.permute.xlu0 0
  %2006 = vperm.xlu0 %2005, %v100
  %v2007 = vpop.permute.xlu0 %2006
  %2010 = vset.pattern.permute.xlu0 0
  %2011 = vperm.xlu0 %2010, %v101
  %v2012 = vpop.permute.xlu0 %2011
  %2015 = vset.pattern.permute.xlu0 0
  %2016 = vperm.xlu0 %2015, %v102
  %v2017 = vpop.permute.xlu0 %2016
  %2020 = vset.pattern.permute.xlu0 0
  %2021 = vperm.xlu0 %2020, %v103
  %v2022 = vpop.permute.xlu0 %2021
  %2025 = vset.pattern.permute.xlu0 0
  %2026 = vperm.xlu0 %2025, %v104
  %v2027 = vpop.permute.xlu0 %2026
  %2030 = vset.pattern.permute.xlu0 0
  %2031 = vperm.xlu0 %2030, %v105
  %v2032 = vpop.permute.xlu0 %2031
  %2035 = vset.pattern.permute.xlu0 0
  %2036 = vperm.xlu0 %2035, %v106
  %v2037 = vpop.permute.xlu0 %2036
  %2040 = vset.pattern.permute.xlu0 0
  %2041 = vperm.xlu0 %2040, %v107
  %v2042 = vpop.permute.xlu0 %2041
  %2045 = vset.pattern.permute.xlu0 0
  %2046 = vperm.xlu0 %2045, %v108
  %v2047 = vpop.permute.xlu0 %2046
  %2050 = vset.pattern.permute.xlu0 0
  %2051 = vperm.xlu0 %2050, %v109
  %v2052 = vpop.permute.xlu0 %2051
  %2055 = vset.pattern.permute.xlu0 0
  %2056 = vperm.xlu0 %2055, %v110
  %v2057 = vpop.permute.xlu0 %2056
  %2060 = vset.pattern.permute.xlu0 0
  %2061 = vperm.xlu0 %2060, %v111
  %v2062 = vpop.permute.xlu0 %2061
  %v2064 = vmul.f32 %v1968, %v1987
  %v2065 = vmul.f32 %v1969, %v1992
  %v2066 = vmul.f32 %v1970, %v1997
  %v2067 = vmul.f32 %v1971, %v2002
  %v2068 = vmul.f32 %v1972, %v2007
  %v2069 = vmul.f32 %v1973, %v2012
  %v2070 = vmul.f32 %v1974, %v2017
  %v2071 = vmul.f32 %v1975, %v2022
  %v2072 = vmul.f32 %v1976, %v2027
  %v2073 = vmul.f32 %v1977, %v2032
  %v2074 = vmul.f32 %v1978, %v2037
  %v2075 = vmul.f32 %v1979, %v2042
  %v2076 = vmul.f32 %v1980, %v2047
  %v2077 = vmul.f32 %v1981, %v2052
  %v2078 = vmul.f32 %v1982, %v2057
  %v2079 = vmul.f32 %v1983, %v2062
  %vm2080 = vcmp.gt.f32.partialorder %v2064, 0.0
  %vm2081 = vcmp.gt.f32.partialorder %v2065, 0.0
  %vm2082 = vcmp.gt.f32.partialorder %v2066, 0.0
  %vm2083 = vcmp.gt.f32.partialorder %v2067, 0.0
  %vm2084 = vcmp.gt.f32.partialorder %v2068, 0.0
  %vm2085 = vcmp.gt.f32.partialorder %v2069, 0.0
  %vm2086 = vcmp.gt.f32.partialorder %v2070, 0.0
  %vm2087 = vcmp.gt.f32.partialorder %v2071, 0.0
  %vm2088 = vcmp.gt.f32.partialorder %v2072, 0.0
  %vm2089 = vcmp.gt.f32.partialorder %v2073, 0.0
  %vm2090 = vcmp.gt.f32.partialorder %v2074, 0.0
  %vm2091 = vcmp.gt.f32.partialorder %v2075, 0.0
  %vm2092 = vcmp.gt.f32.partialorder %v2076, 0.0
  %vm2093 = vcmp.gt.f32.partialorder %v2077, 0.0
  %vm2094 = vcmp.gt.f32.partialorder %v2078, 0.0
  %vm2095 = vcmp.gt.f32.partialorder %v2079, 0.0
  %v2096 = vmin.f32 %v2064, 0.0
  %v2097 = vmin.f32 %v2065, 0.0
  %v2098 = vmin.f32 %v2066, 0.0
  %v2099 = vmin.f32 %v2067, 0.0
  %v2100 = vmin.f32 %v2068, 0.0
  %v2101 = vmin.f32 %v2069, 0.0
  %v2102 = vmin.f32 %v2070, 0.0
  %v2103 = vmin.f32 %v2071, 0.0
  %v2104 = vmin.f32 %v2072, 0.0
  %v2105 = vmin.f32 %v2073, 0.0
  %v2106 = vmin.f32 %v2074, 0.0
  %v2107 = vmin.f32 %v2075, 0.0
  %v2108 = vmin.f32 %v2076, 0.0
  %v2109 = vmin.f32 %v2077, 0.0
  %v2110 = vmin.f32 %v2078, 0.0
  %v2111 = vmin.f32 %v2079, 0.0
  %v2112 = vmul.f32 %v2096, 1.442695
  %v2113 = vpow.pop %v2112
  %v2114 = vmul.f32 %v2097, 1.442695
  %v2115 = vpow.pop %v2114
  %v2116 = vmul.f32 %v2098, 1.442695
  %v2117 = vpow.pop %v2116
  %v2118 = vmul.f32 %v2099, 1.442695
  %v2119 = vpow.pop %v2118
  %v2120 = vmul.f32 %v2100, 1.442695
  %v2121 = vpow.pop %v2120
  %v2122 = vmul.f32 %v2101, 1.442695
  %v2123 = vpow.pop %v2122
  %v2124 = vmul.f32 %v2102, 1.442695
  %v2125 = vpow.pop %v2124
  %v2126 = vmul.f32 %v2103, 1.442695
  %v2127 = vpow.pop %v2126
  %v2128 = vmul.f32 %v2104, 1.442695
  %v2129 = vpow.pop %v2128
  %v2130 = vmul.f32 %v2105, 1.442695
  %v2131 = vpow.pop %v2130
  %v2132 = vmul.f32 %v2106, 1.442695
  %v2133 = vpow.pop %v2132
  %v2134 = vmul.f32 %v2107, 1.442695
  %v2135 = vpow.pop %v2134
  %v2136 = vmul.f32 %v2108, 1.442695
  %v2137 = vpow.pop %v2136
  %v2138 = vmul.f32 %v2109, 1.442695
  %v2139 = vpow.pop %v2138
  %v2140 = vmul.f32 %v2110, 1.442695
  %v2141 = vpow.pop %v2140
  %v2142 = vmul.f32 %v2111, 1.442695
  %v2143 = vpow.pop %v2142
  %v2144 = vsub.f32 %v2113, 1.0
  %v2145 = vsub.f32 %v2115, 1.0
  %v2146 = vsub.f32 %v2117, 1.0
  %v2147 = vsub.f32 %v2119, 1.0
  %v2148 = vsub.f32 %v2121, 1.0
  %v2149 = vsub.f32 %v2123, 1.0
  %v2150 = vsub.f32 %v2125, 1.0
  %v2151 = vsub.f32 %v2127, 1.0
  %v2152 = vsub.f32 %v2129, 1.0
  %v2153 = vsub.f32 %v2131, 1.0
  %v2154 = vsub.f32 %v2133, 1.0
  %v2155 = vsub.f32 %v2135, 1.0
  %v2156 = vsub.f32 %v2137, 1.0
  %v2157 = vsub.f32 %v2139, 1.0
  %v2158 = vsub.f32 %v2141, 1.0
  %v2159 = vsub.f32 %v2143, 1.0
  %v2160 = vsel %vm2080, %v2064, %v2144
  %v2161 = vsel %vm2081, %v2065, %v2145
  %v2162 = vsel %vm2082, %v2066, %v2146
  %v2163 = vsel %vm2083, %v2067, %v2147
  %v2164 = vsel %vm2084, %v2068, %v2148
  %v2165 = vsel %vm2085, %v2069, %v2149
  %v2166 = vsel %vm2086, %v2070, %v2150
  %v2167 = vsel %vm2087, %v2071, %v2151
  %v2168 = vsel %vm2088, %v2072, %v2152
  %v2169 = vsel %vm2089, %v2073, %v2153
  %v2170 = vsel %vm2090, %v2074, %v2154
  %v2171 = vsel %vm2091, %v2075, %v2155
  %v2172 = vsel %vm2092, %v2076, %v2156
  %v2173 = vsel %vm2093, %v2077, %v2157
  %v2174 = vsel %vm2094, %v2078, %v2158
  %v2175 = vsel %vm2095, %v2079, %v2159
  %v2176 = vld [vmem:[%s5] sm:$0xff]
  %v2177 = vld [vmem:[%s5 + $0x8] sm:$0xff]
  %v2178 = vld [vmem:[%s5 + $0x10] sm:$0xff]
  %v2179 = vld [vmem:[%s5 + $0x18] sm:$0xff]
  %v2180 = vld [vmem:[%s5 + $0x20] sm:$0xff]
  %v2181 = vld [vmem:[%s5 + $0x28] sm:$0xff]
  %v2182 = vld [vmem:[%s5 + $0x30] sm:$0xff]
  %v2183 = vld [vmem:[%s5 + $0x38] sm:$0xff]
  %v2184 = vld [vmem:[%s6] sm:$0xf]
  %v2186 = vsel %vm137, %v2160, 0
  %v2189 = vsel %vm137, %v2161, 0
  %v2192 = vsel %vm137, %v2162, 0
  %v2195 = vsel %vm137, %v2163, 0
  %v2198 = vsel %vm137, %v2164, 0
  %v2201 = vsel %vm137, %v2165, 0
  %v2204 = vsel %vm137, %v2166, 0
  %v2207 = vsel %vm137, %v2167, 0
  %v2210 = vsel %vm137, %v2168, 0
  %v2213 = vsel %vm137, %v2169, 0
  %v2216 = vsel %vm137, %v2170, 0
  %v2219 = vsel %vm137, %v2171, 0
  %v2222 = vsel %vm137, %v2172, 0
  %v2225 = vsel %vm137, %v2173, 0
  %v2228 = vsel %vm137, %v2174, 0
  %v2231 = vsel %vm137, %v2175, 0
  %2233 = vmatpush.msra.mxu0 0.0
  %2234 = vmatpush.msra.mxu0 0.0
  %2235 = vmatpush.msra.mxu0 0.0
  %2236 = vmatpush.msra.mxu0 0.0
  %2237 = vmatpush.msra.mxu0 0.0
  %2238 = vmatpush.msra.mxu0 0.0
  %2239 = vmatpush.msra.mxu0 0.0
  %2240 = vmatpush.msra.mxu0 0.0
  %2241 = vmatpush.msra.mxu0 %v2183
  %2242 = vmatpush.msra.mxu0 %v2182
  %2243 = vmatpush.msra.mxu0 %v2181
  %2244 = vmatpush.msra.mxu0 %v2180
  %2245 = vmatpush.msra.mxu0 %v2179
  %2246 = vmatpush.msra.mxu0 %v2178
  %2247 = vmatpush.msra.mxu0 %v2177
  %2248 = vmatpush.msra.mxu0 %v2176
  %2249 = vmatmul.f32.gmra.mxu0 %v2186
  %v2250 = vpop.f32.mrf.mxu0
  %v2251 = vadd.f32 0.0, %v2250
  %2252 = vmatmul.f32.gmra.mxu0 %v2189
  %v2253 = vpop.f32.mrf.mxu0
  %v2254 = vadd.f32 0.0, %v2253
  %2255 = vmatmul.f32.gmra.mxu0 %v2192
  %v2256 = vpop.f32.mrf.mxu0
  %v2257 = vadd.f32 0.0, %v2256
  %2258 = vmatmul.f32.gmra.mxu0 %v2195
  %v2259 = vpop.f32.mrf.mxu0
  %v2260 = vadd.f32 0.0, %v2259
  %2261 = vmatmul.f32.gmra.mxu0 %v2198
  %v2262 = vpop.f32.mrf.mxu0
  %v2263 = vadd.f32 0.0, %v2262
  %2264 = vmatmul.f32.gmra.mxu0 %v2201
  %v2265 = vpop.f32.mrf.mxu0
  %v2266 = vadd.f32 0.0, %v2265
  %2267 = vmatmul.f32.gmra.mxu0 %v2204
  %v2268 = vpop.f32.mrf.mxu0
  %v2269 = vadd.f32 0.0, %v2268
  %2270 = vmatmul.f32.gmra.mxu0 %v2207
  %v2271 = vpop.f32.mrf.mxu0
  %v2272 = vadd.f32 0.0, %v2271
  %2273 = vmatmul.f32.gmra.mxu0 %v2210
  %v2274 = vpop.f32.mrf.mxu0
  %v2275 = vadd.f32 0.0, %v2274
  %2276 = vmatmul.f32.gmra.mxu0 %v2213
  %v2277 = vpop.f32.mrf.mxu0
  %v2278 = vadd.f32 0.0, %v2277
  %2279 = vmatmul.f32.gmra.mxu0 %v2216
  %v2280 = vpop.f32.mrf.mxu0
  %v2281 = vadd.f32 0.0, %v2280
  %2282 = vmatmul.f32.gmra.mxu0 %v2219
  %v2283 = vpop.f32.mrf.mxu0
  %v2284 = vadd.f32 0.0, %v2283
  %2285 = vmatmul.f32.gmra.mxu0 %v2222
  %v2286 = vpop.f32.mrf.mxu0
  %v2287 = vadd.f32 0.0, %v2286
  %2288 = vmatmul.f32.gmra.mxu0 %v2225
  %v2289 = vpop.f32.mrf.mxu0
  %v2290 = vadd.f32 0.0, %v2289
  %2291 = vmatmul.f32.gmra.mxu0 %v2228
  %v2292 = vpop.f32.mrf.mxu0
  %v2293 = vadd.f32 0.0, %v2292
  %2294 = vmatmul.f32.gmra.mxu0 %v2231
  %v2295 = vpop.f32.mrf.mxu0
  %v2296 = vadd.f32 0.0, %v2295
  %2297 = vdwg.mxu0
  %v2299 = vsel %vm137, %v2184, 0
  %2301 = vmatpush.xpose.msra.mxu0 %v2231
  %2302 = vmatpush.xpose.msra.mxu0 %v2228
  %2303 = vmatpush.xpose.msra.mxu0 %v2225
  %2304 = vmatpush.xpose.msra.mxu0 %v2222
  %2305 = vmatpush.xpose.msra.mxu0 %v2219
  %2306 = vmatpush.xpose.msra.mxu0 %v2216
  %2307 = vmatpush.xpose.msra.mxu0 %v2213
  %2308 = vmatpush.xpose.msra.mxu0 %v2210
  %2309 = vmatpush.xpose.msra.mxu0 %v2207
  %2310 = vmatpush.xpose.msra.mxu0 %v2204
  %2311 = vmatpush.xpose.msra.mxu0 %v2201
  %2312 = vmatpush.xpose.msra.mxu0 %v2198
  %2313 = vmatpush.xpose.msra.mxu0 %v2195
  %2314 = vmatpush.xpose.msra.mxu0 %v2192
  %2315 = vmatpush.xpose.msra.mxu0 %v2189
  %2316 = vmatpush.xpose.msra.mxu0 %v2186
  %2317 = vmatmul.f32.gmra.mxu0 %v2299
  %v2318 = vpop.f32.mrf.mxu0
  %v2319 = vadd.f32 0.0, %v2318
  %2320 = vdwg.mxu0
  %2322 = vset.pattern.permute.xlu0 64
  %2323 = vperm.xlu0 %2322, %v2251
  %v2324 = vpop.permute.xlu0 %2323
  %2327 = vset.pattern.permute.xlu0 64
  %2328 = vperm.xlu0 %2327, %v2254
  %v2329 = vpop.permute.xlu0 %2328
  %2332 = vset.pattern.permute.xlu0 64
  %2333 = vperm.xlu0 %2332, %v2257
  %v2334 = vpop.permute.xlu0 %2333
  %2337 = vset.pattern.permute.xlu0 64
  %2338 = vperm.xlu0 %2337, %v2260
  %v2339 = vpop.permute.xlu0 %2338
  %2342 = vset.pattern.permute.xlu0 64
  %2343 = vperm.xlu0 %2342, %v2263
  %v2344 = vpop.permute.xlu0 %2343
  %2347 = vset.pattern.permute.xlu0 64
  %2348 = vperm.xlu0 %2347, %v2266
  %v2349 = vpop.permute.xlu0 %2348
  %2352 = vset.pattern.permute.xlu0 64
  %2353 = vperm.xlu0 %2352, %v2269
  %v2354 = vpop.permute.xlu0 %2353
  %2357 = vset.pattern.permute.xlu0 64
  %2358 = vperm.xlu0 %2357, %v2272
  %v2359 = vpop.permute.xlu0 %2358
  %2362 = vset.pattern.permute.xlu0 64
  %2363 = vperm.xlu0 %2362, %v2275
  %v2364 = vpop.permute.xlu0 %2363
  %2367 = vset.pattern.permute.xlu0 64
  %2368 = vperm.xlu0 %2367, %v2278
  %v2369 = vpop.permute.xlu0 %2368
  %2372 = vset.pattern.permute.xlu0 64
  %2373 = vperm.xlu0 %2372, %v2281
  %v2374 = vpop.permute.xlu0 %2373
  %2377 = vset.pattern.permute.xlu0 64
  %2378 = vperm.xlu0 %2377, %v2284
  %v2379 = vpop.permute.xlu0 %2378
  %2382 = vset.pattern.permute.xlu0 64
  %2383 = vperm.xlu0 %2382, %v2287
  %v2384 = vpop.permute.xlu0 %2383
  %2387 = vset.pattern.permute.xlu0 64
  %2388 = vperm.xlu0 %2387, %v2290
  %v2389 = vpop.permute.xlu0 %2388
  %2392 = vset.pattern.permute.xlu0 64
  %2393 = vperm.xlu0 %2392, %v2293
  %v2394 = vpop.permute.xlu0 %2393
  %2397 = vset.pattern.permute.xlu0 64
  %2398 = vperm.xlu0 %2397, %v2296
  %v2399 = vpop.permute.xlu0 %2398
  %v2401 = vperm.slane %v2319, 0
  %v2402 = vadd.f32 %v2324, %v2401
  %v2403 = vadd.f32 %v2329, %v2401
  %v2404 = vadd.f32 %v2334, %v2401
  %v2405 = vadd.f32 %v2339, %v2401
  %v2406 = vadd.f32 %v2344, %v2401
  %v2407 = vadd.f32 %v2349, %v2401
  %v2408 = vadd.f32 %v2354, %v2401
  %v2409 = vadd.f32 %v2359, %v2401
  %v2410 = vadd.f32 %v2364, %v2401
  %v2411 = vadd.f32 %v2369, %v2401
  %v2412 = vadd.f32 %v2374, %v2401
  %v2413 = vadd.f32 %v2379, %v2401
  %v2414 = vadd.f32 %v2384, %v2401
  %v2415 = vadd.f32 %v2389, %v2401
  %v2416 = vadd.f32 %v2394, %v2401
  %v2417 = vadd.f32 %v2399, %v2401
  %vm2418 = vcmp.gt.f32.partialorder %v2402, 0.0
  %vm2419 = vcmp.gt.f32.partialorder %v2403, 0.0
  %vm2420 = vcmp.gt.f32.partialorder %v2404, 0.0
  %vm2421 = vcmp.gt.f32.partialorder %v2405, 0.0
  %vm2422 = vcmp.gt.f32.partialorder %v2406, 0.0
  %vm2423 = vcmp.gt.f32.partialorder %v2407, 0.0
  %vm2424 = vcmp.gt.f32.partialorder %v2408, 0.0
  %vm2425 = vcmp.gt.f32.partialorder %v2409, 0.0
  %vm2426 = vcmp.gt.f32.partialorder %v2410, 0.0
  %vm2427 = vcmp.gt.f32.partialorder %v2411, 0.0
  %vm2428 = vcmp.gt.f32.partialorder %v2412, 0.0
  %vm2429 = vcmp.gt.f32.partialorder %v2413, 0.0
  %vm2430 = vcmp.gt.f32.partialorder %v2414, 0.0
  %vm2431 = vcmp.gt.f32.partialorder %v2415, 0.0
  %vm2432 = vcmp.gt.f32.partialorder %v2416, 0.0
  %vm2433 = vcmp.gt.f32.partialorder %v2417, 0.0
  %v2434 = vmul.f32 %v2402, 0.2
  %v2435 = vmul.f32 %v2403, 0.2
  %v2436 = vmul.f32 %v2404, 0.2
  %v2437 = vmul.f32 %v2405, 0.2
  %v2438 = vmul.f32 %v2406, 0.2
  %v2439 = vmul.f32 %v2407, 0.2
  %v2440 = vmul.f32 %v2408, 0.2
  %v2441 = vmul.f32 %v2409, 0.2
  %v2442 = vmul.f32 %v2410, 0.2
  %v2443 = vmul.f32 %v2411, 0.2
  %v2444 = vmul.f32 %v2412, 0.2
  %v2445 = vmul.f32 %v2413, 0.2
  %v2446 = vmul.f32 %v2414, 0.2
  %v2447 = vmul.f32 %v2415, 0.2
  %v2448 = vmul.f32 %v2416, 0.2
  %v2449 = vmul.f32 %v2417, 0.2
  %v2450 = vsel %vm2418, %v2402, %v2434
  %v2451 = vsel %vm2419, %v2403, %v2435
  %v2452 = vsel %vm2420, %v2404, %v2436
  %v2453 = vsel %vm2421, %v2405, %v2437
  %v2454 = vsel %vm2422, %v2406, %v2438
  %v2455 = vsel %vm2423, %v2407, %v2439
  %v2456 = vsel %vm2424, %v2408, %v2440
  %v2457 = vsel %vm2425, %v2409, %v2441
  %v2458 = vsel %vm2426, %v2410, %v2442
  %v2459 = vsel %vm2427, %v2411, %v2443
  %v2460 = vsel %vm2428, %v2412, %v2444
  %v2461 = vsel %vm2429, %v2413, %v2445
  %v2462 = vsel %vm2430, %v2414, %v2446
  %v2463 = vsel %vm2431, %v2415, %v2447
  %v2464 = vsel %vm2432, %v2416, %v2448
  %v2465 = vsel %vm2433, %v2417, %v2449
  %v2466 = vsel %vm48, %v2450, -1e+30
  %v2467 = vsel %vm49, %v2451, -1e+30
  %v2468 = vsel %vm50, %v2452, -1e+30
  %v2469 = vsel %vm51, %v2453, -1e+30
  %v2470 = vsel %vm52, %v2454, -1e+30
  %v2471 = vsel %vm53, %v2455, -1e+30
  %v2472 = vsel %vm54, %v2456, -1e+30
  %v2473 = vsel %vm55, %v2457, -1e+30
  %v2474 = vsel %vm56, %v2458, -1e+30
  %v2475 = vsel %vm57, %v2459, -1e+30
  %v2476 = vsel %vm58, %v2460, -1e+30
  %v2477 = vsel %vm59, %v2461, -1e+30
  %v2478 = vsel %vm60, %v2462, -1e+30
  %v2479 = vsel %vm61, %v2463, -1e+30
  %v2480 = vsel %vm62, %v2464, -1e+30
  %v2481 = vsel %vm63, %v2465, -1e+30
  %2482 = vmax.xlane.f32.xlu0 %v2466
  %v2483 = vpop.xlane.xlu0 %2482
  %2484 = vmax.xlane.f32.xlu0 %v2467
  %v2485 = vpop.xlane.xlu0 %2484
  %2486 = vmax.xlane.f32.xlu0 %v2468
  %v2487 = vpop.xlane.xlu0 %2486
  %2488 = vmax.xlane.f32.xlu0 %v2469
  %v2489 = vpop.xlane.xlu0 %2488
  %2490 = vmax.xlane.f32.xlu0 %v2470
  %v2491 = vpop.xlane.xlu0 %2490
  %2492 = vmax.xlane.f32.xlu0 %v2471
  %v2493 = vpop.xlane.xlu0 %2492
  %2494 = vmax.xlane.f32.xlu0 %v2472
  %v2495 = vpop.xlane.xlu0 %2494
  %2496 = vmax.xlane.f32.xlu0 %v2473
  %v2497 = vpop.xlane.xlu0 %2496
  %2498 = vmax.xlane.f32.xlu0 %v2474
  %v2499 = vpop.xlane.xlu0 %2498
  %2500 = vmax.xlane.f32.xlu0 %v2475
  %v2501 = vpop.xlane.xlu0 %2500
  %2502 = vmax.xlane.f32.xlu0 %v2476
  %v2503 = vpop.xlane.xlu0 %2502
  %2504 = vmax.xlane.f32.xlu0 %v2477
  %v2505 = vpop.xlane.xlu0 %2504
  %2506 = vmax.xlane.f32.xlu0 %v2478
  %v2507 = vpop.xlane.xlu0 %2506
  %2508 = vmax.xlane.f32.xlu0 %v2479
  %v2509 = vpop.xlane.xlu0 %2508
  %2510 = vmax.xlane.f32.xlu0 %v2480
  %v2511 = vpop.xlane.xlu0 %2510
  %2512 = vmax.xlane.f32.xlu0 %v2481
  %v2513 = vpop.xlane.xlu0 %2512
  %v2514 = vsub.f32 %v2466, %v2483
  %v2515 = vsub.f32 %v2467, %v2485
  %v2516 = vsub.f32 %v2468, %v2487
  %v2517 = vsub.f32 %v2469, %v2489
  %v2518 = vsub.f32 %v2470, %v2491
  %v2519 = vsub.f32 %v2471, %v2493
  %v2520 = vsub.f32 %v2472, %v2495
  %v2521 = vsub.f32 %v2473, %v2497
  %v2522 = vsub.f32 %v2474, %v2499
  %v2523 = vsub.f32 %v2475, %v2501
  %v2524 = vsub.f32 %v2476, %v2503
  %v2525 = vsub.f32 %v2477, %v2505
  %v2526 = vsub.f32 %v2478, %v2507
  %v2527 = vsub.f32 %v2479, %v2509
  %v2528 = vsub.f32 %v2480, %v2511
  %v2529 = vsub.f32 %v2481, %v2513
  %v2530 = vmul.f32 %v2514, 1.442695
  %v2531 = vpow.pop %v2530
  %v2532 = vmul.f32 %v2515, 1.442695
  %v2533 = vpow.pop %v2532
  %v2534 = vmul.f32 %v2516, 1.442695
  %v2535 = vpow.pop %v2534
  %v2536 = vmul.f32 %v2517, 1.442695
  %v2537 = vpow.pop %v2536
  %v2538 = vmul.f32 %v2518, 1.442695
  %v2539 = vpow.pop %v2538
  %v2540 = vmul.f32 %v2519, 1.442695
  %v2541 = vpow.pop %v2540
  %v2542 = vmul.f32 %v2520, 1.442695
  %v2543 = vpow.pop %v2542
  %v2544 = vmul.f32 %v2521, 1.442695
  %v2545 = vpow.pop %v2544
  %v2546 = vmul.f32 %v2522, 1.442695
  %v2547 = vpow.pop %v2546
  %v2548 = vmul.f32 %v2523, 1.442695
  %v2549 = vpow.pop %v2548
  %v2550 = vmul.f32 %v2524, 1.442695
  %v2551 = vpow.pop %v2550
  %v2552 = vmul.f32 %v2525, 1.442695
  %v2553 = vpow.pop %v2552
  %v2554 = vmul.f32 %v2526, 1.442695
  %v2555 = vpow.pop %v2554
  %v2556 = vmul.f32 %v2527, 1.442695
  %v2557 = vpow.pop %v2556
  %v2558 = vmul.f32 %v2528, 1.442695
  %v2559 = vpow.pop %v2558
  %v2560 = vmul.f32 %v2529, 1.442695
  %v2561 = vpow.pop %v2560
  %v2562 = vmul.f32 %v2531, %v80
  %v2563 = vmul.f32 %v2533, %v81
  %v2564 = vmul.f32 %v2535, %v82
  %v2565 = vmul.f32 %v2537, %v83
  %v2566 = vmul.f32 %v2539, %v84
  %v2567 = vmul.f32 %v2541, %v85
  %v2568 = vmul.f32 %v2543, %v86
  %v2569 = vmul.f32 %v2545, %v87
  %v2570 = vmul.f32 %v2547, %v88
  %v2571 = vmul.f32 %v2549, %v89
  %v2572 = vmul.f32 %v2551, %v90
  %v2573 = vmul.f32 %v2553, %v91
  %v2574 = vmul.f32 %v2555, %v92
  %v2575 = vmul.f32 %v2557, %v93
  %v2576 = vmul.f32 %v2559, %v94
  %v2577 = vmul.f32 %v2561, %v95
  %2578 = vadd.xlane.f32.xlu0 %v2562
  %v2579 = vpop.xlane.xlu0 %2578
  %2580 = vadd.xlane.f32.xlu0 %v2563
  %v2581 = vpop.xlane.xlu0 %2580
  %2582 = vadd.xlane.f32.xlu0 %v2564
  %v2583 = vpop.xlane.xlu0 %2582
  %2584 = vadd.xlane.f32.xlu0 %v2565
  %v2585 = vpop.xlane.xlu0 %2584
  %2586 = vadd.xlane.f32.xlu0 %v2566
  %v2587 = vpop.xlane.xlu0 %2586
  %2588 = vadd.xlane.f32.xlu0 %v2567
  %v2589 = vpop.xlane.xlu0 %2588
  %2590 = vadd.xlane.f32.xlu0 %v2568
  %v2591 = vpop.xlane.xlu0 %2590
  %2592 = vadd.xlane.f32.xlu0 %v2569
  %v2593 = vpop.xlane.xlu0 %2592
  %2594 = vadd.xlane.f32.xlu0 %v2570
  %v2595 = vpop.xlane.xlu0 %2594
  %2596 = vadd.xlane.f32.xlu0 %v2571
  %v2597 = vpop.xlane.xlu0 %2596
  %2598 = vadd.xlane.f32.xlu0 %v2572
  %v2599 = vpop.xlane.xlu0 %2598
  %2600 = vadd.xlane.f32.xlu0 %v2573
  %v2601 = vpop.xlane.xlu0 %2600
  %2602 = vadd.xlane.f32.xlu0 %v2574
  %v2603 = vpop.xlane.xlu0 %2602
  %2604 = vadd.xlane.f32.xlu0 %v2575
  %v2605 = vpop.xlane.xlu0 %2604
  %2606 = vadd.xlane.f32.xlu0 %v2576
  %v2607 = vpop.xlane.xlu0 %2606
  %2608 = vadd.xlane.f32.xlu0 %v2577
  %v2609 = vpop.xlane.xlu0 %2608
  %v2610 = vmax.f32 %v2579, 1e-30
  %v2611 = vmax.f32 %v2581, 1e-30
  %v2612 = vmax.f32 %v2583, 1e-30
  %v2613 = vmax.f32 %v2585, 1e-30
  %v2614 = vmax.f32 %v2587, 1e-30
  %v2615 = vmax.f32 %v2589, 1e-30
  %v2616 = vmax.f32 %v2591, 1e-30
  %v2617 = vmax.f32 %v2593, 1e-30
  %v2618 = vmax.f32 %v2595, 1e-30
  %v2619 = vmax.f32 %v2597, 1e-30
  %v2620 = vmax.f32 %v2599, 1e-30
  %v2621 = vmax.f32 %v2601, 1e-30
  %v2622 = vmax.f32 %v2603, 1e-30
  %v2623 = vmax.f32 %v2605, 1e-30
  %v2624 = vmax.f32 %v2607, 1e-30
  %v2625 = vmax.f32 %v2609, 1e-30
  %v2626 = vrcp.pop %v2610
  %v2627 = vrcp.pop %v2611
  %v2628 = vrcp.pop %v2612
  %v2629 = vrcp.pop %v2613
  %v2630 = vrcp.pop %v2614
  %v2631 = vrcp.pop %v2615
  %v2632 = vrcp.pop %v2616
  %v2633 = vrcp.pop %v2617
  %v2634 = vrcp.pop %v2618
  %v2635 = vrcp.pop %v2619
  %v2636 = vrcp.pop %v2620
  %v2637 = vrcp.pop %v2621
  %v2638 = vrcp.pop %v2622
  %v2639 = vrcp.pop %v2623
  %v2640 = vrcp.pop %v2624
  %v2641 = vrcp.pop %v2625
  %v2642 = vmul.f32 %v2562, %v2626
  %v2643 = vmul.f32 %v2563, %v2627
  %v2644 = vmul.f32 %v2564, %v2628
  %v2645 = vmul.f32 %v2565, %v2629
  %v2646 = vmul.f32 %v2566, %v2630
  %v2647 = vmul.f32 %v2567, %v2631
  %v2648 = vmul.f32 %v2568, %v2632
  %v2649 = vmul.f32 %v2569, %v2633
  %v2650 = vmul.f32 %v2570, %v2634
  %v2651 = vmul.f32 %v2571, %v2635
  %v2652 = vmul.f32 %v2572, %v2636
  %v2653 = vmul.f32 %v2573, %v2637
  %v2654 = vmul.f32 %v2574, %v2638
  %v2655 = vmul.f32 %v2575, %v2639
  %v2656 = vmul.f32 %v2576, %v2640
  %v2657 = vmul.f32 %v2577, %v2641
  %2658 = vmatpush.msra.mxu0 %v2296
  %2659 = vmatpush.msra.mxu0 %v2293
  %2660 = vmatpush.msra.mxu0 %v2290
  %2661 = vmatpush.msra.mxu0 %v2287
  %2662 = vmatpush.msra.mxu0 %v2284
  %2663 = vmatpush.msra.mxu0 %v2281
  %2664 = vmatpush.msra.mxu0 %v2278
  %2665 = vmatpush.msra.mxu0 %v2275
  %2666 = vmatpush.msra.mxu0 %v2272
  %2667 = vmatpush.msra.mxu0 %v2269
  %2668 = vmatpush.msra.mxu0 %v2266
  %2669 = vmatpush.msra.mxu0 %v2263
  %2670 = vmatpush.msra.mxu0 %v2260
  %2671 = vmatpush.msra.mxu0 %v2257
  %2672 = vmatpush.msra.mxu0 %v2254
  %2673 = vmatpush.msra.mxu0 %v2251
  %2674 = vmatmul.f32.gmra.mxu0 %v2642
  %v2675 = vpop.f32.mrf.mxu0
  %v2676 = vadd.f32 0.0, %v2675
  %2677 = vmatmul.f32.gmra.mxu0 %v2643
  %v2678 = vpop.f32.mrf.mxu0
  %v2679 = vadd.f32 0.0, %v2678
  %2680 = vmatmul.f32.gmra.mxu0 %v2644
  %v2681 = vpop.f32.mrf.mxu0
  %v2682 = vadd.f32 0.0, %v2681
  %2683 = vmatmul.f32.gmra.mxu0 %v2645
  %v2684 = vpop.f32.mrf.mxu0
  %v2685 = vadd.f32 0.0, %v2684
  %2686 = vmatmul.f32.gmra.mxu0 %v2646
  %v2687 = vpop.f32.mrf.mxu0
  %v2688 = vadd.f32 0.0, %v2687
  %2689 = vmatmul.f32.gmra.mxu0 %v2647
  %v2690 = vpop.f32.mrf.mxu0
  %v2691 = vadd.f32 0.0, %v2690
  %2692 = vmatmul.f32.gmra.mxu0 %v2648
  %v2693 = vpop.f32.mrf.mxu0
  %v2694 = vadd.f32 0.0, %v2693
  %2695 = vmatmul.f32.gmra.mxu0 %v2649
  %v2696 = vpop.f32.mrf.mxu0
  %v2697 = vadd.f32 0.0, %v2696
  %2698 = vmatmul.f32.gmra.mxu0 %v2650
  %v2699 = vpop.f32.mrf.mxu0
  %v2700 = vadd.f32 0.0, %v2699
  %2701 = vmatmul.f32.gmra.mxu0 %v2651
  %v2702 = vpop.f32.mrf.mxu0
  %v2703 = vadd.f32 0.0, %v2702
  %2704 = vmatmul.f32.gmra.mxu0 %v2652
  %v2705 = vpop.f32.mrf.mxu0
  %v2706 = vadd.f32 0.0, %v2705
  %2707 = vmatmul.f32.gmra.mxu0 %v2653
  %v2708 = vpop.f32.mrf.mxu0
  %v2709 = vadd.f32 0.0, %v2708
  %2710 = vmatmul.f32.gmra.mxu0 %v2654
  %v2711 = vpop.f32.mrf.mxu0
  %v2712 = vadd.f32 0.0, %v2711
  %2713 = vmatmul.f32.gmra.mxu0 %v2655
  %v2714 = vpop.f32.mrf.mxu0
  %v2715 = vadd.f32 0.0, %v2714
  %2716 = vmatmul.f32.gmra.mxu0 %v2656
  %v2717 = vpop.f32.mrf.mxu0
  %v2718 = vadd.f32 0.0, %v2717
  %2719 = vmatmul.f32.gmra.mxu0 %v2657
  %v2720 = vpop.f32.mrf.mxu0
  %v2721 = vadd.f32 0.0, %v2720
  %2722 = vdwg.mxu0
  %v2723 = vmul.f32 %v2676, %v682
  %v2724 = vmul.f32 %v2679, %v682
  %v2725 = vmul.f32 %v2682, %v682
  %v2726 = vmul.f32 %v2685, %v682
  %v2727 = vmul.f32 %v2688, %v682
  %v2728 = vmul.f32 %v2691, %v682
  %v2729 = vmul.f32 %v2694, %v682
  %v2730 = vmul.f32 %v2697, %v682
  %v2731 = vmul.f32 %v2700, %v682
  %v2732 = vmul.f32 %v2703, %v682
  %v2733 = vmul.f32 %v2706, %v682
  %v2734 = vmul.f32 %v2709, %v682
  %v2735 = vmul.f32 %v2712, %v682
  %v2736 = vmul.f32 %v2715, %v682
  %v2737 = vmul.f32 %v2718, %v682
  %v2738 = vmul.f32 %v2721, %v682
  %v2739 = vadd.f32 %v2723, 0.0
  %v2740 = vadd.f32 %v2724, 0.0
  %v2741 = vadd.f32 %v2725, 0.0
  %v2742 = vadd.f32 %v2726, 0.0
  %v2743 = vadd.f32 %v2727, 0.0
  %v2744 = vadd.f32 %v2728, 0.0
  %v2745 = vadd.f32 %v2729, 0.0
  %v2746 = vadd.f32 %v2730, 0.0
  %v2747 = vadd.f32 %v2731, 0.0
  %v2748 = vadd.f32 %v2732, 0.0
  %v2749 = vadd.f32 %v2733, 0.0
  %v2750 = vadd.f32 %v2734, 0.0
  %v2751 = vadd.f32 %v2735, 0.0
  %v2752 = vadd.f32 %v2736, 0.0
  %v2753 = vadd.f32 %v2737, 0.0
  %v2754 = vadd.f32 %v2738, 0.0
  %2755 = vset.pattern.permute.xlu0 65
  %2756 = vperm.xlu0 %2755, %v2251
  %v2757 = vpop.permute.xlu0 %2756
  %2759 = vset.pattern.permute.xlu0 65
  %2760 = vperm.xlu0 %2759, %v2254
  %v2761 = vpop.permute.xlu0 %2760
  %2763 = vset.pattern.permute.xlu0 65
  %2764 = vperm.xlu0 %2763, %v2257
  %v2765 = vpop.permute.xlu0 %2764
  %2767 = vset.pattern.permute.xlu0 65
  %2768 = vperm.xlu0 %2767, %v2260
  %v2769 = vpop.permute.xlu0 %2768
  %2771 = vset.pattern.permute.xlu0 65
  %2772 = vperm.xlu0 %2771, %v2263
  %v2773 = vpop.permute.xlu0 %2772
  %2775 = vset.pattern.permute.xlu0 65
  %2776 = vperm.xlu0 %2775, %v2266
  %v2777 = vpop.permute.xlu0 %2776
  %2779 = vset.pattern.permute.xlu0 65
  %2780 = vperm.xlu0 %2779, %v2269
  %v2781 = vpop.permute.xlu0 %2780
  %2783 = vset.pattern.permute.xlu0 65
  %2784 = vperm.xlu0 %2783, %v2272
  %v2785 = vpop.permute.xlu0 %2784
  %2787 = vset.pattern.permute.xlu0 65
  %2788 = vperm.xlu0 %2787, %v2275
  %v2789 = vpop.permute.xlu0 %2788
  %2791 = vset.pattern.permute.xlu0 65
  %2792 = vperm.xlu0 %2791, %v2278
  %v2793 = vpop.permute.xlu0 %2792
  %2795 = vset.pattern.permute.xlu0 65
  %2796 = vperm.xlu0 %2795, %v2281
  %v2797 = vpop.permute.xlu0 %2796
  %2799 = vset.pattern.permute.xlu0 65
  %2800 = vperm.xlu0 %2799, %v2284
  %v2801 = vpop.permute.xlu0 %2800
  %2803 = vset.pattern.permute.xlu0 65
  %2804 = vperm.xlu0 %2803, %v2287
  %v2805 = vpop.permute.xlu0 %2804
  %2807 = vset.pattern.permute.xlu0 65
  %2808 = vperm.xlu0 %2807, %v2290
  %v2809 = vpop.permute.xlu0 %2808
  %2811 = vset.pattern.permute.xlu0 65
  %2812 = vperm.xlu0 %2811, %v2293
  %v2813 = vpop.permute.xlu0 %2812
  %2815 = vset.pattern.permute.xlu0 65
  %2816 = vperm.xlu0 %2815, %v2296
  %v2817 = vpop.permute.xlu0 %2816
  %v2819 = vperm.slane %v2319, 1
  %v2820 = vadd.f32 %v2757, %v2819
  %v2821 = vadd.f32 %v2761, %v2819
  %v2822 = vadd.f32 %v2765, %v2819
  %v2823 = vadd.f32 %v2769, %v2819
  %v2824 = vadd.f32 %v2773, %v2819
  %v2825 = vadd.f32 %v2777, %v2819
  %v2826 = vadd.f32 %v2781, %v2819
  %v2827 = vadd.f32 %v2785, %v2819
  %v2828 = vadd.f32 %v2789, %v2819
  %v2829 = vadd.f32 %v2793, %v2819
  %v2830 = vadd.f32 %v2797, %v2819
  %v2831 = vadd.f32 %v2801, %v2819
  %v2832 = vadd.f32 %v2805, %v2819
  %v2833 = vadd.f32 %v2809, %v2819
  %v2834 = vadd.f32 %v2813, %v2819
  %v2835 = vadd.f32 %v2817, %v2819
  %vm2836 = vcmp.gt.f32.partialorder %v2820, 0.0
  %vm2837 = vcmp.gt.f32.partialorder %v2821, 0.0
  %vm2838 = vcmp.gt.f32.partialorder %v2822, 0.0
  %vm2839 = vcmp.gt.f32.partialorder %v2823, 0.0
  %vm2840 = vcmp.gt.f32.partialorder %v2824, 0.0
  %vm2841 = vcmp.gt.f32.partialorder %v2825, 0.0
  %vm2842 = vcmp.gt.f32.partialorder %v2826, 0.0
  %vm2843 = vcmp.gt.f32.partialorder %v2827, 0.0
  %vm2844 = vcmp.gt.f32.partialorder %v2828, 0.0
  %vm2845 = vcmp.gt.f32.partialorder %v2829, 0.0
  %vm2846 = vcmp.gt.f32.partialorder %v2830, 0.0
  %vm2847 = vcmp.gt.f32.partialorder %v2831, 0.0
  %vm2848 = vcmp.gt.f32.partialorder %v2832, 0.0
  %vm2849 = vcmp.gt.f32.partialorder %v2833, 0.0
  %vm2850 = vcmp.gt.f32.partialorder %v2834, 0.0
  %vm2851 = vcmp.gt.f32.partialorder %v2835, 0.0
  %v2852 = vmul.f32 %v2820, 0.2
  %v2853 = vmul.f32 %v2821, 0.2
  %v2854 = vmul.f32 %v2822, 0.2
  %v2855 = vmul.f32 %v2823, 0.2
  %v2856 = vmul.f32 %v2824, 0.2
  %v2857 = vmul.f32 %v2825, 0.2
  %v2858 = vmul.f32 %v2826, 0.2
  %v2859 = vmul.f32 %v2827, 0.2
  %v2860 = vmul.f32 %v2828, 0.2
  %v2861 = vmul.f32 %v2829, 0.2
  %v2862 = vmul.f32 %v2830, 0.2
  %v2863 = vmul.f32 %v2831, 0.2
  %v2864 = vmul.f32 %v2832, 0.2
  %v2865 = vmul.f32 %v2833, 0.2
  %v2866 = vmul.f32 %v2834, 0.2
  %v2867 = vmul.f32 %v2835, 0.2
  %v2868 = vsel %vm2836, %v2820, %v2852
  %v2869 = vsel %vm2837, %v2821, %v2853
  %v2870 = vsel %vm2838, %v2822, %v2854
  %v2871 = vsel %vm2839, %v2823, %v2855
  %v2872 = vsel %vm2840, %v2824, %v2856
  %v2873 = vsel %vm2841, %v2825, %v2857
  %v2874 = vsel %vm2842, %v2826, %v2858
  %v2875 = vsel %vm2843, %v2827, %v2859
  %v2876 = vsel %vm2844, %v2828, %v2860
  %v2877 = vsel %vm2845, %v2829, %v2861
  %v2878 = vsel %vm2846, %v2830, %v2862
  %v2879 = vsel %vm2847, %v2831, %v2863
  %v2880 = vsel %vm2848, %v2832, %v2864
  %v2881 = vsel %vm2849, %v2833, %v2865
  %v2882 = vsel %vm2850, %v2834, %v2866
  %v2883 = vsel %vm2851, %v2835, %v2867
  %v2884 = vsel %vm48, %v2868, -1e+30
  %v2885 = vsel %vm49, %v2869, -1e+30
  %v2886 = vsel %vm50, %v2870, -1e+30
  %v2887 = vsel %vm51, %v2871, -1e+30
  %v2888 = vsel %vm52, %v2872, -1e+30
  %v2889 = vsel %vm53, %v2873, -1e+30
  %v2890 = vsel %vm54, %v2874, -1e+30
  %v2891 = vsel %vm55, %v2875, -1e+30
  %v2892 = vsel %vm56, %v2876, -1e+30
  %v2893 = vsel %vm57, %v2877, -1e+30
  %v2894 = vsel %vm58, %v2878, -1e+30
  %v2895 = vsel %vm59, %v2879, -1e+30
  %v2896 = vsel %vm60, %v2880, -1e+30
  %v2897 = vsel %vm61, %v2881, -1e+30
  %v2898 = vsel %vm62, %v2882, -1e+30
  %v2899 = vsel %vm63, %v2883, -1e+30
  %2900 = vmax.xlane.f32.xlu0 %v2884
  %v2901 = vpop.xlane.xlu0 %2900
  %2902 = vmax.xlane.f32.xlu0 %v2885
  %v2903 = vpop.xlane.xlu0 %2902
  %2904 = vmax.xlane.f32.xlu0 %v2886
  %v2905 = vpop.xlane.xlu0 %2904
  %2906 = vmax.xlane.f32.xlu0 %v2887
  %v2907 = vpop.xlane.xlu0 %2906
  %2908 = vmax.xlane.f32.xlu0 %v2888
  %v2909 = vpop.xlane.xlu0 %2908
  %2910 = vmax.xlane.f32.xlu0 %v2889
  %v2911 = vpop.xlane.xlu0 %2910
  %2912 = vmax.xlane.f32.xlu0 %v2890
  %v2913 = vpop.xlane.xlu0 %2912
  %2914 = vmax.xlane.f32.xlu0 %v2891
  %v2915 = vpop.xlane.xlu0 %2914
  %2916 = vmax.xlane.f32.xlu0 %v2892
  %v2917 = vpop.xlane.xlu0 %2916
  %2918 = vmax.xlane.f32.xlu0 %v2893
  %v2919 = vpop.xlane.xlu0 %2918
  %2920 = vmax.xlane.f32.xlu0 %v2894
  %v2921 = vpop.xlane.xlu0 %2920
  %2922 = vmax.xlane.f32.xlu0 %v2895
  %v2923 = vpop.xlane.xlu0 %2922
  %2924 = vmax.xlane.f32.xlu0 %v2896
  %v2925 = vpop.xlane.xlu0 %2924
  %2926 = vmax.xlane.f32.xlu0 %v2897
  %v2927 = vpop.xlane.xlu0 %2926
  %2928 = vmax.xlane.f32.xlu0 %v2898
  %v2929 = vpop.xlane.xlu0 %2928
  %2930 = vmax.xlane.f32.xlu0 %v2899
  %v2931 = vpop.xlane.xlu0 %2930
  %v2932 = vsub.f32 %v2884, %v2901
  %v2933 = vsub.f32 %v2885, %v2903
  %v2934 = vsub.f32 %v2886, %v2905
  %v2935 = vsub.f32 %v2887, %v2907
  %v2936 = vsub.f32 %v2888, %v2909
  %v2937 = vsub.f32 %v2889, %v2911
  %v2938 = vsub.f32 %v2890, %v2913
  %v2939 = vsub.f32 %v2891, %v2915
  %v2940 = vsub.f32 %v2892, %v2917
  %v2941 = vsub.f32 %v2893, %v2919
  %v2942 = vsub.f32 %v2894, %v2921
  %v2943 = vsub.f32 %v2895, %v2923
  %v2944 = vsub.f32 %v2896, %v2925
  %v2945 = vsub.f32 %v2897, %v2927
  %v2946 = vsub.f32 %v2898, %v2929
  %v2947 = vsub.f32 %v2899, %v2931
  %v2948 = vmul.f32 %v2932, 1.442695
  %v2949 = vpow.pop %v2948
  %v2950 = vmul.f32 %v2933, 1.442695
  %v2951 = vpow.pop %v2950
  %v2952 = vmul.f32 %v2934, 1.442695
  %v2953 = vpow.pop %v2952
  %v2954 = vmul.f32 %v2935, 1.442695
  %v2955 = vpow.pop %v2954
  %v2956 = vmul.f32 %v2936, 1.442695
  %v2957 = vpow.pop %v2956
  %v2958 = vmul.f32 %v2937, 1.442695
  %v2959 = vpow.pop %v2958
  %v2960 = vmul.f32 %v2938, 1.442695
  %v2961 = vpow.pop %v2960
  %v2962 = vmul.f32 %v2939, 1.442695
  %v2963 = vpow.pop %v2962
  %v2964 = vmul.f32 %v2940, 1.442695
  %v2965 = vpow.pop %v2964
  %v2966 = vmul.f32 %v2941, 1.442695
  %v2967 = vpow.pop %v2966
  %v2968 = vmul.f32 %v2942, 1.442695
  %v2969 = vpow.pop %v2968
  %v2970 = vmul.f32 %v2943, 1.442695
  %v2971 = vpow.pop %v2970
  %v2972 = vmul.f32 %v2944, 1.442695
  %v2973 = vpow.pop %v2972
  %v2974 = vmul.f32 %v2945, 1.442695
  %v2975 = vpow.pop %v2974
  %v2976 = vmul.f32 %v2946, 1.442695
  %v2977 = vpow.pop %v2976
  %v2978 = vmul.f32 %v2947, 1.442695
  %v2979 = vpow.pop %v2978
  %v2980 = vmul.f32 %v2949, %v80
  %v2981 = vmul.f32 %v2951, %v81
  %v2982 = vmul.f32 %v2953, %v82
  %v2983 = vmul.f32 %v2955, %v83
  %v2984 = vmul.f32 %v2957, %v84
  %v2985 = vmul.f32 %v2959, %v85
  %v2986 = vmul.f32 %v2961, %v86
  %v2987 = vmul.f32 %v2963, %v87
  %v2988 = vmul.f32 %v2965, %v88
  %v2989 = vmul.f32 %v2967, %v89
  %v2990 = vmul.f32 %v2969, %v90
  %v2991 = vmul.f32 %v2971, %v91
  %v2992 = vmul.f32 %v2973, %v92
  %v2993 = vmul.f32 %v2975, %v93
  %v2994 = vmul.f32 %v2977, %v94
  %v2995 = vmul.f32 %v2979, %v95
  %2996 = vadd.xlane.f32.xlu0 %v2980
  %v2997 = vpop.xlane.xlu0 %2996
  %2998 = vadd.xlane.f32.xlu0 %v2981
  %v2999 = vpop.xlane.xlu0 %2998
  %3000 = vadd.xlane.f32.xlu0 %v2982
  %v3001 = vpop.xlane.xlu0 %3000
  %3002 = vadd.xlane.f32.xlu0 %v2983
  %v3003 = vpop.xlane.xlu0 %3002
  %3004 = vadd.xlane.f32.xlu0 %v2984
  %v3005 = vpop.xlane.xlu0 %3004
  %3006 = vadd.xlane.f32.xlu0 %v2985
  %v3007 = vpop.xlane.xlu0 %3006
  %3008 = vadd.xlane.f32.xlu0 %v2986
  %v3009 = vpop.xlane.xlu0 %3008
  %3010 = vadd.xlane.f32.xlu0 %v2987
  %v3011 = vpop.xlane.xlu0 %3010
  %3012 = vadd.xlane.f32.xlu0 %v2988
  %v3013 = vpop.xlane.xlu0 %3012
  %3014 = vadd.xlane.f32.xlu0 %v2989
  %v3015 = vpop.xlane.xlu0 %3014
  %3016 = vadd.xlane.f32.xlu0 %v2990
  %v3017 = vpop.xlane.xlu0 %3016
  %3018 = vadd.xlane.f32.xlu0 %v2991
  %v3019 = vpop.xlane.xlu0 %3018
  %3020 = vadd.xlane.f32.xlu0 %v2992
  %v3021 = vpop.xlane.xlu0 %3020
  %3022 = vadd.xlane.f32.xlu0 %v2993
  %v3023 = vpop.xlane.xlu0 %3022
  %3024 = vadd.xlane.f32.xlu0 %v2994
  %v3025 = vpop.xlane.xlu0 %3024
  %3026 = vadd.xlane.f32.xlu0 %v2995
  %v3027 = vpop.xlane.xlu0 %3026
  %v3028 = vmax.f32 %v2997, 1e-30
  %v3029 = vmax.f32 %v2999, 1e-30
  %v3030 = vmax.f32 %v3001, 1e-30
  %v3031 = vmax.f32 %v3003, 1e-30
  %v3032 = vmax.f32 %v3005, 1e-30
  %v3033 = vmax.f32 %v3007, 1e-30
  %v3034 = vmax.f32 %v3009, 1e-30
  %v3035 = vmax.f32 %v3011, 1e-30
  %v3036 = vmax.f32 %v3013, 1e-30
  %v3037 = vmax.f32 %v3015, 1e-30
  %v3038 = vmax.f32 %v3017, 1e-30
  %v3039 = vmax.f32 %v3019, 1e-30
  %v3040 = vmax.f32 %v3021, 1e-30
  %v3041 = vmax.f32 %v3023, 1e-30
  %v3042 = vmax.f32 %v3025, 1e-30
  %v3043 = vmax.f32 %v3027, 1e-30
  %v3044 = vrcp.pop %v3028
  %v3045 = vrcp.pop %v3029
  %v3046 = vrcp.pop %v3030
  %v3047 = vrcp.pop %v3031
  %v3048 = vrcp.pop %v3032
  %v3049 = vrcp.pop %v3033
  %v3050 = vrcp.pop %v3034
  %v3051 = vrcp.pop %v3035
  %v3052 = vrcp.pop %v3036
  %v3053 = vrcp.pop %v3037
  %v3054 = vrcp.pop %v3038
  %v3055 = vrcp.pop %v3039
  %v3056 = vrcp.pop %v3040
  %v3057 = vrcp.pop %v3041
  %v3058 = vrcp.pop %v3042
  %v3059 = vrcp.pop %v3043
  %v3060 = vmul.f32 %v2980, %v3044
  %v3061 = vmul.f32 %v2981, %v3045
  %v3062 = vmul.f32 %v2982, %v3046
  %v3063 = vmul.f32 %v2983, %v3047
  %v3064 = vmul.f32 %v2984, %v3048
  %v3065 = vmul.f32 %v2985, %v3049
  %v3066 = vmul.f32 %v2986, %v3050
  %v3067 = vmul.f32 %v2987, %v3051
  %v3068 = vmul.f32 %v2988, %v3052
  %v3069 = vmul.f32 %v2989, %v3053
  %v3070 = vmul.f32 %v2990, %v3054
  %v3071 = vmul.f32 %v2991, %v3055
  %v3072 = vmul.f32 %v2992, %v3056
  %v3073 = vmul.f32 %v2993, %v3057
  %v3074 = vmul.f32 %v2994, %v3058
  %v3075 = vmul.f32 %v2995, %v3059
  %3076 = vmatpush.msra.mxu0 %v2296
  %3077 = vmatpush.msra.mxu0 %v2293
  %3078 = vmatpush.msra.mxu0 %v2290
  %3079 = vmatpush.msra.mxu0 %v2287
  %3080 = vmatpush.msra.mxu0 %v2284
  %3081 = vmatpush.msra.mxu0 %v2281
  %3082 = vmatpush.msra.mxu0 %v2278
  %3083 = vmatpush.msra.mxu0 %v2275
  %3084 = vmatpush.msra.mxu0 %v2272
  %3085 = vmatpush.msra.mxu0 %v2269
  %3086 = vmatpush.msra.mxu0 %v2266
  %3087 = vmatpush.msra.mxu0 %v2263
  %3088 = vmatpush.msra.mxu0 %v2260
  %3089 = vmatpush.msra.mxu0 %v2257
  %3090 = vmatpush.msra.mxu0 %v2254
  %3091 = vmatpush.msra.mxu0 %v2251
  %3092 = vmatmul.f32.gmra.mxu0 %v3060
  %v3093 = vpop.f32.mrf.mxu0
  %v3094 = vadd.f32 0.0, %v3093
  %3095 = vmatmul.f32.gmra.mxu0 %v3061
  %v3096 = vpop.f32.mrf.mxu0
  %v3097 = vadd.f32 0.0, %v3096
  %3098 = vmatmul.f32.gmra.mxu0 %v3062
  %v3099 = vpop.f32.mrf.mxu0
  %v3100 = vadd.f32 0.0, %v3099
  %3101 = vmatmul.f32.gmra.mxu0 %v3063
  %v3102 = vpop.f32.mrf.mxu0
  %v3103 = vadd.f32 0.0, %v3102
  %3104 = vmatmul.f32.gmra.mxu0 %v3064
  %v3105 = vpop.f32.mrf.mxu0
  %v3106 = vadd.f32 0.0, %v3105
  %3107 = vmatmul.f32.gmra.mxu0 %v3065
  %v3108 = vpop.f32.mrf.mxu0
  %v3109 = vadd.f32 0.0, %v3108
  %3110 = vmatmul.f32.gmra.mxu0 %v3066
  %v3111 = vpop.f32.mrf.mxu0
  %v3112 = vadd.f32 0.0, %v3111
  %3113 = vmatmul.f32.gmra.mxu0 %v3067
  %v3114 = vpop.f32.mrf.mxu0
  %v3115 = vadd.f32 0.0, %v3114
  %3116 = vmatmul.f32.gmra.mxu0 %v3068
  %v3117 = vpop.f32.mrf.mxu0
  %v3118 = vadd.f32 0.0, %v3117
  %3119 = vmatmul.f32.gmra.mxu0 %v3069
  %v3120 = vpop.f32.mrf.mxu0
  %v3121 = vadd.f32 0.0, %v3120
  %3122 = vmatmul.f32.gmra.mxu0 %v3070
  %v3123 = vpop.f32.mrf.mxu0
  %v3124 = vadd.f32 0.0, %v3123
  %3125 = vmatmul.f32.gmra.mxu0 %v3071
  %v3126 = vpop.f32.mrf.mxu0
  %v3127 = vadd.f32 0.0, %v3126
  %3128 = vmatmul.f32.gmra.mxu0 %v3072
  %v3129 = vpop.f32.mrf.mxu0
  %v3130 = vadd.f32 0.0, %v3129
  %3131 = vmatmul.f32.gmra.mxu0 %v3073
  %v3132 = vpop.f32.mrf.mxu0
  %v3133 = vadd.f32 0.0, %v3132
  %3134 = vmatmul.f32.gmra.mxu0 %v3074
  %v3135 = vpop.f32.mrf.mxu0
  %v3136 = vadd.f32 0.0, %v3135
  %3137 = vmatmul.f32.gmra.mxu0 %v3075
  %v3138 = vpop.f32.mrf.mxu0
  %v3139 = vadd.f32 0.0, %v3138
  %3140 = vdwg.mxu0
  %v3141 = vmul.f32 %v3094, %v1105
  %v3142 = vmul.f32 %v3097, %v1105
  %v3143 = vmul.f32 %v3100, %v1105
  %v3144 = vmul.f32 %v3103, %v1105
  %v3145 = vmul.f32 %v3106, %v1105
  %v3146 = vmul.f32 %v3109, %v1105
  %v3147 = vmul.f32 %v3112, %v1105
  %v3148 = vmul.f32 %v3115, %v1105
  %v3149 = vmul.f32 %v3118, %v1105
  %v3150 = vmul.f32 %v3121, %v1105
  %v3151 = vmul.f32 %v3124, %v1105
  %v3152 = vmul.f32 %v3127, %v1105
  %v3153 = vmul.f32 %v3130, %v1105
  %v3154 = vmul.f32 %v3133, %v1105
  %v3155 = vmul.f32 %v3136, %v1105
  %v3156 = vmul.f32 %v3139, %v1105
  %v3157 = vadd.f32 %v2739, %v3141
  %v3158 = vadd.f32 %v2740, %v3142
  %v3159 = vadd.f32 %v2741, %v3143
  %v3160 = vadd.f32 %v2742, %v3144
  %v3161 = vadd.f32 %v2743, %v3145
  %v3162 = vadd.f32 %v2744, %v3146
  %v3163 = vadd.f32 %v2745, %v3147
  %v3164 = vadd.f32 %v2746, %v3148
  %v3165 = vadd.f32 %v2747, %v3149
  %v3166 = vadd.f32 %v2748, %v3150
  %v3167 = vadd.f32 %v2749, %v3151
  %v3168 = vadd.f32 %v2750, %v3152
  %v3169 = vadd.f32 %v2751, %v3153
  %v3170 = vadd.f32 %v2752, %v3154
  %v3171 = vadd.f32 %v2753, %v3155
  %v3172 = vadd.f32 %v2754, %v3156
  %3173 = vset.pattern.permute.xlu0 66
  %3174 = vperm.xlu0 %3173, %v2251
  %v3175 = vpop.permute.xlu0 %3174
  %3177 = vset.pattern.permute.xlu0 66
  %3178 = vperm.xlu0 %3177, %v2254
  %v3179 = vpop.permute.xlu0 %3178
  %3181 = vset.pattern.permute.xlu0 66
  %3182 = vperm.xlu0 %3181, %v2257
  %v3183 = vpop.permute.xlu0 %3182
  %3185 = vset.pattern.permute.xlu0 66
  %3186 = vperm.xlu0 %3185, %v2260
  %v3187 = vpop.permute.xlu0 %3186
  %3189 = vset.pattern.permute.xlu0 66
  %3190 = vperm.xlu0 %3189, %v2263
  %v3191 = vpop.permute.xlu0 %3190
  %3193 = vset.pattern.permute.xlu0 66
  %3194 = vperm.xlu0 %3193, %v2266
  %v3195 = vpop.permute.xlu0 %3194
  %3197 = vset.pattern.permute.xlu0 66
  %3198 = vperm.xlu0 %3197, %v2269
  %v3199 = vpop.permute.xlu0 %3198
  %3201 = vset.pattern.permute.xlu0 66
  %3202 = vperm.xlu0 %3201, %v2272
  %v3203 = vpop.permute.xlu0 %3202
  %3205 = vset.pattern.permute.xlu0 66
  %3206 = vperm.xlu0 %3205, %v2275
  %v3207 = vpop.permute.xlu0 %3206
  %3209 = vset.pattern.permute.xlu0 66
  %3210 = vperm.xlu0 %3209, %v2278
  %v3211 = vpop.permute.xlu0 %3210
  %3213 = vset.pattern.permute.xlu0 66
  %3214 = vperm.xlu0 %3213, %v2281
  %v3215 = vpop.permute.xlu0 %3214
  %3217 = vset.pattern.permute.xlu0 66
  %3218 = vperm.xlu0 %3217, %v2284
  %v3219 = vpop.permute.xlu0 %3218
  %3221 = vset.pattern.permute.xlu0 66
  %3222 = vperm.xlu0 %3221, %v2287
  %v3223 = vpop.permute.xlu0 %3222
  %3225 = vset.pattern.permute.xlu0 66
  %3226 = vperm.xlu0 %3225, %v2290
  %v3227 = vpop.permute.xlu0 %3226
  %3229 = vset.pattern.permute.xlu0 66
  %3230 = vperm.xlu0 %3229, %v2293
  %v3231 = vpop.permute.xlu0 %3230
  %3233 = vset.pattern.permute.xlu0 66
  %3234 = vperm.xlu0 %3233, %v2296
  %v3235 = vpop.permute.xlu0 %3234
  %v3237 = vperm.slane %v2319, 2
  %v3238 = vadd.f32 %v3175, %v3237
  %v3239 = vadd.f32 %v3179, %v3237
  %v3240 = vadd.f32 %v3183, %v3237
  %v3241 = vadd.f32 %v3187, %v3237
  %v3242 = vadd.f32 %v3191, %v3237
  %v3243 = vadd.f32 %v3195, %v3237
  %v3244 = vadd.f32 %v3199, %v3237
  %v3245 = vadd.f32 %v3203, %v3237
  %v3246 = vadd.f32 %v3207, %v3237
  %v3247 = vadd.f32 %v3211, %v3237
  %v3248 = vadd.f32 %v3215, %v3237
  %v3249 = vadd.f32 %v3219, %v3237
  %v3250 = vadd.f32 %v3223, %v3237
  %v3251 = vadd.f32 %v3227, %v3237
  %v3252 = vadd.f32 %v3231, %v3237
  %v3253 = vadd.f32 %v3235, %v3237
  %vm3254 = vcmp.gt.f32.partialorder %v3238, 0.0
  %vm3255 = vcmp.gt.f32.partialorder %v3239, 0.0
  %vm3256 = vcmp.gt.f32.partialorder %v3240, 0.0
  %vm3257 = vcmp.gt.f32.partialorder %v3241, 0.0
  %vm3258 = vcmp.gt.f32.partialorder %v3242, 0.0
  %vm3259 = vcmp.gt.f32.partialorder %v3243, 0.0
  %vm3260 = vcmp.gt.f32.partialorder %v3244, 0.0
  %vm3261 = vcmp.gt.f32.partialorder %v3245, 0.0
  %vm3262 = vcmp.gt.f32.partialorder %v3246, 0.0
  %vm3263 = vcmp.gt.f32.partialorder %v3247, 0.0
  %vm3264 = vcmp.gt.f32.partialorder %v3248, 0.0
  %vm3265 = vcmp.gt.f32.partialorder %v3249, 0.0
  %vm3266 = vcmp.gt.f32.partialorder %v3250, 0.0
  %vm3267 = vcmp.gt.f32.partialorder %v3251, 0.0
  %vm3268 = vcmp.gt.f32.partialorder %v3252, 0.0
  %vm3269 = vcmp.gt.f32.partialorder %v3253, 0.0
  %v3270 = vmul.f32 %v3238, 0.2
  %v3271 = vmul.f32 %v3239, 0.2
  %v3272 = vmul.f32 %v3240, 0.2
  %v3273 = vmul.f32 %v3241, 0.2
  %v3274 = vmul.f32 %v3242, 0.2
  %v3275 = vmul.f32 %v3243, 0.2
  %v3276 = vmul.f32 %v3244, 0.2
  %v3277 = vmul.f32 %v3245, 0.2
  %v3278 = vmul.f32 %v3246, 0.2
  %v3279 = vmul.f32 %v3247, 0.2
  %v3280 = vmul.f32 %v3248, 0.2
  %v3281 = vmul.f32 %v3249, 0.2
  %v3282 = vmul.f32 %v3250, 0.2
  %v3283 = vmul.f32 %v3251, 0.2
  %v3284 = vmul.f32 %v3252, 0.2
  %v3285 = vmul.f32 %v3253, 0.2
  %v3286 = vsel %vm3254, %v3238, %v3270
  %v3287 = vsel %vm3255, %v3239, %v3271
  %v3288 = vsel %vm3256, %v3240, %v3272
  %v3289 = vsel %vm3257, %v3241, %v3273
  %v3290 = vsel %vm3258, %v3242, %v3274
  %v3291 = vsel %vm3259, %v3243, %v3275
  %v3292 = vsel %vm3260, %v3244, %v3276
  %v3293 = vsel %vm3261, %v3245, %v3277
  %v3294 = vsel %vm3262, %v3246, %v3278
  %v3295 = vsel %vm3263, %v3247, %v3279
  %v3296 = vsel %vm3264, %v3248, %v3280
  %v3297 = vsel %vm3265, %v3249, %v3281
  %v3298 = vsel %vm3266, %v3250, %v3282
  %v3299 = vsel %vm3267, %v3251, %v3283
  %v3300 = vsel %vm3268, %v3252, %v3284
  %v3301 = vsel %vm3269, %v3253, %v3285
  %v3302 = vsel %vm48, %v3286, -1e+30
  %v3303 = vsel %vm49, %v3287, -1e+30
  %v3304 = vsel %vm50, %v3288, -1e+30
  %v3305 = vsel %vm51, %v3289, -1e+30
  %v3306 = vsel %vm52, %v3290, -1e+30
  %v3307 = vsel %vm53, %v3291, -1e+30
  %v3308 = vsel %vm54, %v3292, -1e+30
  %v3309 = vsel %vm55, %v3293, -1e+30
  %v3310 = vsel %vm56, %v3294, -1e+30
  %v3311 = vsel %vm57, %v3295, -1e+30
  %v3312 = vsel %vm58, %v3296, -1e+30
  %v3313 = vsel %vm59, %v3297, -1e+30
  %v3314 = vsel %vm60, %v3298, -1e+30
  %v3315 = vsel %vm61, %v3299, -1e+30
  %v3316 = vsel %vm62, %v3300, -1e+30
  %v3317 = vsel %vm63, %v3301, -1e+30
  %3318 = vmax.xlane.f32.xlu0 %v3302
  %v3319 = vpop.xlane.xlu0 %3318
  %3320 = vmax.xlane.f32.xlu0 %v3303
  %v3321 = vpop.xlane.xlu0 %3320
  %3322 = vmax.xlane.f32.xlu0 %v3304
  %v3323 = vpop.xlane.xlu0 %3322
  %3324 = vmax.xlane.f32.xlu0 %v3305
  %v3325 = vpop.xlane.xlu0 %3324
  %3326 = vmax.xlane.f32.xlu0 %v3306
  %v3327 = vpop.xlane.xlu0 %3326
  %3328 = vmax.xlane.f32.xlu0 %v3307
  %v3329 = vpop.xlane.xlu0 %3328
  %3330 = vmax.xlane.f32.xlu0 %v3308
  %v3331 = vpop.xlane.xlu0 %3330
  %3332 = vmax.xlane.f32.xlu0 %v3309
  %v3333 = vpop.xlane.xlu0 %3332
  %3334 = vmax.xlane.f32.xlu0 %v3310
  %v3335 = vpop.xlane.xlu0 %3334
  %3336 = vmax.xlane.f32.xlu0 %v3311
  %v3337 = vpop.xlane.xlu0 %3336
  %3338 = vmax.xlane.f32.xlu0 %v3312
  %v3339 = vpop.xlane.xlu0 %3338
  %3340 = vmax.xlane.f32.xlu0 %v3313
  %v3341 = vpop.xlane.xlu0 %3340
  %3342 = vmax.xlane.f32.xlu0 %v3314
  %v3343 = vpop.xlane.xlu0 %3342
  %3344 = vmax.xlane.f32.xlu0 %v3315
  %v3345 = vpop.xlane.xlu0 %3344
  %3346 = vmax.xlane.f32.xlu0 %v3316
  %v3347 = vpop.xlane.xlu0 %3346
  %3348 = vmax.xlane.f32.xlu0 %v3317
  %v3349 = vpop.xlane.xlu0 %3348
  %v3350 = vsub.f32 %v3302, %v3319
  %v3351 = vsub.f32 %v3303, %v3321
  %v3352 = vsub.f32 %v3304, %v3323
  %v3353 = vsub.f32 %v3305, %v3325
  %v3354 = vsub.f32 %v3306, %v3327
  %v3355 = vsub.f32 %v3307, %v3329
  %v3356 = vsub.f32 %v3308, %v3331
  %v3357 = vsub.f32 %v3309, %v3333
  %v3358 = vsub.f32 %v3310, %v3335
  %v3359 = vsub.f32 %v3311, %v3337
  %v3360 = vsub.f32 %v3312, %v3339
  %v3361 = vsub.f32 %v3313, %v3341
  %v3362 = vsub.f32 %v3314, %v3343
  %v3363 = vsub.f32 %v3315, %v3345
  %v3364 = vsub.f32 %v3316, %v3347
  %v3365 = vsub.f32 %v3317, %v3349
  %v3366 = vmul.f32 %v3350, 1.442695
  %v3367 = vpow.pop %v3366
  %v3368 = vmul.f32 %v3351, 1.442695
  %v3369 = vpow.pop %v3368
  %v3370 = vmul.f32 %v3352, 1.442695
  %v3371 = vpow.pop %v3370
  %v3372 = vmul.f32 %v3353, 1.442695
  %v3373 = vpow.pop %v3372
  %v3374 = vmul.f32 %v3354, 1.442695
  %v3375 = vpow.pop %v3374
  %v3376 = vmul.f32 %v3355, 1.442695
  %v3377 = vpow.pop %v3376
  %v3378 = vmul.f32 %v3356, 1.442695
  %v3379 = vpow.pop %v3378
  %v3380 = vmul.f32 %v3357, 1.442695
  %v3381 = vpow.pop %v3380
  %v3382 = vmul.f32 %v3358, 1.442695
  %v3383 = vpow.pop %v3382
  %v3384 = vmul.f32 %v3359, 1.442695
  %v3385 = vpow.pop %v3384
  %v3386 = vmul.f32 %v3360, 1.442695
  %v3387 = vpow.pop %v3386
  %v3388 = vmul.f32 %v3361, 1.442695
  %v3389 = vpow.pop %v3388
  %v3390 = vmul.f32 %v3362, 1.442695
  %v3391 = vpow.pop %v3390
  %v3392 = vmul.f32 %v3363, 1.442695
  %v3393 = vpow.pop %v3392
  %v3394 = vmul.f32 %v3364, 1.442695
  %v3395 = vpow.pop %v3394
  %v3396 = vmul.f32 %v3365, 1.442695
  %v3397 = vpow.pop %v3396
  %v3398 = vmul.f32 %v3367, %v80
  %v3399 = vmul.f32 %v3369, %v81
  %v3400 = vmul.f32 %v3371, %v82
  %v3401 = vmul.f32 %v3373, %v83
  %v3402 = vmul.f32 %v3375, %v84
  %v3403 = vmul.f32 %v3377, %v85
  %v3404 = vmul.f32 %v3379, %v86
  %v3405 = vmul.f32 %v3381, %v87
  %v3406 = vmul.f32 %v3383, %v88
  %v3407 = vmul.f32 %v3385, %v89
  %v3408 = vmul.f32 %v3387, %v90
  %v3409 = vmul.f32 %v3389, %v91
  %v3410 = vmul.f32 %v3391, %v92
  %v3411 = vmul.f32 %v3393, %v93
  %v3412 = vmul.f32 %v3395, %v94
  %v3413 = vmul.f32 %v3397, %v95
  %3414 = vadd.xlane.f32.xlu0 %v3398
  %v3415 = vpop.xlane.xlu0 %3414
  %3416 = vadd.xlane.f32.xlu0 %v3399
  %v3417 = vpop.xlane.xlu0 %3416
  %3418 = vadd.xlane.f32.xlu0 %v3400
  %v3419 = vpop.xlane.xlu0 %3418
  %3420 = vadd.xlane.f32.xlu0 %v3401
  %v3421 = vpop.xlane.xlu0 %3420
  %3422 = vadd.xlane.f32.xlu0 %v3402
  %v3423 = vpop.xlane.xlu0 %3422
  %3424 = vadd.xlane.f32.xlu0 %v3403
  %v3425 = vpop.xlane.xlu0 %3424
  %3426 = vadd.xlane.f32.xlu0 %v3404
  %v3427 = vpop.xlane.xlu0 %3426
  %3428 = vadd.xlane.f32.xlu0 %v3405
  %v3429 = vpop.xlane.xlu0 %3428
  %3430 = vadd.xlane.f32.xlu0 %v3406
  %v3431 = vpop.xlane.xlu0 %3430
  %3432 = vadd.xlane.f32.xlu0 %v3407
  %v3433 = vpop.xlane.xlu0 %3432
  %3434 = vadd.xlane.f32.xlu0 %v3408
  %v3435 = vpop.xlane.xlu0 %3434
  %3436 = vadd.xlane.f32.xlu0 %v3409
  %v3437 = vpop.xlane.xlu0 %3436
  %3438 = vadd.xlane.f32.xlu0 %v3410
  %v3439 = vpop.xlane.xlu0 %3438
  %3440 = vadd.xlane.f32.xlu0 %v3411
  %v3441 = vpop.xlane.xlu0 %3440
  %3442 = vadd.xlane.f32.xlu0 %v3412
  %v3443 = vpop.xlane.xlu0 %3442
  %3444 = vadd.xlane.f32.xlu0 %v3413
  %v3445 = vpop.xlane.xlu0 %3444
  %v3446 = vmax.f32 %v3415, 1e-30
  %v3447 = vmax.f32 %v3417, 1e-30
  %v3448 = vmax.f32 %v3419, 1e-30
  %v3449 = vmax.f32 %v3421, 1e-30
  %v3450 = vmax.f32 %v3423, 1e-30
  %v3451 = vmax.f32 %v3425, 1e-30
  %v3452 = vmax.f32 %v3427, 1e-30
  %v3453 = vmax.f32 %v3429, 1e-30
  %v3454 = vmax.f32 %v3431, 1e-30
  %v3455 = vmax.f32 %v3433, 1e-30
  %v3456 = vmax.f32 %v3435, 1e-30
  %v3457 = vmax.f32 %v3437, 1e-30
  %v3458 = vmax.f32 %v3439, 1e-30
  %v3459 = vmax.f32 %v3441, 1e-30
  %v3460 = vmax.f32 %v3443, 1e-30
  %v3461 = vmax.f32 %v3445, 1e-30
  %v3462 = vrcp.pop %v3446
  %v3463 = vrcp.pop %v3447
  %v3464 = vrcp.pop %v3448
  %v3465 = vrcp.pop %v3449
  %v3466 = vrcp.pop %v3450
  %v3467 = vrcp.pop %v3451
  %v3468 = vrcp.pop %v3452
  %v3469 = vrcp.pop %v3453
  %v3470 = vrcp.pop %v3454
  %v3471 = vrcp.pop %v3455
  %v3472 = vrcp.pop %v3456
  %v3473 = vrcp.pop %v3457
  %v3474 = vrcp.pop %v3458
  %v3475 = vrcp.pop %v3459
  %v3476 = vrcp.pop %v3460
  %v3477 = vrcp.pop %v3461
  %v3478 = vmul.f32 %v3398, %v3462
  %v3479 = vmul.f32 %v3399, %v3463
  %v3480 = vmul.f32 %v3400, %v3464
  %v3481 = vmul.f32 %v3401, %v3465
  %v3482 = vmul.f32 %v3402, %v3466
  %v3483 = vmul.f32 %v3403, %v3467
  %v3484 = vmul.f32 %v3404, %v3468
  %v3485 = vmul.f32 %v3405, %v3469
  %v3486 = vmul.f32 %v3406, %v3470
  %v3487 = vmul.f32 %v3407, %v3471
  %v3488 = vmul.f32 %v3408, %v3472
  %v3489 = vmul.f32 %v3409, %v3473
  %v3490 = vmul.f32 %v3410, %v3474
  %v3491 = vmul.f32 %v3411, %v3475
  %v3492 = vmul.f32 %v3412, %v3476
  %v3493 = vmul.f32 %v3413, %v3477
  %3494 = vmatpush.msra.mxu0 %v2296
  %3495 = vmatpush.msra.mxu0 %v2293
  %3496 = vmatpush.msra.mxu0 %v2290
  %3497 = vmatpush.msra.mxu0 %v2287
  %3498 = vmatpush.msra.mxu0 %v2284
  %3499 = vmatpush.msra.mxu0 %v2281
  %3500 = vmatpush.msra.mxu0 %v2278
  %3501 = vmatpush.msra.mxu0 %v2275
  %3502 = vmatpush.msra.mxu0 %v2272
  %3503 = vmatpush.msra.mxu0 %v2269
  %3504 = vmatpush.msra.mxu0 %v2266
  %3505 = vmatpush.msra.mxu0 %v2263
  %3506 = vmatpush.msra.mxu0 %v2260
  %3507 = vmatpush.msra.mxu0 %v2257
  %3508 = vmatpush.msra.mxu0 %v2254
  %3509 = vmatpush.msra.mxu0 %v2251
  %3510 = vmatmul.f32.gmra.mxu0 %v3478
  %v3511 = vpop.f32.mrf.mxu0
  %v3512 = vadd.f32 0.0, %v3511
  %3513 = vmatmul.f32.gmra.mxu0 %v3479
  %v3514 = vpop.f32.mrf.mxu0
  %v3515 = vadd.f32 0.0, %v3514
  %3516 = vmatmul.f32.gmra.mxu0 %v3480
  %v3517 = vpop.f32.mrf.mxu0
  %v3518 = vadd.f32 0.0, %v3517
  %3519 = vmatmul.f32.gmra.mxu0 %v3481
  %v3520 = vpop.f32.mrf.mxu0
  %v3521 = vadd.f32 0.0, %v3520
  %3522 = vmatmul.f32.gmra.mxu0 %v3482
  %v3523 = vpop.f32.mrf.mxu0
  %v3524 = vadd.f32 0.0, %v3523
  %3525 = vmatmul.f32.gmra.mxu0 %v3483
  %v3526 = vpop.f32.mrf.mxu0
  %v3527 = vadd.f32 0.0, %v3526
  %3528 = vmatmul.f32.gmra.mxu0 %v3484
  %v3529 = vpop.f32.mrf.mxu0
  %v3530 = vadd.f32 0.0, %v3529
  %3531 = vmatmul.f32.gmra.mxu0 %v3485
  %v3532 = vpop.f32.mrf.mxu0
  %v3533 = vadd.f32 0.0, %v3532
  %3534 = vmatmul.f32.gmra.mxu0 %v3486
  %v3535 = vpop.f32.mrf.mxu0
  %v3536 = vadd.f32 0.0, %v3535
  %3537 = vmatmul.f32.gmra.mxu0 %v3487
  %v3538 = vpop.f32.mrf.mxu0
  %v3539 = vadd.f32 0.0, %v3538
  %3540 = vmatmul.f32.gmra.mxu0 %v3488
  %v3541 = vpop.f32.mrf.mxu0
  %v3542 = vadd.f32 0.0, %v3541
  %3543 = vmatmul.f32.gmra.mxu0 %v3489
  %v3544 = vpop.f32.mrf.mxu0
  %v3545 = vadd.f32 0.0, %v3544
  %3546 = vmatmul.f32.gmra.mxu0 %v3490
  %v3547 = vpop.f32.mrf.mxu0
  %v3548 = vadd.f32 0.0, %v3547
  %3549 = vmatmul.f32.gmra.mxu0 %v3491
  %v3550 = vpop.f32.mrf.mxu0
  %v3551 = vadd.f32 0.0, %v3550
  %3552 = vmatmul.f32.gmra.mxu0 %v3492
  %v3553 = vpop.f32.mrf.mxu0
  %v3554 = vadd.f32 0.0, %v3553
  %3555 = vmatmul.f32.gmra.mxu0 %v3493
  %v3556 = vpop.f32.mrf.mxu0
  %v3557 = vadd.f32 0.0, %v3556
  %3558 = vdwg.mxu0
  %v3559 = vmul.f32 %v3512, %v1528
  %v3560 = vmul.f32 %v3515, %v1528
  %v3561 = vmul.f32 %v3518, %v1528
  %v3562 = vmul.f32 %v3521, %v1528
  %v3563 = vmul.f32 %v3524, %v1528
  %v3564 = vmul.f32 %v3527, %v1528
  %v3565 = vmul.f32 %v3530, %v1528
  %v3566 = vmul.f32 %v3533, %v1528
  %v3567 = vmul.f32 %v3536, %v1528
  %v3568 = vmul.f32 %v3539, %v1528
  %v3569 = vmul.f32 %v3542, %v1528
  %v3570 = vmul.f32 %v3545, %v1528
  %v3571 = vmul.f32 %v3548, %v1528
  %v3572 = vmul.f32 %v3551, %v1528
  %v3573 = vmul.f32 %v3554, %v1528
  %v3574 = vmul.f32 %v3557, %v1528
  %v3575 = vadd.f32 %v3157, %v3559
  %v3576 = vadd.f32 %v3158, %v3560
  %v3577 = vadd.f32 %v3159, %v3561
  %v3578 = vadd.f32 %v3160, %v3562
  %v3579 = vadd.f32 %v3161, %v3563
  %v3580 = vadd.f32 %v3162, %v3564
  %v3581 = vadd.f32 %v3163, %v3565
  %v3582 = vadd.f32 %v3164, %v3566
  %v3583 = vadd.f32 %v3165, %v3567
  %v3584 = vadd.f32 %v3166, %v3568
  %v3585 = vadd.f32 %v3167, %v3569
  %v3586 = vadd.f32 %v3168, %v3570
  %v3587 = vadd.f32 %v3169, %v3571
  %v3588 = vadd.f32 %v3170, %v3572
  %v3589 = vadd.f32 %v3171, %v3573
  %v3590 = vadd.f32 %v3172, %v3574
  %3591 = vset.pattern.permute.xlu0 67
  %3592 = vperm.xlu0 %3591, %v2251
  %v3593 = vpop.permute.xlu0 %3592
  %3595 = vset.pattern.permute.xlu0 67
  %3596 = vperm.xlu0 %3595, %v2254
  %v3597 = vpop.permute.xlu0 %3596
  %3599 = vset.pattern.permute.xlu0 67
  %3600 = vperm.xlu0 %3599, %v2257
  %v3601 = vpop.permute.xlu0 %3600
  %3603 = vset.pattern.permute.xlu0 67
  %3604 = vperm.xlu0 %3603, %v2260
  %v3605 = vpop.permute.xlu0 %3604
  %3607 = vset.pattern.permute.xlu0 67
  %3608 = vperm.xlu0 %3607, %v2263
  %v3609 = vpop.permute.xlu0 %3608
  %3611 = vset.pattern.permute.xlu0 67
  %3612 = vperm.xlu0 %3611, %v2266
  %v3613 = vpop.permute.xlu0 %3612
  %3615 = vset.pattern.permute.xlu0 67
  %3616 = vperm.xlu0 %3615, %v2269
  %v3617 = vpop.permute.xlu0 %3616
  %3619 = vset.pattern.permute.xlu0 67
  %3620 = vperm.xlu0 %3619, %v2272
  %v3621 = vpop.permute.xlu0 %3620
  %3623 = vset.pattern.permute.xlu0 67
  %3624 = vperm.xlu0 %3623, %v2275
  %v3625 = vpop.permute.xlu0 %3624
  %3627 = vset.pattern.permute.xlu0 67
  %3628 = vperm.xlu0 %3627, %v2278
  %v3629 = vpop.permute.xlu0 %3628
  %3631 = vset.pattern.permute.xlu0 67
  %3632 = vperm.xlu0 %3631, %v2281
  %v3633 = vpop.permute.xlu0 %3632
  %3635 = vset.pattern.permute.xlu0 67
  %3636 = vperm.xlu0 %3635, %v2284
  %v3637 = vpop.permute.xlu0 %3636
  %3639 = vset.pattern.permute.xlu0 67
  %3640 = vperm.xlu0 %3639, %v2287
  %v3641 = vpop.permute.xlu0 %3640
  %3643 = vset.pattern.permute.xlu0 67
  %3644 = vperm.xlu0 %3643, %v2290
  %v3645 = vpop.permute.xlu0 %3644
  %3647 = vset.pattern.permute.xlu0 67
  %3648 = vperm.xlu0 %3647, %v2293
  %v3649 = vpop.permute.xlu0 %3648
  %3651 = vset.pattern.permute.xlu0 67
  %3652 = vperm.xlu0 %3651, %v2296
  %v3653 = vpop.permute.xlu0 %3652
  %v3655 = vperm.slane %v2319, 3
  %v3656 = vadd.f32 %v3593, %v3655
  %v3657 = vadd.f32 %v3597, %v3655
  %v3658 = vadd.f32 %v3601, %v3655
  %v3659 = vadd.f32 %v3605, %v3655
  %v3660 = vadd.f32 %v3609, %v3655
  %v3661 = vadd.f32 %v3613, %v3655
  %v3662 = vadd.f32 %v3617, %v3655
  %v3663 = vadd.f32 %v3621, %v3655
  %v3664 = vadd.f32 %v3625, %v3655
  %v3665 = vadd.f32 %v3629, %v3655
  %v3666 = vadd.f32 %v3633, %v3655
  %v3667 = vadd.f32 %v3637, %v3655
  %v3668 = vadd.f32 %v3641, %v3655
  %v3669 = vadd.f32 %v3645, %v3655
  %v3670 = vadd.f32 %v3649, %v3655
  %v3671 = vadd.f32 %v3653, %v3655
  %vm3672 = vcmp.gt.f32.partialorder %v3656, 0.0
  %vm3673 = vcmp.gt.f32.partialorder %v3657, 0.0
  %vm3674 = vcmp.gt.f32.partialorder %v3658, 0.0
  %vm3675 = vcmp.gt.f32.partialorder %v3659, 0.0
  %vm3676 = vcmp.gt.f32.partialorder %v3660, 0.0
  %vm3677 = vcmp.gt.f32.partialorder %v3661, 0.0
  %vm3678 = vcmp.gt.f32.partialorder %v3662, 0.0
  %vm3679 = vcmp.gt.f32.partialorder %v3663, 0.0
  %vm3680 = vcmp.gt.f32.partialorder %v3664, 0.0
  %vm3681 = vcmp.gt.f32.partialorder %v3665, 0.0
  %vm3682 = vcmp.gt.f32.partialorder %v3666, 0.0
  %vm3683 = vcmp.gt.f32.partialorder %v3667, 0.0
  %vm3684 = vcmp.gt.f32.partialorder %v3668, 0.0
  %vm3685 = vcmp.gt.f32.partialorder %v3669, 0.0
  %vm3686 = vcmp.gt.f32.partialorder %v3670, 0.0
  %vm3687 = vcmp.gt.f32.partialorder %v3671, 0.0
  %v3688 = vmul.f32 %v3656, 0.2
  %v3689 = vmul.f32 %v3657, 0.2
  %v3690 = vmul.f32 %v3658, 0.2
  %v3691 = vmul.f32 %v3659, 0.2
  %v3692 = vmul.f32 %v3660, 0.2
  %v3693 = vmul.f32 %v3661, 0.2
  %v3694 = vmul.f32 %v3662, 0.2
  %v3695 = vmul.f32 %v3663, 0.2
  %v3696 = vmul.f32 %v3664, 0.2
  %v3697 = vmul.f32 %v3665, 0.2
  %v3698 = vmul.f32 %v3666, 0.2
  %v3699 = vmul.f32 %v3667, 0.2
  %v3700 = vmul.f32 %v3668, 0.2
  %v3701 = vmul.f32 %v3669, 0.2
  %v3702 = vmul.f32 %v3670, 0.2
  %v3703 = vmul.f32 %v3671, 0.2
  %v3704 = vsel %vm3672, %v3656, %v3688
  %v3705 = vsel %vm3673, %v3657, %v3689
  %v3706 = vsel %vm3674, %v3658, %v3690
  %v3707 = vsel %vm3675, %v3659, %v3691
  %v3708 = vsel %vm3676, %v3660, %v3692
  %v3709 = vsel %vm3677, %v3661, %v3693
  %v3710 = vsel %vm3678, %v3662, %v3694
  %v3711 = vsel %vm3679, %v3663, %v3695
  %v3712 = vsel %vm3680, %v3664, %v3696
  %v3713 = vsel %vm3681, %v3665, %v3697
  %v3714 = vsel %vm3682, %v3666, %v3698
  %v3715 = vsel %vm3683, %v3667, %v3699
  %v3716 = vsel %vm3684, %v3668, %v3700
  %v3717 = vsel %vm3685, %v3669, %v3701
  %v3718 = vsel %vm3686, %v3670, %v3702
  %v3719 = vsel %vm3687, %v3671, %v3703
  %v3720 = vsel %vm48, %v3704, -1e+30
  %v3721 = vsel %vm49, %v3705, -1e+30
  %v3722 = vsel %vm50, %v3706, -1e+30
  %v3723 = vsel %vm51, %v3707, -1e+30
  %v3724 = vsel %vm52, %v3708, -1e+30
  %v3725 = vsel %vm53, %v3709, -1e+30
  %v3726 = vsel %vm54, %v3710, -1e+30
  %v3727 = vsel %vm55, %v3711, -1e+30
  %v3728 = vsel %vm56, %v3712, -1e+30
  %v3729 = vsel %vm57, %v3713, -1e+30
  %v3730 = vsel %vm58, %v3714, -1e+30
  %v3731 = vsel %vm59, %v3715, -1e+30
  %v3732 = vsel %vm60, %v3716, -1e+30
  %v3733 = vsel %vm61, %v3717, -1e+30
  %v3734 = vsel %vm62, %v3718, -1e+30
  %v3735 = vsel %vm63, %v3719, -1e+30
  %3736 = vmax.xlane.f32.xlu0 %v3720
  %v3737 = vpop.xlane.xlu0 %3736
  %3738 = vmax.xlane.f32.xlu0 %v3721
  %v3739 = vpop.xlane.xlu0 %3738
  %3740 = vmax.xlane.f32.xlu0 %v3722
  %v3741 = vpop.xlane.xlu0 %3740
  %3742 = vmax.xlane.f32.xlu0 %v3723
  %v3743 = vpop.xlane.xlu0 %3742
  %3744 = vmax.xlane.f32.xlu0 %v3724
  %v3745 = vpop.xlane.xlu0 %3744
  %3746 = vmax.xlane.f32.xlu0 %v3725
  %v3747 = vpop.xlane.xlu0 %3746
  %3748 = vmax.xlane.f32.xlu0 %v3726
  %v3749 = vpop.xlane.xlu0 %3748
  %3750 = vmax.xlane.f32.xlu0 %v3727
  %v3751 = vpop.xlane.xlu0 %3750
  %3752 = vmax.xlane.f32.xlu0 %v3728
  %v3753 = vpop.xlane.xlu0 %3752
  %3754 = vmax.xlane.f32.xlu0 %v3729
  %v3755 = vpop.xlane.xlu0 %3754
  %3756 = vmax.xlane.f32.xlu0 %v3730
  %v3757 = vpop.xlane.xlu0 %3756
  %3758 = vmax.xlane.f32.xlu0 %v3731
  %v3759 = vpop.xlane.xlu0 %3758
  %3760 = vmax.xlane.f32.xlu0 %v3732
  %v3761 = vpop.xlane.xlu0 %3760
  %3762 = vmax.xlane.f32.xlu0 %v3733
  %v3763 = vpop.xlane.xlu0 %3762
  %3764 = vmax.xlane.f32.xlu0 %v3734
  %v3765 = vpop.xlane.xlu0 %3764
  %3766 = vmax.xlane.f32.xlu0 %v3735
  %v3767 = vpop.xlane.xlu0 %3766
  %v3768 = vsub.f32 %v3720, %v3737
  %v3769 = vsub.f32 %v3721, %v3739
  %v3770 = vsub.f32 %v3722, %v3741
  %v3771 = vsub.f32 %v3723, %v3743
  %v3772 = vsub.f32 %v3724, %v3745
  %v3773 = vsub.f32 %v3725, %v3747
  %v3774 = vsub.f32 %v3726, %v3749
  %v3775 = vsub.f32 %v3727, %v3751
  %v3776 = vsub.f32 %v3728, %v3753
  %v3777 = vsub.f32 %v3729, %v3755
  %v3778 = vsub.f32 %v3730, %v3757
  %v3779 = vsub.f32 %v3731, %v3759
  %v3780 = vsub.f32 %v3732, %v3761
  %v3781 = vsub.f32 %v3733, %v3763
  %v3782 = vsub.f32 %v3734, %v3765
  %v3783 = vsub.f32 %v3735, %v3767
  %v3784 = vmul.f32 %v3768, 1.442695
  %v3785 = vpow.pop %v3784
  %v3786 = vmul.f32 %v3769, 1.442695
  %v3787 = vpow.pop %v3786
  %v3788 = vmul.f32 %v3770, 1.442695
  %v3789 = vpow.pop %v3788
  %v3790 = vmul.f32 %v3771, 1.442695
  %v3791 = vpow.pop %v3790
  %v3792 = vmul.f32 %v3772, 1.442695
  %v3793 = vpow.pop %v3792
  %v3794 = vmul.f32 %v3773, 1.442695
  %v3795 = vpow.pop %v3794
  %v3796 = vmul.f32 %v3774, 1.442695
  %v3797 = vpow.pop %v3796
  %v3798 = vmul.f32 %v3775, 1.442695
  %v3799 = vpow.pop %v3798
  %v3800 = vmul.f32 %v3776, 1.442695
  %v3801 = vpow.pop %v3800
  %v3802 = vmul.f32 %v3777, 1.442695
  %v3803 = vpow.pop %v3802
  %v3804 = vmul.f32 %v3778, 1.442695
  %v3805 = vpow.pop %v3804
  %v3806 = vmul.f32 %v3779, 1.442695
  %v3807 = vpow.pop %v3806
  %v3808 = vmul.f32 %v3780, 1.442695
  %v3809 = vpow.pop %v3808
  %v3810 = vmul.f32 %v3781, 1.442695
  %v3811 = vpow.pop %v3810
  %v3812 = vmul.f32 %v3782, 1.442695
  %v3813 = vpow.pop %v3812
  %v3814 = vmul.f32 %v3783, 1.442695
  %v3815 = vpow.pop %v3814
  %v3816 = vmul.f32 %v3785, %v80
  %v3817 = vmul.f32 %v3787, %v81
  %v3818 = vmul.f32 %v3789, %v82
  %v3819 = vmul.f32 %v3791, %v83
  %v3820 = vmul.f32 %v3793, %v84
  %v3821 = vmul.f32 %v3795, %v85
  %v3822 = vmul.f32 %v3797, %v86
  %v3823 = vmul.f32 %v3799, %v87
  %v3824 = vmul.f32 %v3801, %v88
  %v3825 = vmul.f32 %v3803, %v89
  %v3826 = vmul.f32 %v3805, %v90
  %v3827 = vmul.f32 %v3807, %v91
  %v3828 = vmul.f32 %v3809, %v92
  %v3829 = vmul.f32 %v3811, %v93
  %v3830 = vmul.f32 %v3813, %v94
  %v3831 = vmul.f32 %v3815, %v95
  %3832 = vadd.xlane.f32.xlu0 %v3816
  %v3833 = vpop.xlane.xlu0 %3832
  %3834 = vadd.xlane.f32.xlu0 %v3817
  %v3835 = vpop.xlane.xlu0 %3834
  %3836 = vadd.xlane.f32.xlu0 %v3818
  %v3837 = vpop.xlane.xlu0 %3836
  %3838 = vadd.xlane.f32.xlu0 %v3819
  %v3839 = vpop.xlane.xlu0 %3838
  %3840 = vadd.xlane.f32.xlu0 %v3820
  %v3841 = vpop.xlane.xlu0 %3840
  %3842 = vadd.xlane.f32.xlu0 %v3821
  %v3843 = vpop.xlane.xlu0 %3842
  %3844 = vadd.xlane.f32.xlu0 %v3822
  %v3845 = vpop.xlane.xlu0 %3844
  %3846 = vadd.xlane.f32.xlu0 %v3823
  %v3847 = vpop.xlane.xlu0 %3846
  %3848 = vadd.xlane.f32.xlu0 %v3824
  %v3849 = vpop.xlane.xlu0 %3848
  %3850 = vadd.xlane.f32.xlu0 %v3825
  %v3851 = vpop.xlane.xlu0 %3850
  %3852 = vadd.xlane.f32.xlu0 %v3826
  %v3853 = vpop.xlane.xlu0 %3852
  %3854 = vadd.xlane.f32.xlu0 %v3827
  %v3855 = vpop.xlane.xlu0 %3854
  %3856 = vadd.xlane.f32.xlu0 %v3828
  %v3857 = vpop.xlane.xlu0 %3856
  %3858 = vadd.xlane.f32.xlu0 %v3829
  %v3859 = vpop.xlane.xlu0 %3858
  %3860 = vadd.xlane.f32.xlu0 %v3830
  %v3861 = vpop.xlane.xlu0 %3860
  %3862 = vadd.xlane.f32.xlu0 %v3831
  %v3863 = vpop.xlane.xlu0 %3862
  %v3864 = vmax.f32 %v3833, 1e-30
  %v3865 = vmax.f32 %v3835, 1e-30
  %v3866 = vmax.f32 %v3837, 1e-30
  %v3867 = vmax.f32 %v3839, 1e-30
  %v3868 = vmax.f32 %v3841, 1e-30
  %v3869 = vmax.f32 %v3843, 1e-30
  %v3870 = vmax.f32 %v3845, 1e-30
  %v3871 = vmax.f32 %v3847, 1e-30
  %v3872 = vmax.f32 %v3849, 1e-30
  %v3873 = vmax.f32 %v3851, 1e-30
  %v3874 = vmax.f32 %v3853, 1e-30
  %v3875 = vmax.f32 %v3855, 1e-30
  %v3876 = vmax.f32 %v3857, 1e-30
  %v3877 = vmax.f32 %v3859, 1e-30
  %v3878 = vmax.f32 %v3861, 1e-30
  %v3879 = vmax.f32 %v3863, 1e-30
  %v3880 = vrcp.pop %v3864
  %v3881 = vrcp.pop %v3865
  %v3882 = vrcp.pop %v3866
  %v3883 = vrcp.pop %v3867
  %v3884 = vrcp.pop %v3868
  %v3885 = vrcp.pop %v3869
  %v3886 = vrcp.pop %v3870
  %v3887 = vrcp.pop %v3871
  %v3888 = vrcp.pop %v3872
  %v3889 = vrcp.pop %v3873
  %v3890 = vrcp.pop %v3874
  %v3891 = vrcp.pop %v3875
  %v3892 = vrcp.pop %v3876
  %v3893 = vrcp.pop %v3877
  %v3894 = vrcp.pop %v3878
  %v3895 = vrcp.pop %v3879
  %v3896 = vmul.f32 %v3816, %v3880
  %v3897 = vmul.f32 %v3817, %v3881
  %v3898 = vmul.f32 %v3818, %v3882
  %v3899 = vmul.f32 %v3819, %v3883
  %v3900 = vmul.f32 %v3820, %v3884
  %v3901 = vmul.f32 %v3821, %v3885
  %v3902 = vmul.f32 %v3822, %v3886
  %v3903 = vmul.f32 %v3823, %v3887
  %v3904 = vmul.f32 %v3824, %v3888
  %v3905 = vmul.f32 %v3825, %v3889
  %v3906 = vmul.f32 %v3826, %v3890
  %v3907 = vmul.f32 %v3827, %v3891
  %v3908 = vmul.f32 %v3828, %v3892
  %v3909 = vmul.f32 %v3829, %v3893
  %v3910 = vmul.f32 %v3830, %v3894
  %v3911 = vmul.f32 %v3831, %v3895
  %3912 = vmatpush.msra.mxu0 %v2296
  %3913 = vmatpush.msra.mxu0 %v2293
  %3914 = vmatpush.msra.mxu0 %v2290
  %3915 = vmatpush.msra.mxu0 %v2287
  %3916 = vmatpush.msra.mxu0 %v2284
  %3917 = vmatpush.msra.mxu0 %v2281
  %3918 = vmatpush.msra.mxu0 %v2278
  %3919 = vmatpush.msra.mxu0 %v2275
  %3920 = vmatpush.msra.mxu0 %v2272
  %3921 = vmatpush.msra.mxu0 %v2269
  %3922 = vmatpush.msra.mxu0 %v2266
  %3923 = vmatpush.msra.mxu0 %v2263
  %3924 = vmatpush.msra.mxu0 %v2260
  %3925 = vmatpush.msra.mxu0 %v2257
  %3926 = vmatpush.msra.mxu0 %v2254
  %3927 = vmatpush.msra.mxu0 %v2251
  %3928 = vmatmul.f32.gmra.mxu0 %v3896
  %v3929 = vpop.f32.mrf.mxu0
  %v3930 = vadd.f32 0.0, %v3929
  %3931 = vmatmul.f32.gmra.mxu0 %v3897
  %v3932 = vpop.f32.mrf.mxu0
  %v3933 = vadd.f32 0.0, %v3932
  %3934 = vmatmul.f32.gmra.mxu0 %v3898
  %v3935 = vpop.f32.mrf.mxu0
  %v3936 = vadd.f32 0.0, %v3935
  %3937 = vmatmul.f32.gmra.mxu0 %v3899
  %v3938 = vpop.f32.mrf.mxu0
  %v3939 = vadd.f32 0.0, %v3938
  %3940 = vmatmul.f32.gmra.mxu0 %v3900
  %v3941 = vpop.f32.mrf.mxu0
  %v3942 = vadd.f32 0.0, %v3941
  %3943 = vmatmul.f32.gmra.mxu0 %v3901
  %v3944 = vpop.f32.mrf.mxu0
  %v3945 = vadd.f32 0.0, %v3944
  %3946 = vmatmul.f32.gmra.mxu0 %v3902
  %v3947 = vpop.f32.mrf.mxu0
  %v3948 = vadd.f32 0.0, %v3947
  %3949 = vmatmul.f32.gmra.mxu0 %v3903
  %v3950 = vpop.f32.mrf.mxu0
  %v3951 = vadd.f32 0.0, %v3950
  %3952 = vmatmul.f32.gmra.mxu0 %v3904
  %v3953 = vpop.f32.mrf.mxu0
  %v3954 = vadd.f32 0.0, %v3953
  %3955 = vmatmul.f32.gmra.mxu0 %v3905
  %v3956 = vpop.f32.mrf.mxu0
  %v3957 = vadd.f32 0.0, %v3956
  %3958 = vmatmul.f32.gmra.mxu0 %v3906
  %v3959 = vpop.f32.mrf.mxu0
  %v3960 = vadd.f32 0.0, %v3959
  %3961 = vmatmul.f32.gmra.mxu0 %v3907
  %v3962 = vpop.f32.mrf.mxu0
  %v3963 = vadd.f32 0.0, %v3962
  %3964 = vmatmul.f32.gmra.mxu0 %v3908
  %v3965 = vpop.f32.mrf.mxu0
  %v3966 = vadd.f32 0.0, %v3965
  %3967 = vmatmul.f32.gmra.mxu0 %v3909
  %v3968 = vpop.f32.mrf.mxu0
  %v3969 = vadd.f32 0.0, %v3968
  %3970 = vmatmul.f32.gmra.mxu0 %v3910
  %v3971 = vpop.f32.mrf.mxu0
  %v3972 = vadd.f32 0.0, %v3971
  %3973 = vmatmul.f32.gmra.mxu0 %v3911
  %v3974 = vpop.f32.mrf.mxu0
  %v3975 = vadd.f32 0.0, %v3974
  %3976 = vdwg.mxu0
  %v3977 = vmul.f32 %v3930, %v1951
  %v3978 = vmul.f32 %v3933, %v1951
  %v3979 = vmul.f32 %v3936, %v1951
  %v3980 = vmul.f32 %v3939, %v1951
  %v3981 = vmul.f32 %v3942, %v1951
  %v3982 = vmul.f32 %v3945, %v1951
  %v3983 = vmul.f32 %v3948, %v1951
  %v3984 = vmul.f32 %v3951, %v1951
  %v3985 = vmul.f32 %v3954, %v1951
  %v3986 = vmul.f32 %v3957, %v1951
  %v3987 = vmul.f32 %v3960, %v1951
  %v3988 = vmul.f32 %v3963, %v1951
  %v3989 = vmul.f32 %v3966, %v1951
  %v3990 = vmul.f32 %v3969, %v1951
  %v3991 = vmul.f32 %v3972, %v1951
  %v3992 = vmul.f32 %v3975, %v1951
  %v3993 = vadd.f32 %v3575, %v3977
  %v3994 = vadd.f32 %v3576, %v3978
  %v3995 = vadd.f32 %v3577, %v3979
  %v3996 = vadd.f32 %v3578, %v3980
  %v3997 = vadd.f32 %v3579, %v3981
  %v3998 = vadd.f32 %v3580, %v3982
  %v3999 = vadd.f32 %v3581, %v3983
  %v4000 = vadd.f32 %v3582, %v3984
  %v4001 = vadd.f32 %v3583, %v3985
  %v4002 = vadd.f32 %v3584, %v3986
  %v4003 = vadd.f32 %v3585, %v3987
  %v4004 = vadd.f32 %v3586, %v3988
  %v4005 = vadd.f32 %v3587, %v3989
  %v4006 = vadd.f32 %v3588, %v3990
  %v4007 = vadd.f32 %v3589, %v3991
  %v4008 = vadd.f32 %v3590, %v3992
  %v4009 = vmul.f32 %v3993, %v1987
  %v4010 = vmul.f32 %v3994, %v1992
  %v4011 = vmul.f32 %v3995, %v1997
  %v4012 = vmul.f32 %v3996, %v2002
  %v4013 = vmul.f32 %v3997, %v2007
  %v4014 = vmul.f32 %v3998, %v2012
  %v4015 = vmul.f32 %v3999, %v2017
  %v4016 = vmul.f32 %v4000, %v2022
  %v4017 = vmul.f32 %v4001, %v2027
  %v4018 = vmul.f32 %v4002, %v2032
  %v4019 = vmul.f32 %v4003, %v2037
  %v4020 = vmul.f32 %v4004, %v2042
  %v4021 = vmul.f32 %v4005, %v2047
  %v4022 = vmul.f32 %v4006, %v2052
  %v4023 = vmul.f32 %v4007, %v2057
  %v4024 = vmul.f32 %v4008, %v2062
  %vm4025 = vcmp.gt.f32.partialorder %v4009, 0.0
  %vm4026 = vcmp.gt.f32.partialorder %v4010, 0.0
  %vm4027 = vcmp.gt.f32.partialorder %v4011, 0.0
  %vm4028 = vcmp.gt.f32.partialorder %v4012, 0.0
  %vm4029 = vcmp.gt.f32.partialorder %v4013, 0.0
  %vm4030 = vcmp.gt.f32.partialorder %v4014, 0.0
  %vm4031 = vcmp.gt.f32.partialorder %v4015, 0.0
  %vm4032 = vcmp.gt.f32.partialorder %v4016, 0.0
  %vm4033 = vcmp.gt.f32.partialorder %v4017, 0.0
  %vm4034 = vcmp.gt.f32.partialorder %v4018, 0.0
  %vm4035 = vcmp.gt.f32.partialorder %v4019, 0.0
  %vm4036 = vcmp.gt.f32.partialorder %v4020, 0.0
  %vm4037 = vcmp.gt.f32.partialorder %v4021, 0.0
  %vm4038 = vcmp.gt.f32.partialorder %v4022, 0.0
  %vm4039 = vcmp.gt.f32.partialorder %v4023, 0.0
  %vm4040 = vcmp.gt.f32.partialorder %v4024, 0.0
  %v4041 = vmin.f32 %v4009, 0.0
  %v4042 = vmin.f32 %v4010, 0.0
  %v4043 = vmin.f32 %v4011, 0.0
  %v4044 = vmin.f32 %v4012, 0.0
  %v4045 = vmin.f32 %v4013, 0.0
  %v4046 = vmin.f32 %v4014, 0.0
  %v4047 = vmin.f32 %v4015, 0.0
  %v4048 = vmin.f32 %v4016, 0.0
  %v4049 = vmin.f32 %v4017, 0.0
  %v4050 = vmin.f32 %v4018, 0.0
  %v4051 = vmin.f32 %v4019, 0.0
  %v4052 = vmin.f32 %v4020, 0.0
  %v4053 = vmin.f32 %v4021, 0.0
  %v4054 = vmin.f32 %v4022, 0.0
  %v4055 = vmin.f32 %v4023, 0.0
  %v4056 = vmin.f32 %v4024, 0.0
  %v4057 = vmul.f32 %v4041, 1.442695
  %v4058 = vpow.pop %v4057
  %v4059 = vmul.f32 %v4042, 1.442695
  %v4060 = vpow.pop %v4059
  %v4061 = vmul.f32 %v4043, 1.442695
  %v4062 = vpow.pop %v4061
  %v4063 = vmul.f32 %v4044, 1.442695
  %v4064 = vpow.pop %v4063
  %v4065 = vmul.f32 %v4045, 1.442695
  %v4066 = vpow.pop %v4065
  %v4067 = vmul.f32 %v4046, 1.442695
  %v4068 = vpow.pop %v4067
  %v4069 = vmul.f32 %v4047, 1.442695
  %v4070 = vpow.pop %v4069
  %v4071 = vmul.f32 %v4048, 1.442695
  %v4072 = vpow.pop %v4071
  %v4073 = vmul.f32 %v4049, 1.442695
  %v4074 = vpow.pop %v4073
  %v4075 = vmul.f32 %v4050, 1.442695
  %v4076 = vpow.pop %v4075
  %v4077 = vmul.f32 %v4051, 1.442695
  %v4078 = vpow.pop %v4077
  %v4079 = vmul.f32 %v4052, 1.442695
  %v4080 = vpow.pop %v4079
  %v4081 = vmul.f32 %v4053, 1.442695
  %v4082 = vpow.pop %v4081
  %v4083 = vmul.f32 %v4054, 1.442695
  %v4084 = vpow.pop %v4083
  %v4085 = vmul.f32 %v4055, 1.442695
  %v4086 = vpow.pop %v4085
  %v4087 = vmul.f32 %v4056, 1.442695
  %v4088 = vpow.pop %v4087
  %v4089 = vsub.f32 %v4058, 1.0
  %v4090 = vsub.f32 %v4060, 1.0
  %v4091 = vsub.f32 %v4062, 1.0
  %v4092 = vsub.f32 %v4064, 1.0
  %v4093 = vsub.f32 %v4066, 1.0
  %v4094 = vsub.f32 %v4068, 1.0
  %v4095 = vsub.f32 %v4070, 1.0
  %v4096 = vsub.f32 %v4072, 1.0
  %v4097 = vsub.f32 %v4074, 1.0
  %v4098 = vsub.f32 %v4076, 1.0
  %v4099 = vsub.f32 %v4078, 1.0
  %v4100 = vsub.f32 %v4080, 1.0
  %v4101 = vsub.f32 %v4082, 1.0
  %v4102 = vsub.f32 %v4084, 1.0
  %v4103 = vsub.f32 %v4086, 1.0
  %v4104 = vsub.f32 %v4088, 1.0
  %v4105 = vsel %vm4025, %v4009, %v4089
  %v4106 = vsel %vm4026, %v4010, %v4090
  %v4107 = vsel %vm4027, %v4011, %v4091
  %v4108 = vsel %vm4028, %v4012, %v4092
  %v4109 = vsel %vm4029, %v4013, %v4093
  %v4110 = vsel %vm4030, %v4014, %v4094
  %v4111 = vsel %vm4031, %v4015, %v4095
  %v4112 = vsel %vm4032, %v4016, %v4096
  %v4113 = vsel %vm4033, %v4017, %v4097
  %v4114 = vsel %vm4034, %v4018, %v4098
  %v4115 = vsel %vm4035, %v4019, %v4099
  %v4116 = vsel %vm4036, %v4020, %v4100
  %v4117 = vsel %vm4037, %v4021, %v4101
  %v4118 = vsel %vm4038, %v4022, %v4102
  %v4119 = vsel %vm4039, %v4023, %v4103
  %v4120 = vsel %vm4040, %v4024, %v4104
  %v4121 = vld [vmem:[%s7] sm:$0xff]
  %v4122 = vld [vmem:[%s7 + $0x8] sm:$0xff]
  %v4123 = vld [vmem:[%s7 + $0x10] sm:$0xff]
  %v4124 = vld [vmem:[%s7 + $0x18] sm:$0xff]
  %v4125 = vld [vmem:[%s7 + $0x20] sm:$0xff]
  %v4126 = vld [vmem:[%s7 + $0x28] sm:$0xff]
  %v4127 = vld [vmem:[%s7 + $0x30] sm:$0xff]
  %v4128 = vld [vmem:[%s7 + $0x38] sm:$0xff]
  %v4129 = vld [vmem:[%s7 + $0x40] sm:$0xff]
  %v4130 = vld [vmem:[%s7 + $0x48] sm:$0xff]
  %v4131 = vld [vmem:[%s7 + $0x50] sm:$0xff]
  %v4132 = vld [vmem:[%s7 + $0x58] sm:$0xff]
  %v4133 = vld [vmem:[%s7 + $0x60] sm:$0xff]
  %v4134 = vld [vmem:[%s7 + $0x68] sm:$0xff]
  %v4135 = vld [vmem:[%s7 + $0x70] sm:$0xff]
  %v4136 = vld [vmem:[%s7 + $0x78] sm:$0xff]
  %v4137 = vld [vmem:[%s8] sm:$0x1]
  %v4139 = vsel %vm137, %v4105, 0
  %v4142 = vsel %vm137, %v4106, 0
  %v4145 = vsel %vm137, %v4107, 0
  %v4148 = vsel %vm137, %v4108, 0
  %v4151 = vsel %vm137, %v4109, 0
  %v4154 = vsel %vm137, %v4110, 0
  %v4157 = vsel %vm137, %v4111, 0
  %v4160 = vsel %vm137, %v4112, 0
  %v4163 = vsel %vm137, %v4113, 0
  %v4166 = vsel %vm137, %v4114, 0
  %v4169 = vsel %vm137, %v4115, 0
  %v4172 = vsel %vm137, %v4116, 0
  %v4175 = vsel %vm137, %v4117, 0
  %v4178 = vsel %vm137, %v4118, 0
  %v4181 = vsel %vm137, %v4119, 0
  %v4184 = vsel %vm137, %v4120, 0
  %4186 = vmatpush.msra.mxu0 0.0
  %4187 = vmatpush.msra.mxu0 0.0
  %4188 = vmatpush.msra.mxu0 0.0
  %4189 = vmatpush.msra.mxu0 0.0
  %4190 = vmatpush.msra.mxu0 0.0
  %4191 = vmatpush.msra.mxu0 0.0
  %4192 = vmatpush.msra.mxu0 0.0
  %4193 = vmatpush.msra.mxu0 0.0
  %4194 = vmatpush.msra.mxu0 %v4135
  %4195 = vmatpush.msra.mxu0 %v4133
  %4196 = vmatpush.msra.mxu0 %v4131
  %4197 = vmatpush.msra.mxu0 %v4129
  %4198 = vmatpush.msra.mxu0 %v4127
  %4199 = vmatpush.msra.mxu0 %v4125
  %4200 = vmatpush.msra.mxu0 %v4123
  %4201 = vmatpush.msra.mxu0 %v4121
  %4202 = vmatmul.f32.gmra.mxu0 %v4139
  %v4203 = vpop.f32.mrf.mxu0
  %v4204 = vadd.f32 0.0, %v4203
  %4205 = vmatmul.f32.gmra.mxu0 %v4142
  %v4206 = vpop.f32.mrf.mxu0
  %v4207 = vadd.f32 0.0, %v4206
  %4208 = vmatmul.f32.gmra.mxu0 %v4145
  %v4209 = vpop.f32.mrf.mxu0
  %v4210 = vadd.f32 0.0, %v4209
  %4211 = vmatmul.f32.gmra.mxu0 %v4148
  %v4212 = vpop.f32.mrf.mxu0
  %v4213 = vadd.f32 0.0, %v4212
  %4214 = vmatmul.f32.gmra.mxu0 %v4151
  %v4215 = vpop.f32.mrf.mxu0
  %v4216 = vadd.f32 0.0, %v4215
  %4217 = vmatmul.f32.gmra.mxu0 %v4154
  %v4218 = vpop.f32.mrf.mxu0
  %v4219 = vadd.f32 0.0, %v4218
  %4220 = vmatmul.f32.gmra.mxu0 %v4157
  %v4221 = vpop.f32.mrf.mxu0
  %v4222 = vadd.f32 0.0, %v4221
  %4223 = vmatmul.f32.gmra.mxu0 %v4160
  %v4224 = vpop.f32.mrf.mxu0
  %v4225 = vadd.f32 0.0, %v4224
  %4226 = vmatmul.f32.gmra.mxu0 %v4163
  %v4227 = vpop.f32.mrf.mxu0
  %v4228 = vadd.f32 0.0, %v4227
  %4229 = vmatmul.f32.gmra.mxu0 %v4166
  %v4230 = vpop.f32.mrf.mxu0
  %v4231 = vadd.f32 0.0, %v4230
  %4232 = vmatmul.f32.gmra.mxu0 %v4169
  %v4233 = vpop.f32.mrf.mxu0
  %v4234 = vadd.f32 0.0, %v4233
  %4235 = vmatmul.f32.gmra.mxu0 %v4172
  %v4236 = vpop.f32.mrf.mxu0
  %v4237 = vadd.f32 0.0, %v4236
  %4238 = vmatmul.f32.gmra.mxu0 %v4175
  %v4239 = vpop.f32.mrf.mxu0
  %v4240 = vadd.f32 0.0, %v4239
  %4241 = vmatmul.f32.gmra.mxu0 %v4178
  %v4242 = vpop.f32.mrf.mxu0
  %v4243 = vadd.f32 0.0, %v4242
  %4244 = vmatmul.f32.gmra.mxu0 %v4181
  %v4245 = vpop.f32.mrf.mxu0
  %v4246 = vadd.f32 0.0, %v4245
  %4247 = vmatmul.f32.gmra.mxu0 %v4184
  %v4248 = vpop.f32.mrf.mxu0
  %v4249 = vadd.f32 0.0, %v4248
  %4250 = vdwg.mxu0
  %4251 = vmatpush.msra.mxu0 0.0
  %4252 = vmatpush.msra.mxu0 0.0
  %4253 = vmatpush.msra.mxu0 0.0
  %4254 = vmatpush.msra.mxu0 0.0
  %4255 = vmatpush.msra.mxu0 0.0
  %4256 = vmatpush.msra.mxu0 0.0
  %4257 = vmatpush.msra.mxu0 0.0
  %4258 = vmatpush.msra.mxu0 0.0
  %4259 = vmatpush.msra.mxu0 %v4136
  %4260 = vmatpush.msra.mxu0 %v4134
  %4261 = vmatpush.msra.mxu0 %v4132
  %4262 = vmatpush.msra.mxu0 %v4130
  %4263 = vmatpush.msra.mxu0 %v4128
  %4264 = vmatpush.msra.mxu0 %v4126
  %4265 = vmatpush.msra.mxu0 %v4124
  %4266 = vmatpush.msra.mxu0 %v4122
  %4267 = vmatmul.f32.gmra.mxu0 %v4139
  %v4268 = vpop.f32.mrf.mxu0
  %v4269 = vadd.f32 0.0, %v4268
  %4270 = vmatmul.f32.gmra.mxu0 %v4142
  %v4271 = vpop.f32.mrf.mxu0
  %v4272 = vadd.f32 0.0, %v4271
  %4273 = vmatmul.f32.gmra.mxu0 %v4145
  %v4274 = vpop.f32.mrf.mxu0
  %v4275 = vadd.f32 0.0, %v4274
  %4276 = vmatmul.f32.gmra.mxu0 %v4148
  %v4277 = vpop.f32.mrf.mxu0
  %v4278 = vadd.f32 0.0, %v4277
  %4279 = vmatmul.f32.gmra.mxu0 %v4151
  %v4280 = vpop.f32.mrf.mxu0
  %v4281 = vadd.f32 0.0, %v4280
  %4282 = vmatmul.f32.gmra.mxu0 %v4154
  %v4283 = vpop.f32.mrf.mxu0
  %v4284 = vadd.f32 0.0, %v4283
  %4285 = vmatmul.f32.gmra.mxu0 %v4157
  %v4286 = vpop.f32.mrf.mxu0
  %v4287 = vadd.f32 0.0, %v4286
  %4288 = vmatmul.f32.gmra.mxu0 %v4160
  %v4289 = vpop.f32.mrf.mxu0
  %v4290 = vadd.f32 0.0, %v4289
  %4291 = vmatmul.f32.gmra.mxu0 %v4163
  %v4292 = vpop.f32.mrf.mxu0
  %v4293 = vadd.f32 0.0, %v4292
  %4294 = vmatmul.f32.gmra.mxu0 %v4166
  %v4295 = vpop.f32.mrf.mxu0
  %v4296 = vadd.f32 0.0, %v4295
  %4297 = vmatmul.f32.gmra.mxu0 %v4169
  %v4298 = vpop.f32.mrf.mxu0
  %v4299 = vadd.f32 0.0, %v4298
  %4300 = vmatmul.f32.gmra.mxu0 %v4172
  %v4301 = vpop.f32.mrf.mxu0
  %v4302 = vadd.f32 0.0, %v4301
  %4303 = vmatmul.f32.gmra.mxu0 %v4175
  %v4304 = vpop.f32.mrf.mxu0
  %v4305 = vadd.f32 0.0, %v4304
  %4306 = vmatmul.f32.gmra.mxu0 %v4178
  %v4307 = vpop.f32.mrf.mxu0
  %v4308 = vadd.f32 0.0, %v4307
  %4309 = vmatmul.f32.gmra.mxu0 %v4181
  %v4310 = vpop.f32.mrf.mxu0
  %v4311 = vadd.f32 0.0, %v4310
  %4312 = vmatmul.f32.gmra.mxu0 %v4184
  %v4313 = vpop.f32.mrf.mxu0
  %v4314 = vadd.f32 0.0, %v4313
  %4315 = vdwg.mxu0
  %v4317 = vsel %vm137, %v4137, 0
  %4319 = vmatpush.xpose.msra.mxu0 %v4184
  %4320 = vmatpush.xpose.msra.mxu0 %v4181
  %4321 = vmatpush.xpose.msra.mxu0 %v4178
  %4322 = vmatpush.xpose.msra.mxu0 %v4175
  %4323 = vmatpush.xpose.msra.mxu0 %v4172
  %4324 = vmatpush.xpose.msra.mxu0 %v4169
  %4325 = vmatpush.xpose.msra.mxu0 %v4166
  %4326 = vmatpush.xpose.msra.mxu0 %v4163
  %4327 = vmatpush.xpose.msra.mxu0 %v4160
  %4328 = vmatpush.xpose.msra.mxu0 %v4157
  %4329 = vmatpush.xpose.msra.mxu0 %v4154
  %4330 = vmatpush.xpose.msra.mxu0 %v4151
  %4331 = vmatpush.xpose.msra.mxu0 %v4148
  %4332 = vmatpush.xpose.msra.mxu0 %v4145
  %4333 = vmatpush.xpose.msra.mxu0 %v4142
  %4334 = vmatpush.xpose.msra.mxu0 %v4139
  %4335 = vmatmul.f32.gmra.mxu0 %v4317
  %v4336 = vpop.f32.mrf.mxu0
  %v4337 = vadd.f32 0.0, %v4336
  %4338 = vdwg.mxu0
  %4340 = vset.pattern.permute.xlu0 0
  %4341 = vperm.xlu0 %4340, %v4269
  %v4342 = vpop.permute.xlu0 %4341
  %4345 = vset.pattern.permute.xlu0 0
  %4346 = vperm.xlu0 %4345, %v4272
  %v4347 = vpop.permute.xlu0 %4346
  %4350 = vset.pattern.permute.xlu0 0
  %4351 = vperm.xlu0 %4350, %v4275
  %v4352 = vpop.permute.xlu0 %4351
  %4355 = vset.pattern.permute.xlu0 0
  %4356 = vperm.xlu0 %4355, %v4278
  %v4357 = vpop.permute.xlu0 %4356
  %4360 = vset.pattern.permute.xlu0 0
  %4361 = vperm.xlu0 %4360, %v4281
  %v4362 = vpop.permute.xlu0 %4361
  %4365 = vset.pattern.permute.xlu0 0
  %4366 = vperm.xlu0 %4365, %v4284
  %v4367 = vpop.permute.xlu0 %4366
  %4370 = vset.pattern.permute.xlu0 0
  %4371 = vperm.xlu0 %4370, %v4287
  %v4372 = vpop.permute.xlu0 %4371
  %4375 = vset.pattern.permute.xlu0 0
  %4376 = vperm.xlu0 %4375, %v4290
  %v4377 = vpop.permute.xlu0 %4376
  %4380 = vset.pattern.permute.xlu0 0
  %4381 = vperm.xlu0 %4380, %v4293
  %v4382 = vpop.permute.xlu0 %4381
  %4385 = vset.pattern.permute.xlu0 0
  %4386 = vperm.xlu0 %4385, %v4296
  %v4387 = vpop.permute.xlu0 %4386
  %4390 = vset.pattern.permute.xlu0 0
  %4391 = vperm.xlu0 %4390, %v4299
  %v4392 = vpop.permute.xlu0 %4391
  %4395 = vset.pattern.permute.xlu0 0
  %4396 = vperm.xlu0 %4395, %v4302
  %v4397 = vpop.permute.xlu0 %4396
  %4400 = vset.pattern.permute.xlu0 0
  %4401 = vperm.xlu0 %4400, %v4305
  %v4402 = vpop.permute.xlu0 %4401
  %4405 = vset.pattern.permute.xlu0 0
  %4406 = vperm.xlu0 %4405, %v4308
  %v4407 = vpop.permute.xlu0 %4406
  %4410 = vset.pattern.permute.xlu0 0
  %4411 = vperm.xlu0 %4410, %v4311
  %v4412 = vpop.permute.xlu0 %4411
  %4415 = vset.pattern.permute.xlu0 0
  %4416 = vperm.xlu0 %4415, %v4314
  %v4417 = vpop.permute.xlu0 %4416
  %v4419 = vperm.slane %v4337, 0
  %v4420 = vadd.f32 %v4342, %v4419
  %v4421 = vadd.f32 %v4347, %v4419
  %v4422 = vadd.f32 %v4352, %v4419
  %v4423 = vadd.f32 %v4357, %v4419
  %v4424 = vadd.f32 %v4362, %v4419
  %v4425 = vadd.f32 %v4367, %v4419
  %v4426 = vadd.f32 %v4372, %v4419
  %v4427 = vadd.f32 %v4377, %v4419
  %v4428 = vadd.f32 %v4382, %v4419
  %v4429 = vadd.f32 %v4387, %v4419
  %v4430 = vadd.f32 %v4392, %v4419
  %v4431 = vadd.f32 %v4397, %v4419
  %v4432 = vadd.f32 %v4402, %v4419
  %v4433 = vadd.f32 %v4407, %v4419
  %v4434 = vadd.f32 %v4412, %v4419
  %v4435 = vadd.f32 %v4417, %v4419
  %vm4436 = vcmp.gt.f32.partialorder %v4420, 0.0
  %vm4437 = vcmp.gt.f32.partialorder %v4421, 0.0
  %vm4438 = vcmp.gt.f32.partialorder %v4422, 0.0
  %vm4439 = vcmp.gt.f32.partialorder %v4423, 0.0
  %vm4440 = vcmp.gt.f32.partialorder %v4424, 0.0
  %vm4441 = vcmp.gt.f32.partialorder %v4425, 0.0
  %vm4442 = vcmp.gt.f32.partialorder %v4426, 0.0
  %vm4443 = vcmp.gt.f32.partialorder %v4427, 0.0
  %vm4444 = vcmp.gt.f32.partialorder %v4428, 0.0
  %vm4445 = vcmp.gt.f32.partialorder %v4429, 0.0
  %vm4446 = vcmp.gt.f32.partialorder %v4430, 0.0
  %vm4447 = vcmp.gt.f32.partialorder %v4431, 0.0
  %vm4448 = vcmp.gt.f32.partialorder %v4432, 0.0
  %vm4449 = vcmp.gt.f32.partialorder %v4433, 0.0
  %vm4450 = vcmp.gt.f32.partialorder %v4434, 0.0
  %vm4451 = vcmp.gt.f32.partialorder %v4435, 0.0
  %v4452 = vmul.f32 %v4420, 0.2
  %v4453 = vmul.f32 %v4421, 0.2
  %v4454 = vmul.f32 %v4422, 0.2
  %v4455 = vmul.f32 %v4423, 0.2
  %v4456 = vmul.f32 %v4424, 0.2
  %v4457 = vmul.f32 %v4425, 0.2
  %v4458 = vmul.f32 %v4426, 0.2
  %v4459 = vmul.f32 %v4427, 0.2
  %v4460 = vmul.f32 %v4428, 0.2
  %v4461 = vmul.f32 %v4429, 0.2
  %v4462 = vmul.f32 %v4430, 0.2
  %v4463 = vmul.f32 %v4431, 0.2
  %v4464 = vmul.f32 %v4432, 0.2
  %v4465 = vmul.f32 %v4433, 0.2
  %v4466 = vmul.f32 %v4434, 0.2
  %v4467 = vmul.f32 %v4435, 0.2
  %v4468 = vsel %vm4436, %v4420, %v4452
  %v4469 = vsel %vm4437, %v4421, %v4453
  %v4470 = vsel %vm4438, %v4422, %v4454
  %v4471 = vsel %vm4439, %v4423, %v4455
  %v4472 = vsel %vm4440, %v4424, %v4456
  %v4473 = vsel %vm4441, %v4425, %v4457
  %v4474 = vsel %vm4442, %v4426, %v4458
  %v4475 = vsel %vm4443, %v4427, %v4459
  %v4476 = vsel %vm4444, %v4428, %v4460
  %v4477 = vsel %vm4445, %v4429, %v4461
  %v4478 = vsel %vm4446, %v4430, %v4462
  %v4479 = vsel %vm4447, %v4431, %v4463
  %v4480 = vsel %vm4448, %v4432, %v4464
  %v4481 = vsel %vm4449, %v4433, %v4465
  %v4482 = vsel %vm4450, %v4434, %v4466
  %v4483 = vsel %vm4451, %v4435, %v4467
  %v4484 = vsel %vm48, %v4468, -1e+30
  %v4485 = vsel %vm49, %v4469, -1e+30
  %v4486 = vsel %vm50, %v4470, -1e+30
  %v4487 = vsel %vm51, %v4471, -1e+30
  %v4488 = vsel %vm52, %v4472, -1e+30
  %v4489 = vsel %vm53, %v4473, -1e+30
  %v4490 = vsel %vm54, %v4474, -1e+30
  %v4491 = vsel %vm55, %v4475, -1e+30
  %v4492 = vsel %vm56, %v4476, -1e+30
  %v4493 = vsel %vm57, %v4477, -1e+30
  %v4494 = vsel %vm58, %v4478, -1e+30
  %v4495 = vsel %vm59, %v4479, -1e+30
  %v4496 = vsel %vm60, %v4480, -1e+30
  %v4497 = vsel %vm61, %v4481, -1e+30
  %v4498 = vsel %vm62, %v4482, -1e+30
  %v4499 = vsel %vm63, %v4483, -1e+30
  %4500 = vmax.xlane.f32.xlu0 %v4484
  %v4501 = vpop.xlane.xlu0 %4500
  %4502 = vmax.xlane.f32.xlu0 %v4485
  %v4503 = vpop.xlane.xlu0 %4502
  %4504 = vmax.xlane.f32.xlu0 %v4486
  %v4505 = vpop.xlane.xlu0 %4504
  %4506 = vmax.xlane.f32.xlu0 %v4487
  %v4507 = vpop.xlane.xlu0 %4506
  %4508 = vmax.xlane.f32.xlu0 %v4488
  %v4509 = vpop.xlane.xlu0 %4508
  %4510 = vmax.xlane.f32.xlu0 %v4489
  %v4511 = vpop.xlane.xlu0 %4510
  %4512 = vmax.xlane.f32.xlu0 %v4490
  %v4513 = vpop.xlane.xlu0 %4512
  %4514 = vmax.xlane.f32.xlu0 %v4491
  %v4515 = vpop.xlane.xlu0 %4514
  %4516 = vmax.xlane.f32.xlu0 %v4492
  %v4517 = vpop.xlane.xlu0 %4516
  %4518 = vmax.xlane.f32.xlu0 %v4493
  %v4519 = vpop.xlane.xlu0 %4518
  %4520 = vmax.xlane.f32.xlu0 %v4494
  %v4521 = vpop.xlane.xlu0 %4520
  %4522 = vmax.xlane.f32.xlu0 %v4495
  %v4523 = vpop.xlane.xlu0 %4522
  %4524 = vmax.xlane.f32.xlu0 %v4496
  %v4525 = vpop.xlane.xlu0 %4524
  %4526 = vmax.xlane.f32.xlu0 %v4497
  %v4527 = vpop.xlane.xlu0 %4526
  %4528 = vmax.xlane.f32.xlu0 %v4498
  %v4529 = vpop.xlane.xlu0 %4528
  %4530 = vmax.xlane.f32.xlu0 %v4499
  %v4531 = vpop.xlane.xlu0 %4530
  %v4532 = vsub.f32 %v4484, %v4501
  %v4533 = vsub.f32 %v4485, %v4503
  %v4534 = vsub.f32 %v4486, %v4505
  %v4535 = vsub.f32 %v4487, %v4507
  %v4536 = vsub.f32 %v4488, %v4509
  %v4537 = vsub.f32 %v4489, %v4511
  %v4538 = vsub.f32 %v4490, %v4513
  %v4539 = vsub.f32 %v4491, %v4515
  %v4540 = vsub.f32 %v4492, %v4517
  %v4541 = vsub.f32 %v4493, %v4519
  %v4542 = vsub.f32 %v4494, %v4521
  %v4543 = vsub.f32 %v4495, %v4523
  %v4544 = vsub.f32 %v4496, %v4525
  %v4545 = vsub.f32 %v4497, %v4527
  %v4546 = vsub.f32 %v4498, %v4529
  %v4547 = vsub.f32 %v4499, %v4531
  %v4548 = vmul.f32 %v4532, 1.442695
  %v4549 = vpow.pop %v4548
  %v4550 = vmul.f32 %v4533, 1.442695
  %v4551 = vpow.pop %v4550
  %v4552 = vmul.f32 %v4534, 1.442695
  %v4553 = vpow.pop %v4552
  %v4554 = vmul.f32 %v4535, 1.442695
  %v4555 = vpow.pop %v4554
  %v4556 = vmul.f32 %v4536, 1.442695
  %v4557 = vpow.pop %v4556
  %v4558 = vmul.f32 %v4537, 1.442695
  %v4559 = vpow.pop %v4558
  %v4560 = vmul.f32 %v4538, 1.442695
  %v4561 = vpow.pop %v4560
  %v4562 = vmul.f32 %v4539, 1.442695
  %v4563 = vpow.pop %v4562
  %v4564 = vmul.f32 %v4540, 1.442695
  %v4565 = vpow.pop %v4564
  %v4566 = vmul.f32 %v4541, 1.442695
  %v4567 = vpow.pop %v4566
  %v4568 = vmul.f32 %v4542, 1.442695
  %v4569 = vpow.pop %v4568
  %v4570 = vmul.f32 %v4543, 1.442695
  %v4571 = vpow.pop %v4570
  %v4572 = vmul.f32 %v4544, 1.442695
  %v4573 = vpow.pop %v4572
  %v4574 = vmul.f32 %v4545, 1.442695
  %v4575 = vpow.pop %v4574
  %v4576 = vmul.f32 %v4546, 1.442695
  %v4577 = vpow.pop %v4576
  %v4578 = vmul.f32 %v4547, 1.442695
  %v4579 = vpow.pop %v4578
  %v4580 = vmul.f32 %v4549, %v80
  %v4581 = vmul.f32 %v4551, %v81
  %v4582 = vmul.f32 %v4553, %v82
  %v4583 = vmul.f32 %v4555, %v83
  %v4584 = vmul.f32 %v4557, %v84
  %v4585 = vmul.f32 %v4559, %v85
  %v4586 = vmul.f32 %v4561, %v86
  %v4587 = vmul.f32 %v4563, %v87
  %v4588 = vmul.f32 %v4565, %v88
  %v4589 = vmul.f32 %v4567, %v89
  %v4590 = vmul.f32 %v4569, %v90
  %v4591 = vmul.f32 %v4571, %v91
  %v4592 = vmul.f32 %v4573, %v92
  %v4593 = vmul.f32 %v4575, %v93
  %v4594 = vmul.f32 %v4577, %v94
  %v4595 = vmul.f32 %v4579, %v95
  %4596 = vadd.xlane.f32.xlu0 %v4580
  %v4597 = vpop.xlane.xlu0 %4596
  %4598 = vadd.xlane.f32.xlu0 %v4581
  %v4599 = vpop.xlane.xlu0 %4598
  %4600 = vadd.xlane.f32.xlu0 %v4582
  %v4601 = vpop.xlane.xlu0 %4600
  %4602 = vadd.xlane.f32.xlu0 %v4583
  %v4603 = vpop.xlane.xlu0 %4602
  %4604 = vadd.xlane.f32.xlu0 %v4584
  %v4605 = vpop.xlane.xlu0 %4604
  %4606 = vadd.xlane.f32.xlu0 %v4585
  %v4607 = vpop.xlane.xlu0 %4606
  %4608 = vadd.xlane.f32.xlu0 %v4586
  %v4609 = vpop.xlane.xlu0 %4608
  %4610 = vadd.xlane.f32.xlu0 %v4587
  %v4611 = vpop.xlane.xlu0 %4610
  %4612 = vadd.xlane.f32.xlu0 %v4588
  %v4613 = vpop.xlane.xlu0 %4612
  %4614 = vadd.xlane.f32.xlu0 %v4589
  %v4615 = vpop.xlane.xlu0 %4614
  %4616 = vadd.xlane.f32.xlu0 %v4590
  %v4617 = vpop.xlane.xlu0 %4616
  %4618 = vadd.xlane.f32.xlu0 %v4591
  %v4619 = vpop.xlane.xlu0 %4618
  %4620 = vadd.xlane.f32.xlu0 %v4592
  %v4621 = vpop.xlane.xlu0 %4620
  %4622 = vadd.xlane.f32.xlu0 %v4593
  %v4623 = vpop.xlane.xlu0 %4622
  %4624 = vadd.xlane.f32.xlu0 %v4594
  %v4625 = vpop.xlane.xlu0 %4624
  %4626 = vadd.xlane.f32.xlu0 %v4595
  %v4627 = vpop.xlane.xlu0 %4626
  %v4628 = vmax.f32 %v4597, 1e-30
  %v4629 = vmax.f32 %v4599, 1e-30
  %v4630 = vmax.f32 %v4601, 1e-30
  %v4631 = vmax.f32 %v4603, 1e-30
  %v4632 = vmax.f32 %v4605, 1e-30
  %v4633 = vmax.f32 %v4607, 1e-30
  %v4634 = vmax.f32 %v4609, 1e-30
  %v4635 = vmax.f32 %v4611, 1e-30
  %v4636 = vmax.f32 %v4613, 1e-30
  %v4637 = vmax.f32 %v4615, 1e-30
  %v4638 = vmax.f32 %v4617, 1e-30
  %v4639 = vmax.f32 %v4619, 1e-30
  %v4640 = vmax.f32 %v4621, 1e-30
  %v4641 = vmax.f32 %v4623, 1e-30
  %v4642 = vmax.f32 %v4625, 1e-30
  %v4643 = vmax.f32 %v4627, 1e-30
  %v4644 = vrcp.pop %v4628
  %v4645 = vrcp.pop %v4629
  %v4646 = vrcp.pop %v4630
  %v4647 = vrcp.pop %v4631
  %v4648 = vrcp.pop %v4632
  %v4649 = vrcp.pop %v4633
  %v4650 = vrcp.pop %v4634
  %v4651 = vrcp.pop %v4635
  %v4652 = vrcp.pop %v4636
  %v4653 = vrcp.pop %v4637
  %v4654 = vrcp.pop %v4638
  %v4655 = vrcp.pop %v4639
  %v4656 = vrcp.pop %v4640
  %v4657 = vrcp.pop %v4641
  %v4658 = vrcp.pop %v4642
  %v4659 = vrcp.pop %v4643
  %v4660 = vmul.f32 %v4580, %v4644
  %v4661 = vmul.f32 %v4581, %v4645
  %v4662 = vmul.f32 %v4582, %v4646
  %v4663 = vmul.f32 %v4583, %v4647
  %v4664 = vmul.f32 %v4584, %v4648
  %v4665 = vmul.f32 %v4585, %v4649
  %v4666 = vmul.f32 %v4586, %v4650
  %v4667 = vmul.f32 %v4587, %v4651
  %v4668 = vmul.f32 %v4588, %v4652
  %v4669 = vmul.f32 %v4589, %v4653
  %v4670 = vmul.f32 %v4590, %v4654
  %v4671 = vmul.f32 %v4591, %v4655
  %v4672 = vmul.f32 %v4592, %v4656
  %v4673 = vmul.f32 %v4593, %v4657
  %v4674 = vmul.f32 %v4594, %v4658
  %v4675 = vmul.f32 %v4595, %v4659
  %4676 = vmatpush.msra.mxu0 %v4249
  %4677 = vmatpush.msra.mxu0 %v4246
  %4678 = vmatpush.msra.mxu0 %v4243
  %4679 = vmatpush.msra.mxu0 %v4240
  %4680 = vmatpush.msra.mxu0 %v4237
  %4681 = vmatpush.msra.mxu0 %v4234
  %4682 = vmatpush.msra.mxu0 %v4231
  %4683 = vmatpush.msra.mxu0 %v4228
  %4684 = vmatpush.msra.mxu0 %v4225
  %4685 = vmatpush.msra.mxu0 %v4222
  %4686 = vmatpush.msra.mxu0 %v4219
  %4687 = vmatpush.msra.mxu0 %v4216
  %4688 = vmatpush.msra.mxu0 %v4213
  %4689 = vmatpush.msra.mxu0 %v4210
  %4690 = vmatpush.msra.mxu0 %v4207
  %4691 = vmatpush.msra.mxu0 %v4204
  %4692 = vmatmul.f32.gmra.mxu0 %v4660
  %v4693 = vpop.f32.mrf.mxu0
  %v4694 = vadd.f32 0.0, %v4693
  %4695 = vmatmul.f32.gmra.mxu0 %v4661
  %v4696 = vpop.f32.mrf.mxu0
  %v4697 = vadd.f32 0.0, %v4696
  %4698 = vmatmul.f32.gmra.mxu0 %v4662
  %v4699 = vpop.f32.mrf.mxu0
  %v4700 = vadd.f32 0.0, %v4699
  %4701 = vmatmul.f32.gmra.mxu0 %v4663
  %v4702 = vpop.f32.mrf.mxu0
  %v4703 = vadd.f32 0.0, %v4702
  %4704 = vmatmul.f32.gmra.mxu0 %v4664
  %v4705 = vpop.f32.mrf.mxu0
  %v4706 = vadd.f32 0.0, %v4705
  %4707 = vmatmul.f32.gmra.mxu0 %v4665
  %v4708 = vpop.f32.mrf.mxu0
  %v4709 = vadd.f32 0.0, %v4708
  %4710 = vmatmul.f32.gmra.mxu0 %v4666
  %v4711 = vpop.f32.mrf.mxu0
  %v4712 = vadd.f32 0.0, %v4711
  %4713 = vmatmul.f32.gmra.mxu0 %v4667
  %v4714 = vpop.f32.mrf.mxu0
  %v4715 = vadd.f32 0.0, %v4714
  %4716 = vmatmul.f32.gmra.mxu0 %v4668
  %v4717 = vpop.f32.mrf.mxu0
  %v4718 = vadd.f32 0.0, %v4717
  %4719 = vmatmul.f32.gmra.mxu0 %v4669
  %v4720 = vpop.f32.mrf.mxu0
  %v4721 = vadd.f32 0.0, %v4720
  %4722 = vmatmul.f32.gmra.mxu0 %v4670
  %v4723 = vpop.f32.mrf.mxu0
  %v4724 = vadd.f32 0.0, %v4723
  %4725 = vmatmul.f32.gmra.mxu0 %v4671
  %v4726 = vpop.f32.mrf.mxu0
  %v4727 = vadd.f32 0.0, %v4726
  %4728 = vmatmul.f32.gmra.mxu0 %v4672
  %v4729 = vpop.f32.mrf.mxu0
  %v4730 = vadd.f32 0.0, %v4729
  %4731 = vmatmul.f32.gmra.mxu0 %v4673
  %v4732 = vpop.f32.mrf.mxu0
  %v4733 = vadd.f32 0.0, %v4732
  %4734 = vmatmul.f32.gmra.mxu0 %v4674
  %v4735 = vpop.f32.mrf.mxu0
  %v4736 = vadd.f32 0.0, %v4735
  %4737 = vmatmul.f32.gmra.mxu0 %v4675
  %v4738 = vpop.f32.mrf.mxu0
  %v4739 = vadd.f32 0.0, %v4738
  %4740 = vdwg.mxu0
  %v4741 = vmul.f32 %v4694, %v1987
  %v4742 = vmul.f32 %v4697, %v1992
  %v4743 = vmul.f32 %v4700, %v1997
  %v4744 = vmul.f32 %v4703, %v2002
  %v4745 = vmul.f32 %v4706, %v2007
  %v4746 = vmul.f32 %v4709, %v2012
  %v4747 = vmul.f32 %v4712, %v2017
  %v4748 = vmul.f32 %v4715, %v2022
  %v4749 = vmul.f32 %v4718, %v2027
  %v4750 = vmul.f32 %v4721, %v2032
  %v4751 = vmul.f32 %v4724, %v2037
  %v4752 = vmul.f32 %v4727, %v2042
  %v4753 = vmul.f32 %v4730, %v2047
  %v4754 = vmul.f32 %v4733, %v2052
  %v4755 = vmul.f32 %v4736, %v2057
  %v4756 = vmul.f32 %v4739, %v2062
  %4757 = vst [vmem:[%s9] sm:$0xff] %v4741
  %4758 = vst [vmem:[%s9 + $0x8] sm:$0xff] %v4742
  %4759 = vst [vmem:[%s9 + $0x10] sm:$0xff] %v4743
  %4760 = vst [vmem:[%s9 + $0x18] sm:$0xff] %v4744
  %4761 = vst [vmem:[%s9 + $0x20] sm:$0xff] %v4745
  %4762 = vst [vmem:[%s9 + $0x28] sm:$0xff] %v4746
  %4763 = vst [vmem:[%s9 + $0x30] sm:$0xff] %v4747
  %4764 = vst [vmem:[%s9 + $0x38] sm:$0xff] %v4748
  %4765 = vst [vmem:[%s9 + $0x40] sm:$0xff] %v4749
  %4766 = vst [vmem:[%s9 + $0x48] sm:$0xff] %v4750
  %4767 = vst [vmem:[%s9 + $0x50] sm:$0xff] %v4751
  %4768 = vst [vmem:[%s9 + $0x58] sm:$0xff] %v4752
  %4769 = vst [vmem:[%s9 + $0x60] sm:$0xff] %v4753
  %4770 = vst [vmem:[%s9 + $0x68] sm:$0xff] %v4754
  %4771 = vst [vmem:[%s9 + $0x70] sm:$0xff] %v4755
  %4772 = vst [vmem:[%s9 + $0x78] sm:$0xff] %v4756
  // Predicated region
  $region38: #{gatnet_forward.1} parent=0 // pred_check
    _
  $region39: #{gatnet_forward.1} parent=0 // pred_check_branch
    %4774 = sbr.rel (0) target = $region41
  $region40: #{gatnet_forward.1} parent=0 // pred_region
    _
  $region41: #{gatnet_forward.1} parent=0 // pred_fallthru
    _
  // Predicated region
  $region42: #{gatnet_forward.1} parent=0 // pred_check
    _
  $region43: #{gatnet_forward.1} parent=0 // pred_check_branch
    %4776 = sbr.rel (0) target = $region45
  $region44: #{gatnet_forward.1} parent=0 // pred_region
    _
  $region45: #{gatnet_forward.1} parent=0 // pred_fallthru
    _

</llo_original>
